<compile_context>
chip_gen: v7x
topology: tpu7x:2x2x1
jax: 0.10.0
libtpu: 0.0.40
codegen_flags: <defaults>
</compile_context>

<pallas_src>
import jax
import jax.numpy as jnp
from jax.experimental import pallas as pl
from jax.experimental.pallas import tpu as pltpu

# ---- module hyper-parameters (PCN(emb_dims=128, num_coarse=64, grid_size=4)) ----
# Encoder hidden widths (128/256/512) and decoder hidden width (1024) are hard-coded
# in the PyTorch module; emb_dims / num_coarse are kept small for the demo.
EMB_DIMS = 128
NUM_COARSE = 64
GRID_SIZE = 4                                        # unused without detailed_output
H1, H2, H3 = 128, 256, 512
DEC_H = 1024
OUT_PAD = ((NUM_COARSE * 3 + 127) // 128) * 128      # lane-dense padded final width (=256)


# --------------------------- shared encoder head -----------------------------
def _h1_h2(x_ref, w1, b1, w2, b2):
    """encoder_layers1: Conv1d(3,128,1) -> ReLU -> Conv1d(128,256,1)."""
    f32, bf16 = jnp.float32, jnp.bfloat16
    x = x_ref[0].astype(f32)                           # (pts, 3)
    w1f = w1[...].astype(f32)                          # (3, H1)
    # K=3 matmul as a VPU broadcast-FMA (overlaps with MXU work instead of
    # serializing behind an almost-empty MXU push/drain).
    h1 = (x[:, 0:1] * w1f[0:1, :] + x[:, 1:2] * w1f[1:2, :]
          + x[:, 2:3] * w1f[2:3, :] + b1[...])
    h1 = jnp.maximum(h1, 0.0).astype(bf16)             # (pts, H1)
    return jnp.dot(h1, w2[...], preferred_element_type=f32) + b2[...]   # (pts, H2) f32


# ---------------------- encoder, single-pass (N fits VMEM) --------------------
def _pcn_encoder_fused_kernel(x_ref, w1, b1, w2, b2, w3a, w3b, b3, w4, b4, gv_ref):
    """grid = (B,): whole point cloud of one batch element in a single grid step.

    x_ref : (1, N, 3) bf16;  gv_ref : (1, 1, EMB) f32 (global_feature_v).
    """
    f32, bf16 = jnp.float32, jnp.bfloat16
    h2 = _h1_h2(x_ref, w1, b1, w2, b2)                                      # (N, H2)
    g = jnp.max(h2, axis=0, keepdims=True).astype(bf16)                     # (1, H2)
    # concat([point_feats, global_g]) @ W3  ==  h2 @ W3[:H2] + g @ W3[H2:]
    gproj = jnp.dot(g, w3b[...], preferred_element_type=f32) + b3[...]      # (1, H3)
    h3 = jnp.maximum(
        jnp.dot(h2.astype(bf16), w3a[...], preferred_element_type=f32) + gproj, 0.0
    ).astype(bf16)                                                          # (N, H3)
    h4 = jnp.dot(h3, w4[...], preferred_element_type=f32) + b4[...]         # (N, EMB)
    gv_ref[0] = jnp.max(h4, axis=0, keepdims=True)


# ---------------------- encoder, two-pass tiled (large N) ---------------------
def _pcn_encoder_tiled_kernel(x_ref, w1, b1, w2, b2, w3a, w3b, b3, w4, b4,
                              gv_ref, g_sc, gproj_sc):
    """grid = (B, 2, N // n_tile):
      pass 0: running-max pool h2 -> g;  pass 1: h3/h4, running-max pool -> gv.

    g_sc : (1, H2) f32 running max;  gproj_sc : (1, H3) f32 hoisted g @ W3b + b3.
    gv_ref is used directly as the running-max accumulator (initialized on the
    first grid step of every batch element, so it is never left uninitialized).
    """
    p = pl.program_id(1)
    nt = pl.program_id(2)
    f32, bf16 = jnp.float32, jnp.bfloat16

    @pl.when((p == 0) & (nt == 0))
    def _init():
        g_sc[...] = jnp.full(g_sc.shape, -jnp.inf, f32)
        gv_ref[...] = jnp.full(gv_ref.shape, -jnp.inf, f32)

    # h1/h2 recomputed in both passes (K=3 FMA + K=128 matmul, ~9% of MXU FLOPs).
    # TODO(synk): cache h2 tiles (bf16) in a VMEM scratch for mid-size N to skip this.
    h2 = _h1_h2(x_ref, w1, b1, w2, b2)                                      # (n_tile, H2)

    @pl.when(p == 0)
    def _pool_g():
        g_sc[...] = jnp.maximum(g_sc[...], jnp.max(h2, axis=0, keepdims=True))

    @pl.when(p == 1)
    def _features():
        @pl.when(nt == 0)
        def _hoist():   # tile-invariant global projection: once per batch element
            gproj_sc[...] = (jnp.dot(g_sc[...].astype(bf16), w3b[...],
                                     preferred_element_type=f32) + b3[...])
        h3 = jnp.maximum(
            jnp.dot(h2.astype(bf16), w3a[...], preferred_element_type=f32)
            + gproj_sc[...], 0.0
        ).astype(bf16)                                                      # (n_tile, H3)
        h4 = jnp.dot(h3, w4[...], preferred_element_type=f32) + b4[...]     # (n_tile, EMB)
        gv_ref[0] = jnp.maximum(gv_ref[0], jnp.max(h4, axis=0, keepdims=True))


# ------------------------------ coarse decoder --------------------------------
def _pcn_decoder_kernel(gv_ref, w5, b5, w6, b6, w7, b7, out_ref):
    """Batched coarse decoder MLP: three M=B matmuls in one un-gridded invocation."""
    f32, bf16 = jnp.float32, jnp.bfloat16
    gv = gv_ref[...].astype(bf16)                                           # (B, EMB)
    d1 = jnp.maximum(
        jnp.dot(gv, w5[...], preferred_element_type=f32) + b5[...], 0.0).astype(bf16)
    d2 = jnp.maximum(
        jnp.dot(d1, w6[...], preferred_element_type=f32) + b6[...], 0.0).astype(bf16)
    out_ref[...] = jnp.dot(d2, w7[...], preferred_element_type=f32) + b7[...]


# ------------------------------ wrapper --------------------------------------
def pcn_forward(x, params, *, n_tile=1024, single_pass_max_n=8192):
    """x: [B, N, 3] float32 point cloud (channels-last)."""
    B, N, C = x.shape
    if C != 3:
        raise RuntimeError("shape of x must be [Batch x NumInPoints x 3]")

    enc_w = params["enc"]
    dec_w = params["dec"]
    x_bf = x.astype(jnp.bfloat16)
    wbytes = sum(int(w.size) * w.dtype.itemsize for w in enc_w)

    # activation footprint per point per grid step (h1/h2/h3/h4 + temps, ~3.3 KiB) + margin
    act_per_pt = 4096
    flops_head = 2 * (3 * H1 + H1 * H2)               # h1 + h2 per point
    flops_tail = 2 * (H2 * H3 + H3 * EMB_DIMS)        # h3 + h4 per point

    def vmem_limit(points_per_step):
        est = 2 * wbytes + points_per_step * act_per_pt + (6 << 20)
        return int(max(20 << 20, min(56 << 20, est)))

    if N <= single_pass_max_n:
        # one grid step per batch element: no recompute, no second x DMA
        in_specs = [pl.BlockSpec((1, N, 3), lambda b: (b, 0, 0))]
        in_specs += [pl.BlockSpec(w.shape, lambda b: (0, 0)) for w in enc_w]
        gv = pl.pallas_call(
            _pcn_encoder_fused_kernel,
            out_shape=jax.ShapeDtypeStruct((B, 1, EMB_DIMS), jnp.float32),
            grid_spec=pltpu.PrefetchScalarGridSpec(
                num_scalar_prefetch=0, grid=(B,),
                in_specs=in_specs,
                out_specs=pl.BlockSpec((1, 1, EMB_DIMS), lambda b: (b, 0, 0))),
            compiler_params=pltpu.CompilerParams(
                dimension_semantics=("parallel",),
                vmem_limit_bytes=vmem_limit(N)),
            cost_estimate=pl.CostEstimate(
                flops=B * N * (flops_head + flops_tail) + 2 * B * H2 * H3,
                transcendentals=0,
                bytes_accessed=int(x_bf.size) * 2 + wbytes + B * EMB_DIMS * 4),
        )(x_bf, *enc_w)
    else:
        # large-N fallback: two-pass running-max with big point tiles
        n_tile = min(n_tile, N)
        if N % n_tile != 0:
            raise ValueError(f"N={N} must be divisible by n_tile={n_tile}")
        in_specs = [pl.BlockSpec((1, n_tile, 3), lambda b, s, t: (b, t, 0))]
        in_specs += [pl.BlockSpec(w.shape, lambda b, s, t: (0, 0)) for w in enc_w]
        gv = pl.pallas_call(
            _pcn_encoder_tiled_kernel,
            out_shape=jax.ShapeDtypeStruct((B, 1, EMB_DIMS), jnp.float32),
            grid_spec=pltpu.PrefetchScalarGridSpec(
                num_scalar_prefetch=0, grid=(B, 2, N // n_tile),
                in_specs=in_specs,
                out_specs=pl.BlockSpec((1, 1, EMB_DIMS), lambda b, s, t: (b, 0, 0)),
                scratch_shapes=[pltpu.VMEM((1, H2), jnp.float32),
                                pltpu.VMEM((1, H3), jnp.float32)]),
            compiler_params=pltpu.CompilerParams(
                dimension_semantics=("parallel", "arbitrary", "arbitrary"),
                vmem_limit_bytes=vmem_limit(n_tile)),
            cost_estimate=pl.CostEstimate(
                flops=B * N * (2 * flops_head + flops_tail) + 2 * B * H2 * H3,
                transcendentals=0,
                bytes_accessed=int(x_bf.size) * 2 * 2 + wbytes + B * EMB_DIMS * 4),
        )(x_bf, *enc_w)

    # batched coarse decoder: M=B matmuls, lane-dense padded output
    out_pad = pl.pallas_call(
        _pcn_decoder_kernel,
        out_shape=jax.ShapeDtypeStruct((B, OUT_PAD), jnp.float32),
    )(gv.reshape(B, EMB_DIMS), *dec_w)

    coarse_output = out_pad[:, : NUM_COARSE * 3].reshape(B, NUM_COARSE, 3)
    return {"coarse_output": coarse_output}


# -------------------- deterministic parameter construction -------------------
def init_params(key):
    def dense(key, fan_in, fan_out):
        kw, kb = jax.random.split(key)
        bound = 1.0 / jnp.sqrt(fan_in)
        w = jax.random.uniform(kw, (fan_in, fan_out), jnp.float32, -bound, bound)
        b = jax.random.uniform(kb, (1, fan_out), jnp.float32, -bound, bound)
        return w, b

    keys = jax.random.split(key, 7)
    w1, b1 = dense(keys[0], 3, H1)                    # Conv1d(3,128,1)
    w2, b2 = dense(keys[1], H1, H2)                   # Conv1d(128,256,1)
    w3, b3 = dense(keys[2], 2 * H2, H3)               # Conv1d(512,512,1)
    w3a, w3b = w3[:H2], w3[H2:]                       # split: [point_feats | global] concat order
    w4, b4 = dense(keys[3], H3, EMB_DIMS)             # Conv1d(512,emb,1)
    w5, b5 = dense(keys[4], EMB_DIMS, DEC_H)          # Linear(emb,1024)
    w6, b6 = dense(keys[5], DEC_H, DEC_H)             # Linear(1024,1024)
    w7, b7 = dense(keys[6], DEC_H, NUM_COARSE * 3)    # Linear(1024, num_coarse*3)
    # pad final layer to a lane-dense width (dense vst instead of masked stores)
    w7 = jnp.pad(w7, ((0, 0), (0, OUT_PAD - NUM_COARSE * 3)))
    b7 = jnp.pad(b7, ((0, 0), (0, OUT_PAD - NUM_COARSE * 3)))

    bf = lambda a: a.astype(jnp.bfloat16)             # weights bf16 (MXU), biases f32
    return {
        "enc": (bf(w1), b1, bf(w2), b2, bf(w3a), bf(w3b), b3, bf(w4), b4),
        "dec": (bf(w5), b5, bf(w6), b6, bf(w7), b7),
    }


# -------------------------- pure-JAX reference --------------------------------
def pcn_reference(x, params):
    f32, bf16 = jnp.float32, jnp.bfloat16
    mm = lambda a, w: jnp.dot(a, w, preferred_element_type=f32)
    w1, b1, w2, b2, w3a, w3b, b3, w4, b4 = params["enc"]
    w5, b5, w6, b6, w7, b7 = params["dec"]

    xb = x.astype(bf16).astype(f32)                   # same bf16 input rounding as kernel
    w1f = w1.astype(f32)
    h1 = (xb[..., 0:1] * w1f[0:1] + xb[..., 1:2] * w1f[1:2]
          + xb[..., 2:3] * w1f[2:3] + b1)             # matches kernel's FMA ordering
    h1 = jnp.maximum(h1, 0.0).astype(bf16)
    h2 = mm(h1, w2) + b2                              # [B, N, 256] f32
    g = jnp.max(h2, axis=1, keepdims=True)            # [B, 1, 256]
    h3 = jnp.maximum(mm(h2.astype(bf16), w3a) + mm(g.astype(bf16), w3b) + b3,
                     0.0).astype(bf16)
    h4 = mm(h3, w4) + b4                              # [B, N, EMB]
    gv = jnp.max(h4, axis=1).astype(bf16)             # [B, EMB]
    d1 = jnp.maximum(mm(gv, w5) + b5, 0.0).astype(bf16)
    d2 = jnp.maximum(mm(d1, w6) + b6, 0.0).astype(bf16)
    out = mm(d2, w7) + b7                             # [B, OUT_PAD]
    return out[:, : NUM_COARSE * 3].reshape(x.shape[0], NUM_COARSE, 3)


if __name__ == "__main__":
    key = jax.random.PRNGKey(0)
    k_param, k_x = jax.random.split(key)
    B, N = 4, 512
    x = jax.random.normal(k_x, (B, N, 3), jnp.float32)
    params = init_params(k_param)

    ref = jax.block_until_ready(pcn_reference(x, params))

    # main path: single-pass encoder (N fits the activation budget)
    out1 = jax.block_until_ready(pcn_forward(x, params)["coarse_output"])
    assert out1.shape == (B, NUM_COARSE, 3)
    err1 = float(jnp.max(jnp.abs(out1 - ref)))
    assert jnp.allclose(out1, ref, rtol=1e-2, atol=1e-2), f"single-pass mismatch (max abs err {err1})"

    # large-N fallback path, forced at small shapes to exercise the tiled two-pass kernel
    out2 = jax.block_until_ready(
        pcn_forward(x, params, n_tile=256, single_pass_max_n=0)["coarse_output"])
    err2 = float(jnp.max(jnp.abs(out2 - ref)))
    assert jnp.allclose(out2, ref, rtol=1e-2, atol=1e-2), f"tiled-path mismatch (max abs err {err2})"

    print("KERNEL_OK")
</pallas_src>

<mosaic_0001>
module attributes {stable_mosaic.version = 11 : i64} {
  func.func @_pcn_encoder_fused_kernel(%arg0: i32, %arg1: memref<1x512x3xbf16, #tpu.memory_space<vmem>>, %arg2: memref<3x128xbf16, #tpu.memory_space<vmem>>, %arg3: memref<1x128xf32, #tpu.memory_space<vmem>>, %arg4: memref<128x256xbf16, #tpu.memory_space<vmem>>, %arg5: memref<1x256xf32, #tpu.memory_space<vmem>>, %arg6: memref<256x512xbf16, #tpu.memory_space<vmem>>, %arg7: memref<256x512xbf16, #tpu.memory_space<vmem>>, %arg8: memref<1x512xf32, #tpu.memory_space<vmem>>, %arg9: memref<512x128xbf16, #tpu.memory_space<vmem>>, %arg10: memref<1x128xf32, #tpu.memory_space<vmem>>, %arg11: memref<1x1x128xf32, #tpu.memory_space<vmem>>) attributes {dimension_semantics = [#tpu.dimension_semantics<parallel>], iteration_bounds = array<i64: 4>, scalar_prefetch = 0 : i64, scratch_operands = 0 : i64, tpu.core_type = #tpu.core_type<tc>, window_params = [{transform_indices = @transform_0, window_bounds = array<i64: 1, 512, 3>}, {pipeline_mode = #tpu.pipeline_mode<synchronous>, transform_indices = @transform_1, window_bounds = array<i64: 3, 128>}, {pipeline_mode = #tpu.pipeline_mode<synchronous>, transform_indices = @transform_2, window_bounds = array<i64: 1, 128>}, {pipeline_mode = #tpu.pipeline_mode<synchronous>, transform_indices = @transform_3, window_bounds = array<i64: 128, 256>}, {pipeline_mode = #tpu.pipeline_mode<synchronous>, transform_indices = @transform_4, window_bounds = array<i64: 1, 256>}, {pipeline_mode = #tpu.pipeline_mode<synchronous>, transform_indices = @transform_5, window_bounds = array<i64: 256, 512>}, {pipeline_mode = #tpu.pipeline_mode<synchronous>, transform_indices = @transform_6, window_bounds = array<i64: 256, 512>}, {pipeline_mode = #tpu.pipeline_mode<synchronous>, transform_indices = @transform_7, window_bounds = array<i64: 1, 512>}, {pipeline_mode = #tpu.pipeline_mode<synchronous>, transform_indices = @transform_8, window_bounds = array<i64: 512, 128>}, {pipeline_mode = #tpu.pipeline_mode<synchronous>, transform_indices = @transform_9, window_bounds = array<i64: 1, 128>}, {transform_indices = @transform_10, window_bounds = array<i64: 1, 1, 128>}]} {
    %c0 = arith.constant 0 : index
    %c0_0 = arith.constant 0 : index
    %c0_1 = arith.constant 0 : index
    %0 = vector.load %arg1[%c0, %c0_0, %c0_1] : memref<1x512x3xbf16, #tpu.memory_space<vmem>>, vector<1x512x3xbf16>
    %1 = vector.shape_cast %0 : vector<1x512x3xbf16> to vector<512x3xbf16>
    %2 = arith.extf %1 : vector<512x3xbf16> to vector<512x3xf32>
    %c0_2 = arith.constant 0 : index
    %c0_3 = arith.constant 0 : index
    %3 = vector.load %arg2[%c0_2, %c0_3] : memref<3x128xbf16, #tpu.memory_space<vmem>>, vector<3x128xbf16>
    %4 = arith.extf %3 : vector<3x128xbf16> to vector<3x128xf32>
    %5 = vector.extract_strided_slice %2 {offsets = [0, 0], sizes = [512, 1], strides = [1, 1]} : vector<512x3xf32> to vector<512x1xf32>
    %6 = vector.extract_strided_slice %4 {offsets = [0, 0], sizes = [1, 128], strides = [1, 1]} : vector<3x128xf32> to vector<1x128xf32>
    %7 = vector.broadcast %5 : vector<512x1xf32> to vector<512x128xf32>
    %8 = vector.broadcast %6 : vector<1x128xf32> to vector<512x128xf32>
    %9 = arith.mulf %7, %8 : vector<512x128xf32>
    %10 = vector.extract_strided_slice %2 {offsets = [0, 1], sizes = [512, 1], strides = [1, 1]} : vector<512x3xf32> to vector<512x1xf32>
    %11 = vector.extract_strided_slice %4 {offsets = [1, 0], sizes = [1, 128], strides = [1, 1]} : vector<3x128xf32> to vector<1x128xf32>
    %12 = vector.broadcast %10 : vector<512x1xf32> to vector<512x128xf32>
    %13 = vector.broadcast %11 : vector<1x128xf32> to vector<512x128xf32>
    %14 = arith.mulf %12, %13 : vector<512x128xf32>
    %15 = arith.addf %9, %14 : vector<512x128xf32>
    %16 = vector.extract_strided_slice %2 {offsets = [0, 2], sizes = [512, 1], strides = [1, 1]} : vector<512x3xf32> to vector<512x1xf32>
    %17 = vector.extract_strided_slice %4 {offsets = [2, 0], sizes = [1, 128], strides = [1, 1]} : vector<3x128xf32> to vector<1x128xf32>
    %18 = vector.broadcast %16 : vector<512x1xf32> to vector<512x128xf32>
    %19 = vector.broadcast %17 : vector<1x128xf32> to vector<512x128xf32>
    %20 = arith.mulf %18, %19 : vector<512x128xf32>
    %21 = arith.addf %15, %20 : vector<512x128xf32>
    %c0_4 = arith.constant 0 : index
    %c0_5 = arith.constant 0 : index
    %22 = vector.load %arg3[%c0_4, %c0_5] : memref<1x128xf32, #tpu.memory_space<vmem>>, vector<1x128xf32>
    %23 = vector.broadcast %22 : vector<1x128xf32> to vector<512x128xf32>
    %24 = arith.addf %21, %23 : vector<512x128xf32>
    %cst = arith.constant 0.000000e+00 : f32
    %25 = vector.broadcast %cst : f32 to vector<512x128xf32>
    %26 = arith.maximumf %24, %25 : vector<512x128xf32>
    %27 = arith.truncf %26 : vector<512x128xf32> to vector<512x128xbf16>
    %c0_6 = arith.constant 0 : index
    %c0_7 = arith.constant 0 : index
    %28 = vector.load %arg4[%c0_6, %c0_7] : memref<128x256xbf16, #tpu.memory_space<vmem>>, vector<128x256xbf16>
    %cst_8 = arith.constant dense<0.000000e+00> : vector<512x256xf32>
    %29 = tpu.matmul %27, %28, %cst_8 {dimension_numbers = #tpu.dot_dimension_numbers<[1], [0], [0], [1], [0, 0, 1, 1], [], []>} : vector<512x128xbf16>, vector<128x256xbf16>, vector<512x256xf32> -> vector<512x256xf32>
    %c0_9 = arith.constant 0 : index
    %c0_10 = arith.constant 0 : index
    %30 = vector.load %arg5[%c0_9, %c0_10] : memref<1x256xf32, #tpu.memory_space<vmem>>, vector<1x256xf32>
    %31 = vector.broadcast %30 : vector<1x256xf32> to vector<512x256xf32>
    %32 = arith.addf %29, %31 : vector<512x256xf32>
    %cst_11 = arith.constant dense<0xFF800000> : vector<256xf32>
    %33 = vector.multi_reduction <maximumf>, %32, %cst_11 [0] : vector<512x256xf32> to vector<256xf32>
    %34 = vector.shape_cast %33 : vector<256xf32> to vector<1x256xf32>
    %35 = arith.truncf %34 : vector<1x256xf32> to vector<1x256xbf16>
    %c0_12 = arith.constant 0 : index
    %c0_13 = arith.constant 0 : index
    %36 = vector.load %arg7[%c0_12, %c0_13] : memref<256x512xbf16, #tpu.memory_space<vmem>>, vector<256x512xbf16>
    %cst_14 = arith.constant dense<0.000000e+00> : vector<1x512xf32>
    %37 = tpu.matmul %35, %36, %cst_14 {dimension_numbers = #tpu.dot_dimension_numbers<[1], [0], [0], [1], [0, 0, 1, 1], [], []>} : vector<1x256xbf16>, vector<256x512xbf16>, vector<1x512xf32> -> vector<1x512xf32>
    %c0_15 = arith.constant 0 : index
    %c0_16 = arith.constant 0 : index
    %38 = vector.load %arg8[%c0_15, %c0_16] : memref<1x512xf32, #tpu.memory_space<vmem>>, vector<1x512xf32>
    %39 = arith.addf %37, %38 : vector<1x512xf32>
    %40 = arith.truncf %32 : vector<512x256xf32> to vector<512x256xbf16>
    %c0_17 = arith.constant 0 : index
    %c0_18 = arith.constant 0 : index
    %41 = vector.load %arg6[%c0_17, %c0_18] : memref<256x512xbf16, #tpu.memory_space<vmem>>, vector<256x512xbf16>
    %cst_19 = arith.constant dense<0.000000e+00> : vector<512x512xf32>
    %42 = tpu.matmul %40, %41, %cst_19 {dimension_numbers = #tpu.dot_dimension_numbers<[1], [0], [0], [1], [0, 0, 1, 1], [], []>} : vector<512x256xbf16>, vector<256x512xbf16>, vector<512x512xf32> -> vector<512x512xf32>
    %43 = vector.broadcast %39 : vector<1x512xf32> to vector<512x512xf32>
    %44 = arith.addf %42, %43 : vector<512x512xf32>
    %cst_20 = arith.constant 0.000000e+00 : f32
    %45 = vector.broadcast %cst_20 : f32 to vector<512x512xf32>
    %46 = arith.maximumf %44, %45 : vector<512x512xf32>
    %47 = arith.truncf %46 : vector<512x512xf32> to vector<512x512xbf16>
    %c0_21 = arith.constant 0 : index
    %c0_22 = arith.constant 0 : index
    %48 = vector.load %arg9[%c0_21, %c0_22] : memref<512x128xbf16, #tpu.memory_space<vmem>>, vector<512x128xbf16>
    %cst_23 = arith.constant dense<0.000000e+00> : vector<512x128xf32>
    %49 = tpu.matmul %47, %48, %cst_23 {dimension_numbers = #tpu.dot_dimension_numbers<[1], [0], [0], [1], [0, 0, 1, 1], [], []>} : vector<512x512xbf16>, vector<512x128xbf16>, vector<512x128xf32> -> vector<512x128xf32>
    %c0_24 = arith.constant 0 : index
    %c0_25 = arith.constant 0 : index
    %50 = vector.load %arg10[%c0_24, %c0_25] : memref<1x128xf32, #tpu.memory_space<vmem>>, vector<1x128xf32>
    %51 = vector.broadcast %50 : vector<1x128xf32> to vector<512x128xf32>
    %52 = arith.addf %49, %51 : vector<512x128xf32>
    %cst_26 = arith.constant dense<0xFF800000> : vector<128xf32>
    %53 = vector.multi_reduction <maximumf>, %52, %cst_26 [0] : vector<512x128xf32> to vector<128xf32>
    %54 = vector.shape_cast %53 : vector<128xf32> to vector<1x128xf32>
    %c0_27 = arith.constant 0 : index
    %c0_28 = arith.constant 0 : index
    %c0_29 = arith.constant 0 : index
    %55 = vector.load %arg11[%c0_27, %c0_28, %c0_29] : memref<1x1x128xf32, #tpu.memory_space<vmem>>, vector<1x1x128xf32>
    %56 = vector.shape_cast %55 : vector<1x1x128xf32> to vector<1x128xf32>
    %57 = vector.shape_cast %54 : vector<1x128xf32> to vector<1x1x128xf32>
    tpu.vector_store %arg11[%c0_27, %c0_28, %c0_29], %57 {strides = array<i32>} : memref<1x1x128xf32, #tpu.memory_space<vmem>>, vector<1x1x128xf32>,
    return
  }
  func.func @transform_0(%arg0: i32) -> (i32, i32, i32) {
    %c0_i32 = arith.constant 0 : i32
    %c0_i32_0 = arith.constant 0 : i32
    %c0_i32_1 = arith.constant 0 : i32
    return %arg0, %c0_i32, %c0_i32_0 : i32, i32, i32
  }
  func.func @transform_1(%arg0: i32) -> (i32, i32) {
    %c0_i32 = arith.constant 0 : i32
    %c0_i32_0 = arith.constant 0 : i32
    %c0_i32_1 = arith.constant 0 : i32
    return %c0_i32, %c0_i32_0 : i32, i32
  }
  func.func @transform_2(%arg0: i32) -> (i32, i32) {
    %c0_i32 = arith.constant 0 : i32
    %c0_i32_0 = arith.constant 0 : i32
    %c0_i32_1 = arith.constant 0 : i32
    return %c0_i32, %c0_i32_0 : i32, i32
  }
  func.func @transform_3(%arg0: i32) -> (i32, i32) {
    %c0_i32 = arith.constant 0 : i32
    %c0_i32_0 = arith.constant 0 : i32
    %c0_i32_1 = arith.constant 0 : i32
    return %c0_i32, %c0_i32_0 : i32, i32
  }
  func.func @transform_4(%arg0: i32) -> (i32, i32) {
    %c0_i32 = arith.constant 0 : i32
    %c0_i32_0 = arith.constant 0 : i32
    %c0_i32_1 = arith.constant 0 : i32
    return %c0_i32, %c0_i32_0 : i32, i32
  }
  func.func @transform_5(%arg0: i32) -> (i32, i32) {
    %c0_i32 = arith.constant 0 : i32
    %c0_i32_0 = arith.constant 0 : i32
    %c0_i32_1 = arith.constant 0 : i32
    return %c0_i32, %c0_i32_0 : i32, i32
  }
  func.func @transform_6(%arg0: i32) -> (i32, i32) {
    %c0_i32 = arith.constant 0 : i32
    %c0_i32_0 = arith.constant 0 : i32
    %c0_i32_1 = arith.constant 0 : i32
    return %c0_i32, %c0_i32_0 : i32, i32
  }
  func.func @transform_7(%arg0: i32) -> (i32, i32) {
    %c0_i32 = arith.constant 0 : i32
    %c0_i32_0 = arith.constant 0 : i32
    %c0_i32_1 = arith.constant 0 : i32
    return %c0_i32, %c0_i32_0 : i32, i32
  }
  func.func @transform_8(%arg0: i32) -> (i32, i32) {
    %c0_i32 = arith.constant 0 : i32
    %c0_i32_0 = arith.constant 0 : i32
    %c0_i32_1 = arith.constant 0 : i32
    return %c0_i32, %c0_i32_0 : i32, i32
  }
  func.func @transform_9(%arg0: i32) -> (i32, i32) {
    %c0_i32 = arith.constant 0 : i32
    %c0_i32_0 = arith.constant 0 : i32
    %c0_i32_1 = arith.constant 0 : i32
    return %c0_i32, %c0_i32_0 : i32, i32
  }
  func.func @transform_10(%arg0: i32) -> (i32, i32, i32) {
    %c0_i32 = arith.constant 0 : i32
    %c0_i32_0 = arith.constant 0 : i32
    %c0_i32_1 = arith.constant 0 : i32
    return %arg0, %c0_i32, %c0_i32_0 : i32, i32, i32
  }
}

</mosaic_0001>

<llo_original>
// kernel: tpu_custom_call.1
$region0: #{tpu_custom_call.1}
  #allocation0 [shape = 'u32[]', space=smem, size = 0x4, offset = 0x4, fixed_abs, tag = 'smem constant byte address 0x4 - core index']
  #allocation1 [shape = 'u32[144,128]{1,0:T(1,128)}', space=vmem, size = 0x12000, scoped, tag = 'internal scratch']
  %s0 = inlined_call_operand.vmem [shape: bf16[4,512,3], index: 0, kind: input, shape index: {}]
  %s1 = inlined_call_operand.vmem [shape: bf16[3,128], index: 1, kind: input, shape index: {}]
  %s2 = inlined_call_operand.vmem [shape: f32[1,128], index: 2, kind: input, shape index: {}]
  %s3 = inlined_call_operand.hbm [shape: bf16[128,256], index: 3, kind: input, shape index: {}]
  %s4 = inlined_call_operand.vmem [shape: f32[1,256], index: 4, kind: input, shape index: {}]
  %s5 = inlined_call_operand.vmem [shape: bf16[256,512], index: 5, kind: input, shape index: {}]
  %s6 = inlined_call_operand.vmem [shape: bf16[256,512], index: 6, kind: input, shape index: {}]
  %s7 = inlined_call_operand.vmem [shape: f32[1,512], index: 7, kind: input, shape index: {}]
  %s8 = inlined_call_operand.hbm [shape: bf16[512,128], index: 8, kind: input, shape index: {}]
  %s9 = inlined_call_operand.vmem [shape: f32[1,128], index: 9, kind: input, shape index: {}]
  %s10 = inlined_call_operand.hbm [shape: f32[4,1,128], index: 10, kind: output, shape index: {}]
  %s11 = sld [smem:[#allocation0]]
  $region81: #{tpu_custom_call.1} parent=0
    _
  %s13 = ssub.s32 1, %s11
  %s14 = scalar_select 0, %s13, %s11
  $region1: #{tpu_custom_call.1} parent=0
    #allocation2 [shape = 'u8[65536]{0}', space=vmem, size = 0x10000, scoped, tag = 'input window, operand 3, single buffered']
    #allocation3 [shape = 's32[2]{0}', space=sflag, size = 0x8, scoped, tag = 'scoped memory for tpu_custom_call.1']
    #allocation4 [shape = 's32[2]{0}', space=sflag, size = 0x8, scoped, tag = 'scoped memory for tpu_custom_call.1']
    #allocation5 [shape = 'u8[131072]{0}', space=vmem, size = 0x20000, scoped, tag = 'input window, operand 8, single buffered']
    #allocation6 [shape = 's32[1]{0}', space=sflag, size = 0x4, scoped, tag = 'scoped memory for tpu_custom_call.1']
    #allocation7 [shape = 'u8[1024]{0}', space=vmem, size = 0x400, scoped, tag = 'output window, operand 0']
    %15 = vsyncpa [#allocation3], 0
    %16 = vsyncpa [#allocation6], 0
    %17 = vsyncpa [#allocation4], 0
    %s18 = scalar_lea.sflag [#allocation4], 1
    %19 = vsyncpa %s18, 0
    loop: start=0, step=1, limit=6
    $region2: #{tpu_custom_call.1} parent=1 // loop_pre_header
      _
    $region3: #{tpu_custom_call.1} parent=1 // loop_header
      %s21 = sphi 0, %s25
      %p22 = scmp.ge.s32.totalorder %s21, 6
      %s31 = sphi 0, %s33
      %s34 = sphi 0, %s31
      %s35 = sphi 0, %s34
      %s51 = sphi 0, %s35
      %s55 = sphi 0, %s55
      %s57 = sphi 0, %s55
      %s58 = sphi 0, %s57
      %s72 = sphi 0, %s58
      %s76 = sphi 0, %s76
      %s78 = sphi 0, %s76
      %s79 = sphi 0, %s78
      %s93 = sphi 0, %s79
      %s97 = sphi 0, %s97
      %s99 = sphi 0, %s97
      %s100 = sphi 0, %s99
      %s114 = sphi 0, %s100
      %s118 = sphi 0, %s118
      %s120 = sphi 0, %s118
      %s121 = sphi 0, %s120
      %s135 = sphi 0, %s121
      %s139 = sphi 0, %s139
      %s141 = sphi 0, %s139
      %s142 = sphi 0, %s141
      %s156 = sphi 0, %s142
      %s160 = sphi 0, %s160
      %s162 = sphi 0, %s160
      %s163 = sphi 0, %s162
      %s177 = sphi 0, %s163
      %s181 = sphi 0, %s181
      %s183 = sphi 0, %s181
      %s184 = sphi 0, %s183
      %s198 = sphi 0, %s184
      %s202 = sphi 0, %s202
      %s204 = sphi 0, %s202
      %s205 = sphi 0, %s204
      %s219 = sphi 0, %s205
      %s223 = sphi 0, %s223
      %s225 = sphi 0, %s223
      %s226 = sphi 0, %s225
      %s240 = sphi 0, %s226
      %s246 = sphi 0, %s248
      %s249 = sphi 0, %s246
      %s250 = sphi 0, %s249
      %s266 = sphi 0, %s250
    $region4: #{tpu_custom_call.1} parent=1 // loop_header_branch
      %24 = sbr.rel (%p22) target = $region8
    $region5: #{tpu_custom_call.1} parent=1 // loop_body
      %s26 = ssub.s32 %s21, 1
      %s27 = ssub.s32 %s21, 2
      %s28 = sadd.s32 %s21, 1
      %s29 = ssub.s32 %s21, %s28
      %p30 = scmp.eq.s32.totalorder %s29, 0
      %s32 = sadd.s32 %s31, 1
      %s33 = scalar_select %p30, %s31, %s32
      %p36 = pneg %p30
      %p37 = scmp.eq.s32.totalorder %s21, 3
      %p38 = por %p36, %p37
      %p39 = scmp.ne.s32.totalorder %s31, %s34
      %p40 = scmp.eq.s32.totalorder %s21, 0
      %p41 = por %p39, %p40
      %p42 = scmp.ne.s32.totalorder %s31, %s34
      %p43 = scmp.eq.s32.totalorder %s26, 3
      %p44 = por %p42, %p43
      %p45 = scmp.ne.s32.totalorder %s34, %s35
      %p46 = scmp.eq.s32.totalorder %s26, 0
      %p47 = por %p45, %p46
      %p48 = scmp.ne.s32.totalorder %s34, %s35
      %p49 = scmp.eq.s32.totalorder %s27, 3
      %p50 = por %p48, %p49
      %p52 = scmp.ne.s32.totalorder %s35, %s51
      %p53 = scmp.eq.s32.totalorder %s27, 0
      %p54 = por %p52, %p53
      %s56 = sadd.s32 %s55, 1
      %p59 = scmp.eq.s32.totalorder %s21, 3
      %p60 = scmp.ne.s32.totalorder %s55, %s57
      %p61 = scmp.eq.s32.totalorder %s21, 0
      %p62 = por %p60, %p61
      %p63 = scmp.ne.s32.totalorder %s55, %s57
      %p64 = scmp.eq.s32.totalorder %s26, 3
      %p65 = por %p63, %p64
      %p66 = scmp.ne.s32.totalorder %s57, %s58
      %p67 = scmp.eq.s32.totalorder %s26, 0
      %p68 = por %p66, %p67
      %p69 = scmp.ne.s32.totalorder %s57, %s58
      %p70 = scmp.eq.s32.totalorder %s27, 3
      %p71 = por %p69, %p70
      %p73 = scmp.ne.s32.totalorder %s58, %s72
      %p74 = scmp.eq.s32.totalorder %s27, 0
      %p75 = por %p73, %p74
      %s77 = sadd.s32 %s76, 1
      %p80 = scmp.eq.s32.totalorder %s21, 3
      %p81 = scmp.ne.s32.totalorder %s76, %s78
      %p82 = scmp.eq.s32.totalorder %s21, 0
      %p83 = por %p81, %p82
      %p84 = scmp.ne.s32.totalorder %s76, %s78
      %p85 = scmp.eq.s32.totalorder %s26, 3
      %p86 = por %p84, %p85
      %p87 = scmp.ne.s32.totalorder %s78, %s79
      %p88 = scmp.eq.s32.totalorder %s26, 0
      %p89 = por %p87, %p88
      %p90 = scmp.ne.s32.totalorder %s78, %s79
      %p91 = scmp.eq.s32.totalorder %s27, 3
      %p92 = por %p90, %p91
      %p94 = scmp.ne.s32.totalorder %s79, %s93
      %p95 = scmp.eq.s32.totalorder %s27, 0
      %p96 = por %p94, %p95
      %s98 = sadd.s32 %s97, 1
      %p101 = scmp.eq.s32.totalorder %s21, 3
      %p102 = scmp.ne.s32.totalorder %s97, %s99
      %p103 = scmp.eq.s32.totalorder %s21, 0
      %p104 = por %p102, %p103
      %p105 = scmp.ne.s32.totalorder %s97, %s99
      %p106 = scmp.eq.s32.totalorder %s26, 3
      %p107 = por %p105, %p106
      %p108 = scmp.ne.s32.totalorder %s99, %s100
      %p109 = scmp.eq.s32.totalorder %s26, 0
      %p110 = por %p108, %p109
      %p111 = scmp.ne.s32.totalorder %s99, %s100
      %p112 = scmp.eq.s32.totalorder %s27, 3
      %p113 = por %p111, %p112
      %p115 = scmp.ne.s32.totalorder %s100, %s114
      %p116 = scmp.eq.s32.totalorder %s27, 0
      %p117 = por %p115, %p116
      %s119 = sadd.s32 %s118, 1
      %p122 = scmp.eq.s32.totalorder %s21, 3
      %p123 = scmp.ne.s32.totalorder %s118, %s120
      %p124 = scmp.eq.s32.totalorder %s21, 0
      %p125 = por %p123, %p124
      %p126 = scmp.ne.s32.totalorder %s118, %s120
      %p127 = scmp.eq.s32.totalorder %s26, 3
      %p128 = por %p126, %p127
      %p129 = scmp.ne.s32.totalorder %s120, %s121
      %p130 = scmp.eq.s32.totalorder %s26, 0
      %p131 = por %p129, %p130
      %p132 = scmp.ne.s32.totalorder %s120, %s121
      %p133 = scmp.eq.s32.totalorder %s27, 3
      %p134 = por %p132, %p133
      %p136 = scmp.ne.s32.totalorder %s121, %s135
      %p137 = scmp.eq.s32.totalorder %s27, 0
      %p138 = por %p136, %p137
      %s140 = sadd.s32 %s139, 1
      %p143 = scmp.eq.s32.totalorder %s21, 3
      %p144 = scmp.ne.s32.totalorder %s139, %s141
      %p145 = scmp.eq.s32.totalorder %s21, 0
      %p146 = por %p144, %p145
      %p147 = scmp.ne.s32.totalorder %s139, %s141
      %p148 = scmp.eq.s32.totalorder %s26, 3
      %p149 = por %p147, %p148
      %p150 = scmp.ne.s32.totalorder %s141, %s142
      %p151 = scmp.eq.s32.totalorder %s26, 0
      %p152 = por %p150, %p151
      %p153 = scmp.ne.s32.totalorder %s141, %s142
      %p154 = scmp.eq.s32.totalorder %s27, 3
      %p155 = por %p153, %p154
      %p157 = scmp.ne.s32.totalorder %s142, %s156
      %p158 = scmp.eq.s32.totalorder %s27, 0
      %p159 = por %p157, %p158
      %s161 = sadd.s32 %s160, 1
      %p164 = scmp.eq.s32.totalorder %s21, 3
      %p165 = scmp.ne.s32.totalorder %s160, %s162
      %p166 = scmp.eq.s32.totalorder %s21, 0
      %p167 = por %p165, %p166
      %p168 = scmp.ne.s32.totalorder %s160, %s162
      %p169 = scmp.eq.s32.totalorder %s26, 3
      %p170 = por %p168, %p169
      %p171 = scmp.ne.s32.totalorder %s162, %s163
      %p172 = scmp.eq.s32.totalorder %s26, 0
      %p173 = por %p171, %p172
      %p174 = scmp.ne.s32.totalorder %s162, %s163
      %p175 = scmp.eq.s32.totalorder %s27, 3
      %p176 = por %p174, %p175
      %p178 = scmp.ne.s32.totalorder %s163, %s177
      %p179 = scmp.eq.s32.totalorder %s27, 0
      %p180 = por %p178, %p179
      %s182 = sadd.s32 %s181, 1
      %p185 = scmp.eq.s32.totalorder %s21, 3
      %p186 = scmp.ne.s32.totalorder %s181, %s183
      %p187 = scmp.eq.s32.totalorder %s21, 0
      %p188 = por %p186, %p187
      %p189 = scmp.ne.s32.totalorder %s181, %s183
      %p190 = scmp.eq.s32.totalorder %s26, 3
      %p191 = por %p189, %p190
      %p192 = scmp.ne.s32.totalorder %s183, %s184
      %p193 = scmp.eq.s32.totalorder %s26, 0
      %p194 = por %p192, %p193
      %p195 = scmp.ne.s32.totalorder %s183, %s184
      %p196 = scmp.eq.s32.totalorder %s27, 3
      %p197 = por %p195, %p196
      %p199 = scmp.ne.s32.totalorder %s184, %s198
      %p200 = scmp.eq.s32.totalorder %s27, 0
      %p201 = por %p199, %p200
      %s203 = sadd.s32 %s202, 1
      %p206 = scmp.eq.s32.totalorder %s21, 3
      %p207 = scmp.ne.s32.totalorder %s202, %s204
      %p208 = scmp.eq.s32.totalorder %s21, 0
      %p209 = por %p207, %p208
      %p210 = scmp.ne.s32.totalorder %s202, %s204
      %p211 = scmp.eq.s32.totalorder %s26, 3
      %p212 = por %p210, %p211
      %p213 = scmp.ne.s32.totalorder %s204, %s205
      %p214 = scmp.eq.s32.totalorder %s26, 0
      %p215 = por %p213, %p214
      %p216 = scmp.ne.s32.totalorder %s204, %s205
      %p217 = scmp.eq.s32.totalorder %s27, 3
      %p218 = por %p216, %p217
      %p220 = scmp.ne.s32.totalorder %s205, %s219
      %p221 = scmp.eq.s32.totalorder %s27, 0
      %p222 = por %p220, %p221
      %s224 = sadd.s32 %s223, 1
      %p227 = scmp.eq.s32.totalorder %s21, 3
      %p228 = scmp.ne.s32.totalorder %s223, %s225
      %p229 = scmp.eq.s32.totalorder %s21, 0
      %p230 = por %p228, %p229
      %p231 = scmp.ne.s32.totalorder %s223, %s225
      %p232 = scmp.eq.s32.totalorder %s26, 3
      %p233 = por %p231, %p232
      %p234 = scmp.ne.s32.totalorder %s225, %s226
      %p235 = scmp.eq.s32.totalorder %s26, 0
      %p236 = por %p234, %p235
      %p237 = scmp.ne.s32.totalorder %s225, %s226
      %p238 = scmp.eq.s32.totalorder %s27, 3
      %p239 = por %p237, %p238
      %p241 = scmp.ne.s32.totalorder %s226, %s240
      %p242 = scmp.eq.s32.totalorder %s27, 0
      %p243 = por %p241, %p242
      %s244 = ssub.s32 %s21, %s28
      %p245 = scmp.eq.s32.totalorder %s244, 0
      %s247 = sadd.s32 %s246, 1
      %s248 = scalar_select %p245, %s246, %s247
      %p251 = pneg %p245
      %p252 = scmp.eq.s32.totalorder %s21, 3
      %p253 = por %p251, %p252
      %p254 = scmp.ne.s32.totalorder %s246, %s249
      %p255 = scmp.eq.s32.totalorder %s21, 0
      %p256 = por %p254, %p255
      %p257 = scmp.ne.s32.totalorder %s246, %s249
      %p258 = scmp.eq.s32.totalorder %s26, 3
      %p259 = por %p257, %p258
      %p260 = scmp.ne.s32.totalorder %s249, %s250
      %p261 = scmp.eq.s32.totalorder %s26, 0
      %p262 = por %p260, %p261
      %p263 = scmp.ne.s32.totalorder %s249, %s250
      %p264 = scmp.eq.s32.totalorder %s27, 3
      %p265 = por %p263, %p264
      %p267 = scmp.ne.s32.totalorder %s250, %s266
      %p268 = scmp.eq.s32.totalorder %s27, 0
      %p269 = por %p267, %p268
      %p270 = scmp.le.s32.totalorder 1, %s21
      %p271 = scmp.lt.s32.totalorder %s21, 5
      %p272 = pnand %p270, %p271
      %p273 = pneg %p272
      // Predicated region
      $region9: #{tpu_custom_call.1} parent=5 // pred_check
        _
      $region10: #{tpu_custom_call.1} parent=5 // pred_check_branch
        %275 = sbr.rel (%p272) target = $region12
      $region11: #{tpu_custom_call.1} parent=5 // pred_region
        %s276 = ssub.s32 %s21, 1
        // Predicated region
        $region13: #{tpu_custom_call.1} parent=11 // pred_check
          %p277 = pneg %p68
        $region14: #{tpu_custom_call.1} parent=11 // pred_check_branch
          %279 = sbr.rel (%p277) target = $region16
        $region15: #{tpu_custom_call.1} parent=11 // pred_region
          _
        $region16: #{tpu_custom_call.1} parent=11 // pred_fallthru
          _
        // Predicated region
        $region17: #{tpu_custom_call.1} parent=11 // pred_check
          %p280 = pneg %p89
        $region18: #{tpu_custom_call.1} parent=11 // pred_check_branch
          %282 = sbr.rel (%p280) target = $region20
        $region19: #{tpu_custom_call.1} parent=11 // pred_region
          _
        $region20: #{tpu_custom_call.1} parent=11 // pred_fallthru
          _
        // Predicated region
        $region21: #{tpu_custom_call.1} parent=11 // pred_check
          %p283 = pneg %p110
        $region22: #{tpu_custom_call.1} parent=11 // pred_check_branch
          %285 = sbr.rel (%p283) target = $region24
        $region23: #{tpu_custom_call.1} parent=11 // pred_region
          %s287 = ssub.s32 2048, 2048
          %288 = vsyncadd [#allocation3], %s287
          %s289 = sshll.u32 [#allocation2], 4
          %s290 = int_to_ptr.vmem [resolvable:$true] %s289
          %295 = dma.hbm_to_vmem [thread:$0]  %s3, 2048, %s290, [#allocation3], 128, 128, 8
        $region24: #{tpu_custom_call.1} parent=11 // pred_fallthru
          _
        // Predicated region
        $region25: #{tpu_custom_call.1} parent=11 // pred_check
          %p296 = pneg %p131
        $region26: #{tpu_custom_call.1} parent=11 // pred_check_branch
          %298 = sbr.rel (%p296) target = $region28
        $region27: #{tpu_custom_call.1} parent=11 // pred_region
          _
        $region28: #{tpu_custom_call.1} parent=11 // pred_fallthru
          _
        // Predicated region
        $region29: #{tpu_custom_call.1} parent=11 // pred_check
          %p299 = pneg %p152
        $region30: #{tpu_custom_call.1} parent=11 // pred_check_branch
          %301 = sbr.rel (%p299) target = $region32
        $region31: #{tpu_custom_call.1} parent=11 // pred_region
          _
        $region32: #{tpu_custom_call.1} parent=11 // pred_fallthru
          _
        // Predicated region
        $region33: #{tpu_custom_call.1} parent=11 // pred_check
          %p302 = pneg %p173
        $region34: #{tpu_custom_call.1} parent=11 // pred_check_branch
          %304 = sbr.rel (%p302) target = $region36
        $region35: #{tpu_custom_call.1} parent=11 // pred_region
          _
        $region36: #{tpu_custom_call.1} parent=11 // pred_fallthru
          _
        // Predicated region
        $region37: #{tpu_custom_call.1} parent=11 // pred_check
          %p305 = pneg %p194
        $region38: #{tpu_custom_call.1} parent=11 // pred_check_branch
          %307 = sbr.rel (%p305) target = $region40
        $region39: #{tpu_custom_call.1} parent=11 // pred_region
          _
        $region40: #{tpu_custom_call.1} parent=11 // pred_fallthru
          _
        // Predicated region
        $region41: #{tpu_custom_call.1} parent=11 // pred_check
          %p308 = pneg %p215
        $region42: #{tpu_custom_call.1} parent=11 // pred_check_branch
          %310 = sbr.rel (%p308) target = $region44
        $region43: #{tpu_custom_call.1} parent=11 // pred_region
          %s312 = ssub.s32 4096, 4096
          %313 = vsyncadd [#allocation6], %s312
          %s314 = sshll.u32 [#allocation5], 4
          %s315 = int_to_ptr.vmem [resolvable:$true] %s314
          %320 = dma.hbm_to_vmem [thread:$0]  %s8, 4096, %s315, [#allocation6], 64, 64, 4
        $region44: #{tpu_custom_call.1} parent=11 // pred_fallthru
          _
        // Predicated region
        $region45: #{tpu_custom_call.1} parent=11 // pred_check
          %p321 = pneg %p236
        $region46: #{tpu_custom_call.1} parent=11 // pred_check_branch
          %323 = sbr.rel (%p321) target = $region48
        $region47: #{tpu_custom_call.1} parent=11 // pred_region
          _
        $region48: #{tpu_custom_call.1} parent=11 // pred_fallthru
          _
      $region12: #{tpu_custom_call.1} parent=5 // pred_fallthru
        _
      %p324 = scmp.lt.s32.totalorder %s21, 4
      // Predicated region
      $region49: #{tpu_custom_call.1} parent=5 // pred_check
        %p325 = pneg %p324
      $region50: #{tpu_custom_call.1} parent=5 // pred_check_branch
        %327 = sbr.rel (%p325) target = $region52
      $region51: #{tpu_custom_call.1} parent=5 // pred_region
        // Predicated region
        $region53: #{tpu_custom_call.1} parent=51 // pred_check
          %p328 = pneg %p41
        $region54: #{tpu_custom_call.1} parent=51 // pred_check_branch
          %330 = sbr.rel (%p328) target = $region56
        $region55: #{tpu_custom_call.1} parent=51 // pred_region
          %p331 = scmp.lt.s32.totalorder %s21, 3
          %s332 = scalar_select %p331, %s21, 3
          %s333 = smul.addr %s332, 64
          %s334 = smul.addr %s333, 4
          %s335 = scalar_lea.vmem %s0, %s334
        $region56: #{tpu_custom_call.1} parent=51 // pred_fallthru
          _
      $region52: #{tpu_custom_call.1} parent=5 // pred_fallthru
        _
      %p336 = scmp.le.s32.totalorder 1, %s21
      %p337 = scmp.lt.s32.totalorder %s21, 5
      %p338 = pnand %p336, %p337
      %p339 = pneg %p338
      // Predicated region
      $region57: #{tpu_custom_call.1} parent=5 // pred_check
        _
      $region58: #{tpu_custom_call.1} parent=5 // pred_check_branch
        %341 = sbr.rel (%p338) target = $region60
      $region59: #{tpu_custom_call.1} parent=5 // pred_region
        %s342 = ssub.s32 %s21, 1
        // Predicated region
        $region61: #{tpu_custom_call.1} parent=59 // pred_check
          %p343 = pneg %p110
        $region62: #{tpu_custom_call.1} parent=59 // pred_check_branch
          %345 = sbr.rel (%p343) target = $region64
        $region63: #{tpu_custom_call.1} parent=59 // pred_region
          %346 = dma.done [#allocation3], 2048
        $region64: #{tpu_custom_call.1} parent=59 // pred_fallthru
          _
        // Predicated region
        $region65: #{tpu_custom_call.1} parent=59 // pred_check
          %p347 = pneg %p215
        $region66: #{tpu_custom_call.1} parent=59 // pred_check_branch
          %349 = sbr.rel (%p347) target = $region68
        $region67: #{tpu_custom_call.1} parent=59 // pred_region
          %350 = dma.done [#allocation6], 4096
        $region68: #{tpu_custom_call.1} parent=59 // pred_fallthru
          _
        %p351 = scmp.lt.s32.totalorder %s26, 3
        %s352 = scalar_select %p351, %s26, 3
        %s353 = smul.addr %s352, 64
        %s354 = smul.addr %s353, 4
        %s355 = scalar_lea.vmem %s0, %s354
        %p356 = pneg %p47
        %p357 = pneg %p44
        %p358 = pneg %p68
        %p359 = pneg %p65
        %p360 = pneg %p89
        %p361 = pneg %p86
        %p362 = pneg %p110
        %p363 = pneg %p107
        %p364 = pneg %p131
        %p365 = pneg %p128
        %p366 = pneg %p152
        %p367 = pneg %p149
        %p368 = pneg %p173
        %p369 = pneg %p170
        %p370 = pneg %p194
        %p371 = pneg %p191
        %p372 = pneg %p215
        %p373 = pneg %p212
        %p374 = pneg %p236
        %p375 = pneg %p233
        %p376 = pneg %p262
        %p377 = pneg %p259
        %s378 = sand.u32 %s249, 1
        %s379 = scalar_lea.sflag [#allocation4], %s378
        %s380 = sand.u32 %s249, 1
        %s381 = scalar_lea.vmem [#allocation7], %s380
        %p382 = scmp.lt.s32.totalorder %s26, 3
        %s383 = scalar_select %p382, %s26, 3
        %s384 = smul.addr %s383, 64
        %s385 = smul.addr %s384, 4
        %s386 = scalar_lea.vmem %s0, %s385
        %v388 = vld [vmem:[%s386] sm:$0xf]
        %v389 = vld [vmem:[%s386 + $0x4] sm:$0xf]
        %v390 = vld [vmem:[%s386 + $0x8] sm:$0xf]
        %v391 = vld [vmem:[%s386 + $0xc] sm:$0xf]
        %v392 = vld [vmem:[%s386 + $0x10] sm:$0xf]
        %v393 = vld [vmem:[%s386 + $0x14] sm:$0xf]
        %v394 = vld [vmem:[%s386 + $0x18] sm:$0xf]
        %v395 = vld [vmem:[%s386 + $0x1c] sm:$0xf]
        %v396 = vld [vmem:[%s386 + $0x20] sm:$0xf]
        %v397 = vld [vmem:[%s386 + $0x24] sm:$0xf]
        %v398 = vld [vmem:[%s386 + $0x28] sm:$0xf]
        %v399 = vld [vmem:[%s386 + $0x2c] sm:$0xf]
        %v400 = vld [vmem:[%s386 + $0x30] sm:$0xf]
        %v401 = vld [vmem:[%s386 + $0x34] sm:$0xf]
        %v402 = vld [vmem:[%s386 + $0x38] sm:$0xf]
        %v403 = vld [vmem:[%s386 + $0x3c] sm:$0xf]
        %v404 = vld [vmem:[%s386 + $0x40] sm:$0xf]
        %v405 = vld [vmem:[%s386 + $0x44] sm:$0xf]
        %v406 = vld [vmem:[%s386 + $0x48] sm:$0xf]
        %v407 = vld [vmem:[%s386 + $0x4c] sm:$0xf]
        %v408 = vld [vmem:[%s386 + $0x50] sm:$0xf]
        %v409 = vld [vmem:[%s386 + $0x54] sm:$0xf]
        %v410 = vld [vmem:[%s386 + $0x58] sm:$0xf]
        %v411 = vld [vmem:[%s386 + $0x5c] sm:$0xf]
        %v412 = vld [vmem:[%s386 + $0x60] sm:$0xf]
        %v413 = vld [vmem:[%s386 + $0x64] sm:$0xf]
        %v414 = vld [vmem:[%s386 + $0x68] sm:$0xf]
        %v415 = vld [vmem:[%s386 + $0x6c] sm:$0xf]
        %v416 = vld [vmem:[%s386 + $0x70] sm:$0xf]
        %v417 = vld [vmem:[%s386 + $0x74] sm:$0xf]
        %v418 = vld [vmem:[%s386 + $0x78] sm:$0xf]
        %v419 = vld [vmem:[%s386 + $0x7c] sm:$0xf]
        %v420 = vld [vmem:[%s386 + $0x80] sm:$0xf]
        %v421 = vld [vmem:[%s386 + $0x84] sm:$0xf]
        %v422 = vld [vmem:[%s386 + $0x88] sm:$0xf]
        %v423 = vld [vmem:[%s386 + $0x8c] sm:$0xf]
        %v424 = vld [vmem:[%s386 + $0x90] sm:$0xf]
        %v425 = vld [vmem:[%s386 + $0x94] sm:$0xf]
        %v426 = vld [vmem:[%s386 + $0x98] sm:$0xf]
        %v427 = vld [vmem:[%s386 + $0x9c] sm:$0xf]
        %v428 = vld [vmem:[%s386 + $0xa0] sm:$0xf]
        %v429 = vld [vmem:[%s386 + $0xa4] sm:$0xf]
        %v430 = vld [vmem:[%s386 + $0xa8] sm:$0xf]
        %v431 = vld [vmem:[%s386 + $0xac] sm:$0xf]
        %v432 = vld [vmem:[%s386 + $0xb0] sm:$0xf]
        %v433 = vld [vmem:[%s386 + $0xb4] sm:$0xf]
        %v434 = vld [vmem:[%s386 + $0xb8] sm:$0xf]
        %v435 = vld [vmem:[%s386 + $0xbc] sm:$0xf]
        %v436 = vld [vmem:[%s386 + $0xc0] sm:$0xf]
        %v437 = vld [vmem:[%s386 + $0xc4] sm:$0xf]
        %v438 = vld [vmem:[%s386 + $0xc8] sm:$0xf]
        %v439 = vld [vmem:[%s386 + $0xcc] sm:$0xf]
        %v440 = vld [vmem:[%s386 + $0xd0] sm:$0xf]
        %v441 = vld [vmem:[%s386 + $0xd4] sm:$0xf]
        %v442 = vld [vmem:[%s386 + $0xd8] sm:$0xf]
        %v443 = vld [vmem:[%s386 + $0xdc] sm:$0xf]
        %v444 = vld [vmem:[%s386 + $0xe0] sm:$0xf]
        %v445 = vld [vmem:[%s386 + $0xe4] sm:$0xf]
        %v446 = vld [vmem:[%s386 + $0xe8] sm:$0xf]
        %v447 = vld [vmem:[%s386 + $0xec] sm:$0xf]
        %v448 = vld [vmem:[%s386 + $0xf0] sm:$0xf]
        %v449 = vld [vmem:[%s386 + $0xf4] sm:$0xf]
        %v450 = vld [vmem:[%s386 + $0xf8] sm:$0xf]
        %v451 = vld [vmem:[%s386 + $0xfc] sm:$0xf]
        %v452 = vunpack.c.l.bf16 %v388
        %v453 = vunpack.c.l.bf16 %v389
        %v454 = vunpack.c.l.bf16 %v390
        %v455 = vunpack.c.l.bf16 %v391
        %v456 = vunpack.c.l.bf16 %v392
        %v457 = vunpack.c.l.bf16 %v393
        %v458 = vunpack.c.l.bf16 %v394
        %v459 = vunpack.c.l.bf16 %v395
        %v460 = vunpack.c.l.bf16 %v396
        %v461 = vunpack.c.l.bf16 %v397
        %v462 = vunpack.c.l.bf16 %v398
        %v463 = vunpack.c.l.bf16 %v399
        %v464 = vunpack.c.l.bf16 %v400
        %v465 = vunpack.c.l.bf16 %v401
        %v466 = vunpack.c.l.bf16 %v402
        %v467 = vunpack.c.l.bf16 %v403
        %v468 = vunpack.c.l.bf16 %v404
        %v469 = vunpack.c.l.bf16 %v405
        %v470 = vunpack.c.l.bf16 %v406
        %v471 = vunpack.c.l.bf16 %v407
        %v472 = vunpack.c.l.bf16 %v408
        %v473 = vunpack.c.l.bf16 %v409
        %v474 = vunpack.c.l.bf16 %v410
        %v475 = vunpack.c.l.bf16 %v411
        %v476 = vunpack.c.l.bf16 %v412
        %v477 = vunpack.c.l.bf16 %v413
        %v478 = vunpack.c.l.bf16 %v414
        %v479 = vunpack.c.l.bf16 %v415
        %v480 = vunpack.c.l.bf16 %v416
        %v481 = vunpack.c.l.bf16 %v417
        %v482 = vunpack.c.l.bf16 %v418
        %v483 = vunpack.c.l.bf16 %v419
        %v484 = vunpack.c.l.bf16 %v420
        %v485 = vunpack.c.l.bf16 %v421
        %v486 = vunpack.c.l.bf16 %v422
        %v487 = vunpack.c.l.bf16 %v423
        %v488 = vunpack.c.l.bf16 %v424
        %v489 = vunpack.c.l.bf16 %v425
        %v490 = vunpack.c.l.bf16 %v426
        %v491 = vunpack.c.l.bf16 %v427
        %v492 = vunpack.c.l.bf16 %v428
        %v493 = vunpack.c.l.bf16 %v429
        %v494 = vunpack.c.l.bf16 %v430
        %v495 = vunpack.c.l.bf16 %v431
        %v496 = vunpack.c.l.bf16 %v432
        %v497 = vunpack.c.l.bf16 %v433
        %v498 = vunpack.c.l.bf16 %v434
        %v499 = vunpack.c.l.bf16 %v435
        %v500 = vunpack.c.l.bf16 %v436
        %v501 = vunpack.c.l.bf16 %v437
        %v502 = vunpack.c.l.bf16 %v438
        %v503 = vunpack.c.l.bf16 %v439
        %v504 = vunpack.c.l.bf16 %v440
        %v505 = vunpack.c.l.bf16 %v441
        %v506 = vunpack.c.l.bf16 %v442
        %v507 = vunpack.c.l.bf16 %v443
        %v508 = vunpack.c.l.bf16 %v444
        %v509 = vunpack.c.l.bf16 %v445
        %v510 = vunpack.c.l.bf16 %v446
        %v511 = vunpack.c.l.bf16 %v447
        %v512 = vunpack.c.l.bf16 %v448
        %v513 = vunpack.c.l.bf16 %v449
        %v514 = vunpack.c.l.bf16 %v450
        %v515 = vunpack.c.l.bf16 %v451
        %v516 = vld [vmem:[%s1] sm:$0x3]
        %v517 = vunpack.c.l.bf16 %v516
        %519 = vset.pattern.permute.xlu0 0
        %520 = vperm.xlu0 %519, %v452
        %v521 = vpop.permute.xlu0 %520
        %524 = vset.pattern.permute.xlu0 0
        %525 = vperm.xlu0 %524, %v453
        %v526 = vpop.permute.xlu0 %525
        %529 = vset.pattern.permute.xlu0 0
        %530 = vperm.xlu0 %529, %v454
        %v531 = vpop.permute.xlu0 %530
        %534 = vset.pattern.permute.xlu0 0
        %535 = vperm.xlu0 %534, %v455
        %v536 = vpop.permute.xlu0 %535
        %539 = vset.pattern.permute.xlu0 0
        %540 = vperm.xlu0 %539, %v456
        %v541 = vpop.permute.xlu0 %540
        %544 = vset.pattern.permute.xlu0 0
        %545 = vperm.xlu0 %544, %v457
        %v546 = vpop.permute.xlu0 %545
        %549 = vset.pattern.permute.xlu0 0
        %550 = vperm.xlu0 %549, %v458
        %v551 = vpop.permute.xlu0 %550
        %554 = vset.pattern.permute.xlu0 0
        %555 = vperm.xlu0 %554, %v459
        %v556 = vpop.permute.xlu0 %555
        %559 = vset.pattern.permute.xlu0 0
        %560 = vperm.xlu0 %559, %v460
        %v561 = vpop.permute.xlu0 %560
        %564 = vset.pattern.permute.xlu0 0
        %565 = vperm.xlu0 %564, %v461
        %v566 = vpop.permute.xlu0 %565
        %569 = vset.pattern.permute.xlu0 0
        %570 = vperm.xlu0 %569, %v462
        %v571 = vpop.permute.xlu0 %570
        %574 = vset.pattern.permute.xlu0 0
        %575 = vperm.xlu0 %574, %v463
        %v576 = vpop.permute.xlu0 %575
        %579 = vset.pattern.permute.xlu0 0
        %580 = vperm.xlu0 %579, %v464
        %v581 = vpop.permute.xlu0 %580
        %584 = vset.pattern.permute.xlu0 0
        %585 = vperm.xlu0 %584, %v465
        %v586 = vpop.permute.xlu0 %585
        %589 = vset.pattern.permute.xlu0 0
        %590 = vperm.xlu0 %589, %v466
        %v591 = vpop.permute.xlu0 %590
        %594 = vset.pattern.permute.xlu0 0
        %595 = vperm.xlu0 %594, %v467
        %v596 = vpop.permute.xlu0 %595
        %599 = vset.pattern.permute.xlu0 0
        %600 = vperm.xlu0 %599, %v468
        %v601 = vpop.permute.xlu0 %600
        %604 = vset.pattern.permute.xlu0 0
        %605 = vperm.xlu0 %604, %v469
        %v606 = vpop.permute.xlu0 %605
        %609 = vset.pattern.permute.xlu0 0
        %610 = vperm.xlu0 %609, %v470
        %v611 = vpop.permute.xlu0 %610
        %614 = vset.pattern.permute.xlu0 0
        %615 = vperm.xlu0 %614, %v471
        %v616 = vpop.permute.xlu0 %615
        %619 = vset.pattern.permute.xlu0 0
        %620 = vperm.xlu0 %619, %v472
        %v621 = vpop.permute.xlu0 %620
        %624 = vset.pattern.permute.xlu0 0
        %625 = vperm.xlu0 %624, %v473
        %v626 = vpop.permute.xlu0 %625
        %629 = vset.pattern.permute.xlu0 0
        %630 = vperm.xlu0 %629, %v474
        %v631 = vpop.permute.xlu0 %630
        %634 = vset.pattern.permute.xlu0 0
        %635 = vperm.xlu0 %634, %v475
        %v636 = vpop.permute.xlu0 %635
        %639 = vset.pattern.permute.xlu0 0
        %640 = vperm.xlu0 %639, %v476
        %v641 = vpop.permute.xlu0 %640
        %644 = vset.pattern.permute.xlu0 0
        %645 = vperm.xlu0 %644, %v477
        %v646 = vpop.permute.xlu0 %645
        %649 = vset.pattern.permute.xlu0 0
        %650 = vperm.xlu0 %649, %v478
        %v651 = vpop.permute.xlu0 %650
        %654 = vset.pattern.permute.xlu0 0
        %655 = vperm.xlu0 %654, %v479
        %v656 = vpop.permute.xlu0 %655
        %659 = vset.pattern.permute.xlu0 0
        %660 = vperm.xlu0 %659, %v480
        %v661 = vpop.permute.xlu0 %660
        %664 = vset.pattern.permute.xlu0 0
        %665 = vperm.xlu0 %664, %v481
        %v666 = vpop.permute.xlu0 %665
        %669 = vset.pattern.permute.xlu0 0
        %670 = vperm.xlu0 %669, %v482
        %v671 = vpop.permute.xlu0 %670
        %674 = vset.pattern.permute.xlu0 0
        %675 = vperm.xlu0 %674, %v483
        %v676 = vpop.permute.xlu0 %675
        %679 = vset.pattern.permute.xlu0 0
        %680 = vperm.xlu0 %679, %v484
        %v681 = vpop.permute.xlu0 %680
        %684 = vset.pattern.permute.xlu0 0
        %685 = vperm.xlu0 %684, %v485
        %v686 = vpop.permute.xlu0 %685
        %689 = vset.pattern.permute.xlu0 0
        %690 = vperm.xlu0 %689, %v486
        %v691 = vpop.permute.xlu0 %690
        %694 = vset.pattern.permute.xlu0 0
        %695 = vperm.xlu0 %694, %v487
        %v696 = vpop.permute.xlu0 %695
        %699 = vset.pattern.permute.xlu0 0
        %700 = vperm.xlu0 %699, %v488
        %v701 = vpop.permute.xlu0 %700
        %704 = vset.pattern.permute.xlu0 0
        %705 = vperm.xlu0 %704, %v489
        %v706 = vpop.permute.xlu0 %705
        %709 = vset.pattern.permute.xlu0 0
        %710 = vperm.xlu0 %709, %v490
        %v711 = vpop.permute.xlu0 %710
        %714 = vset.pattern.permute.xlu0 0
        %715 = vperm.xlu0 %714, %v491
        %v716 = vpop.permute.xlu0 %715
        %719 = vset.pattern.permute.xlu0 0
        %720 = vperm.xlu0 %719, %v492
        %v721 = vpop.permute.xlu0 %720
        %724 = vset.pattern.permute.xlu0 0
        %725 = vperm.xlu0 %724, %v493
        %v726 = vpop.permute.xlu0 %725
        %729 = vset.pattern.permute.xlu0 0
        %730 = vperm.xlu0 %729, %v494
        %v731 = vpop.permute.xlu0 %730
        %734 = vset.pattern.permute.xlu0 0
        %735 = vperm.xlu0 %734, %v495
        %v736 = vpop.permute.xlu0 %735
        %739 = vset.pattern.permute.xlu0 0
        %740 = vperm.xlu0 %739, %v496
        %v741 = vpop.permute.xlu0 %740
        %744 = vset.pattern.permute.xlu0 0
        %745 = vperm.xlu0 %744, %v497
        %v746 = vpop.permute.xlu0 %745
        %749 = vset.pattern.permute.xlu0 0
        %750 = vperm.xlu0 %749, %v498
        %v751 = vpop.permute.xlu0 %750
        %754 = vset.pattern.permute.xlu0 0
        %755 = vperm.xlu0 %754, %v499
        %v756 = vpop.permute.xlu0 %755
        %759 = vset.pattern.permute.xlu0 0
        %760 = vperm.xlu0 %759, %v500
        %v761 = vpop.permute.xlu0 %760
        %764 = vset.pattern.permute.xlu0 0
        %765 = vperm.xlu0 %764, %v501
        %v766 = vpop.permute.xlu0 %765
        %769 = vset.pattern.permute.xlu0 0
        %770 = vperm.xlu0 %769, %v502
        %v771 = vpop.permute.xlu0 %770
        %774 = vset.pattern.permute.xlu0 0
        %775 = vperm.xlu0 %774, %v503
        %v776 = vpop.permute.xlu0 %775
        %779 = vset.pattern.permute.xlu0 0
        %780 = vperm.xlu0 %779, %v504
        %v781 = vpop.permute.xlu0 %780
        %784 = vset.pattern.permute.xlu0 0
        %785 = vperm.xlu0 %784, %v505
        %v786 = vpop.permute.xlu0 %785
        %789 = vset.pattern.permute.xlu0 0
        %790 = vperm.xlu0 %789, %v506
        %v791 = vpop.permute.xlu0 %790
        %794 = vset.pattern.permute.xlu0 0
        %795 = vperm.xlu0 %794, %v507
        %v796 = vpop.permute.xlu0 %795
        %799 = vset.pattern.permute.xlu0 0
        %800 = vperm.xlu0 %799, %v508
        %v801 = vpop.permute.xlu0 %800
        %804 = vset.pattern.permute.xlu0 0
        %805 = vperm.xlu0 %804, %v509
        %v806 = vpop.permute.xlu0 %805
        %809 = vset.pattern.permute.xlu0 0
        %810 = vperm.xlu0 %809, %v510
        %v811 = vpop.permute.xlu0 %810
        %814 = vset.pattern.permute.xlu0 0
        %815 = vperm.xlu0 %814, %v511
        %v816 = vpop.permute.xlu0 %815
        %819 = vset.pattern.permute.xlu0 0
        %820 = vperm.xlu0 %819, %v512
        %v821 = vpop.permute.xlu0 %820
        %824 = vset.pattern.permute.xlu0 0
        %825 = vperm.xlu0 %824, %v513
        %v826 = vpop.permute.xlu0 %825
        %829 = vset.pattern.permute.xlu0 0
        %830 = vperm.xlu0 %829, %v514
        %v831 = vpop.permute.xlu0 %830
        %834 = vset.pattern.permute.xlu0 0
        %835 = vperm.xlu0 %834, %v515
        %v836 = vpop.permute.xlu0 %835
        %v838 = vlaneseq
        %v839 = vshrl.u32 %v838, 7
        %v840 = vsub.s32 0, %v839
        %v841 = vrot.slane %v517, %v840
        %v842 = vmul.f32 %v521, %v841
        %v843 = vmul.f32 %v526, %v841
        %v844 = vmul.f32 %v531, %v841
        %v845 = vmul.f32 %v536, %v841
        %v846 = vmul.f32 %v541, %v841
        %v847 = vmul.f32 %v546, %v841
        %v848 = vmul.f32 %v551, %v841
        %v849 = vmul.f32 %v556, %v841
        %v850 = vmul.f32 %v561, %v841
        %v851 = vmul.f32 %v566, %v841
        %v852 = vmul.f32 %v571, %v841
        %v853 = vmul.f32 %v576, %v841
        %v854 = vmul.f32 %v581, %v841
        %v855 = vmul.f32 %v586, %v841
        %v856 = vmul.f32 %v591, %v841
        %v857 = vmul.f32 %v596, %v841
        %v858 = vmul.f32 %v601, %v841
        %v859 = vmul.f32 %v606, %v841
        %v860 = vmul.f32 %v611, %v841
        %v861 = vmul.f32 %v616, %v841
        %v862 = vmul.f32 %v621, %v841
        %v863 = vmul.f32 %v626, %v841
        %v864 = vmul.f32 %v631, %v841
        %v865 = vmul.f32 %v636, %v841
        %v866 = vmul.f32 %v641, %v841
        %v867 = vmul.f32 %v646, %v841
        %v868 = vmul.f32 %v651, %v841
        %v869 = vmul.f32 %v656, %v841
        %v870 = vmul.f32 %v661, %v841
        %v871 = vmul.f32 %v666, %v841
        %v872 = vmul.f32 %v671, %v841
        %v873 = vmul.f32 %v676, %v841
        %v874 = vmul.f32 %v681, %v841
        %v875 = vmul.f32 %v686, %v841
        %v876 = vmul.f32 %v691, %v841
        %v877 = vmul.f32 %v696, %v841
        %v878 = vmul.f32 %v701, %v841
        %v879 = vmul.f32 %v706, %v841
        %v880 = vmul.f32 %v711, %v841
        %v881 = vmul.f32 %v716, %v841
        %v882 = vmul.f32 %v721, %v841
        %v883 = vmul.f32 %v726, %v841
        %v884 = vmul.f32 %v731, %v841
        %v885 = vmul.f32 %v736, %v841
        %v886 = vmul.f32 %v741, %v841
        %v887 = vmul.f32 %v746, %v841
        %v888 = vmul.f32 %v751, %v841
        %v889 = vmul.f32 %v756, %v841
        %v890 = vmul.f32 %v761, %v841
        %v891 = vmul.f32 %v766, %v841
        %v892 = vmul.f32 %v771, %v841
        %v893 = vmul.f32 %v776, %v841
        %v894 = vmul.f32 %v781, %v841
        %v895 = vmul.f32 %v786, %v841
        %v896 = vmul.f32 %v791, %v841
        %v897 = vmul.f32 %v796, %v841
        %v898 = vmul.f32 %v801, %v841
        %v899 = vmul.f32 %v806, %v841
        %v900 = vmul.f32 %v811, %v841
        %v901 = vmul.f32 %v816, %v841
        %v902 = vmul.f32 %v821, %v841
        %v903 = vmul.f32 %v826, %v841
        %v904 = vmul.f32 %v831, %v841
        %v905 = vmul.f32 %v836, %v841
        %906 = vset.pattern.permute.xlu0 1
        %907 = vperm.xlu0 %906, %v452
        %v908 = vpop.permute.xlu0 %907
        %910 = vset.pattern.permute.xlu0 1
        %911 = vperm.xlu0 %910, %v453
        %v912 = vpop.permute.xlu0 %911
        %914 = vset.pattern.permute.xlu0 1
        %915 = vperm.xlu0 %914, %v454
        %v916 = vpop.permute.xlu0 %915
        %918 = vset.pattern.permute.xlu0 1
        %919 = vperm.xlu0 %918, %v455
        %v920 = vpop.permute.xlu0 %919
        %922 = vset.pattern.permute.xlu0 1
        %923 = vperm.xlu0 %922, %v456
        %v924 = vpop.permute.xlu0 %923
        %926 = vset.pattern.permute.xlu0 1
        %927 = vperm.xlu0 %926, %v457
        %v928 = vpop.permute.xlu0 %927
        %930 = vset.pattern.permute.xlu0 1
        %931 = vperm.xlu0 %930, %v458
        %v932 = vpop.permute.xlu0 %931
        %934 = vset.pattern.permute.xlu0 1
        %935 = vperm.xlu0 %934, %v459
        %v936 = vpop.permute.xlu0 %935
        %938 = vset.pattern.permute.xlu0 1
        %939 = vperm.xlu0 %938, %v460
        %v940 = vpop.permute.xlu0 %939
        %942 = vset.pattern.permute.xlu0 1
        %943 = vperm.xlu0 %942, %v461
        %v944 = vpop.permute.xlu0 %943
        %946 = vset.pattern.permute.xlu0 1
        %947 = vperm.xlu0 %946, %v462
        %v948 = vpop.permute.xlu0 %947
        %950 = vset.pattern.permute.xlu0 1
        %951 = vperm.xlu0 %950, %v463
        %v952 = vpop.permute.xlu0 %951
        %954 = vset.pattern.permute.xlu0 1
        %955 = vperm.xlu0 %954, %v464
        %v956 = vpop.permute.xlu0 %955
        %958 = vset.pattern.permute.xlu0 1
        %959 = vperm.xlu0 %958, %v465
        %v960 = vpop.permute.xlu0 %959
        %962 = vset.pattern.permute.xlu0 1
        %963 = vperm.xlu0 %962, %v466
        %v964 = vpop.permute.xlu0 %963
        %966 = vset.pattern.permute.xlu0 1
        %967 = vperm.xlu0 %966, %v467
        %v968 = vpop.permute.xlu0 %967
        %970 = vset.pattern.permute.xlu0 1
        %971 = vperm.xlu0 %970, %v468
        %v972 = vpop.permute.xlu0 %971
        %974 = vset.pattern.permute.xlu0 1
        %975 = vperm.xlu0 %974, %v469
        %v976 = vpop.permute.xlu0 %975
        %978 = vset.pattern.permute.xlu0 1
        %979 = vperm.xlu0 %978, %v470
        %v980 = vpop.permute.xlu0 %979
        %982 = vset.pattern.permute.xlu0 1
        %983 = vperm.xlu0 %982, %v471
        %v984 = vpop.permute.xlu0 %983
        %986 = vset.pattern.permute.xlu0 1
        %987 = vperm.xlu0 %986, %v472
        %v988 = vpop.permute.xlu0 %987
        %990 = vset.pattern.permute.xlu0 1
        %991 = vperm.xlu0 %990, %v473
        %v992 = vpop.permute.xlu0 %991
        %994 = vset.pattern.permute.xlu0 1
        %995 = vperm.xlu0 %994, %v474
        %v996 = vpop.permute.xlu0 %995
        %998 = vset.pattern.permute.xlu0 1
        %999 = vperm.xlu0 %998, %v475
        %v1000 = vpop.permute.xlu0 %999
        %1002 = vset.pattern.permute.xlu0 1
        %1003 = vperm.xlu0 %1002, %v476
        %v1004 = vpop.permute.xlu0 %1003
        %1006 = vset.pattern.permute.xlu0 1
        %1007 = vperm.xlu0 %1006, %v477
        %v1008 = vpop.permute.xlu0 %1007
        %1010 = vset.pattern.permute.xlu0 1
        %1011 = vperm.xlu0 %1010, %v478
        %v1012 = vpop.permute.xlu0 %1011
        %1014 = vset.pattern.permute.xlu0 1
        %1015 = vperm.xlu0 %1014, %v479
        %v1016 = vpop.permute.xlu0 %1015
        %1018 = vset.pattern.permute.xlu0 1
        %1019 = vperm.xlu0 %1018, %v480
        %v1020 = vpop.permute.xlu0 %1019
        %1022 = vset.pattern.permute.xlu0 1
        %1023 = vperm.xlu0 %1022, %v481
        %v1024 = vpop.permute.xlu0 %1023
        %1026 = vset.pattern.permute.xlu0 1
        %1027 = vperm.xlu0 %1026, %v482
        %v1028 = vpop.permute.xlu0 %1027
        %1030 = vset.pattern.permute.xlu0 1
        %1031 = vperm.xlu0 %1030, %v483
        %v1032 = vpop.permute.xlu0 %1031
        %1034 = vset.pattern.permute.xlu0 1
        %1035 = vperm.xlu0 %1034, %v484
        %v1036 = vpop.permute.xlu0 %1035
        %1038 = vset.pattern.permute.xlu0 1
        %1039 = vperm.xlu0 %1038, %v485
        %v1040 = vpop.permute.xlu0 %1039
        %1042 = vset.pattern.permute.xlu0 1
        %1043 = vperm.xlu0 %1042, %v486
        %v1044 = vpop.permute.xlu0 %1043
        %1046 = vset.pattern.permute.xlu0 1
        %1047 = vperm.xlu0 %1046, %v487
        %v1048 = vpop.permute.xlu0 %1047
        %1050 = vset.pattern.permute.xlu0 1
        %1051 = vperm.xlu0 %1050, %v488
        %v1052 = vpop.permute.xlu0 %1051
        %1054 = vset.pattern.permute.xlu0 1
        %1055 = vperm.xlu0 %1054, %v489
        %v1056 = vpop.permute.xlu0 %1055
        %1058 = vset.pattern.permute.xlu0 1
        %1059 = vperm.xlu0 %1058, %v490
        %v1060 = vpop.permute.xlu0 %1059
        %1062 = vset.pattern.permute.xlu0 1
        %1063 = vperm.xlu0 %1062, %v491
        %v1064 = vpop.permute.xlu0 %1063
        %1066 = vset.pattern.permute.xlu0 1
        %1067 = vperm.xlu0 %1066, %v492
        %v1068 = vpop.permute.xlu0 %1067
        %1070 = vset.pattern.permute.xlu0 1
        %1071 = vperm.xlu0 %1070, %v493
        %v1072 = vpop.permute.xlu0 %1071
        %1074 = vset.pattern.permute.xlu0 1
        %1075 = vperm.xlu0 %1074, %v494
        %v1076 = vpop.permute.xlu0 %1075
        %1078 = vset.pattern.permute.xlu0 1
        %1079 = vperm.xlu0 %1078, %v495
        %v1080 = vpop.permute.xlu0 %1079
        %1082 = vset.pattern.permute.xlu0 1
        %1083 = vperm.xlu0 %1082, %v496
        %v1084 = vpop.permute.xlu0 %1083
        %1086 = vset.pattern.permute.xlu0 1
        %1087 = vperm.xlu0 %1086, %v497
        %v1088 = vpop.permute.xlu0 %1087
        %1090 = vset.pattern.permute.xlu0 1
        %1091 = vperm.xlu0 %1090, %v498
        %v1092 = vpop.permute.xlu0 %1091
        %1094 = vset.pattern.permute.xlu0 1
        %1095 = vperm.xlu0 %1094, %v499
        %v1096 = vpop.permute.xlu0 %1095
        %1098 = vset.pattern.permute.xlu0 1
        %1099 = vperm.xlu0 %1098, %v500
        %v1100 = vpop.permute.xlu0 %1099
        %1102 = vset.pattern.permute.xlu0 1
        %1103 = vperm.xlu0 %1102, %v501
        %v1104 = vpop.permute.xlu0 %1103
        %1106 = vset.pattern.permute.xlu0 1
        %1107 = vperm.xlu0 %1106, %v502
        %v1108 = vpop.permute.xlu0 %1107
        %1110 = vset.pattern.permute.xlu0 1
        %1111 = vperm.xlu0 %1110, %v503
        %v1112 = vpop.permute.xlu0 %1111
        %1114 = vset.pattern.permute.xlu0 1
        %1115 = vperm.xlu0 %1114, %v504
        %v1116 = vpop.permute.xlu0 %1115
        %1118 = vset.pattern.permute.xlu0 1
        %1119 = vperm.xlu0 %1118, %v505
        %v1120 = vpop.permute.xlu0 %1119
        %1122 = vset.pattern.permute.xlu0 1
        %1123 = vperm.xlu0 %1122, %v506
        %v1124 = vpop.permute.xlu0 %1123
        %1126 = vset.pattern.permute.xlu0 1
        %1127 = vperm.xlu0 %1126, %v507
        %v1128 = vpop.permute.xlu0 %1127
        %1130 = vset.pattern.permute.xlu0 1
        %1131 = vperm.xlu0 %1130, %v508
        %v1132 = vpop.permute.xlu0 %1131
        %1134 = vset.pattern.permute.xlu0 1
        %1135 = vperm.xlu0 %1134, %v509
        %v1136 = vpop.permute.xlu0 %1135
        %1138 = vset.pattern.permute.xlu0 1
        %1139 = vperm.xlu0 %1138, %v510
        %v1140 = vpop.permute.xlu0 %1139
        %1142 = vset.pattern.permute.xlu0 1
        %1143 = vperm.xlu0 %1142, %v511
        %v1144 = vpop.permute.xlu0 %1143
        %1146 = vset.pattern.permute.xlu0 1
        %1147 = vperm.xlu0 %1146, %v512
        %v1148 = vpop.permute.xlu0 %1147
        %1150 = vset.pattern.permute.xlu0 1
        %1151 = vperm.xlu0 %1150, %v513
        %v1152 = vpop.permute.xlu0 %1151
        %1154 = vset.pattern.permute.xlu0 1
        %1155 = vperm.xlu0 %1154, %v514
        %v1156 = vpop.permute.xlu0 %1155
        %1158 = vset.pattern.permute.xlu0 1
        %1159 = vperm.xlu0 %1158, %v515
        %v1160 = vpop.permute.xlu0 %1159
        %v1162 = vlaneseq
        %v1163 = vshrl.u32 %v1162, 7
        %v1164 = vsub.s32 1, %v1163
        %v1165 = vrot.slane %v517, %v1164
        %v1166 = vmul.f32 %v908, %v1165
        %v1167 = vmul.f32 %v912, %v1165
        %v1168 = vmul.f32 %v916, %v1165
        %v1169 = vmul.f32 %v920, %v1165
        %v1170 = vmul.f32 %v924, %v1165
        %v1171 = vmul.f32 %v928, %v1165
        %v1172 = vmul.f32 %v932, %v1165
        %v1173 = vmul.f32 %v936, %v1165
        %v1174 = vmul.f32 %v940, %v1165
        %v1175 = vmul.f32 %v944, %v1165
        %v1176 = vmul.f32 %v948, %v1165
        %v1177 = vmul.f32 %v952, %v1165
        %v1178 = vmul.f32 %v956, %v1165
        %v1179 = vmul.f32 %v960, %v1165
        %v1180 = vmul.f32 %v964, %v1165
        %v1181 = vmul.f32 %v968, %v1165
        %v1182 = vmul.f32 %v972, %v1165
        %v1183 = vmul.f32 %v976, %v1165
        %v1184 = vmul.f32 %v980, %v1165
        %v1185 = vmul.f32 %v984, %v1165
        %v1186 = vmul.f32 %v988, %v1165
        %v1187 = vmul.f32 %v992, %v1165
        %v1188 = vmul.f32 %v996, %v1165
        %v1189 = vmul.f32 %v1000, %v1165
        %v1190 = vmul.f32 %v1004, %v1165
        %v1191 = vmul.f32 %v1008, %v1165
        %v1192 = vmul.f32 %v1012, %v1165
        %v1193 = vmul.f32 %v1016, %v1165
        %v1194 = vmul.f32 %v1020, %v1165
        %v1195 = vmul.f32 %v1024, %v1165
        %v1196 = vmul.f32 %v1028, %v1165
        %v1197 = vmul.f32 %v1032, %v1165
        %v1198 = vmul.f32 %v1036, %v1165
        %v1199 = vmul.f32 %v1040, %v1165
        %v1200 = vmul.f32 %v1044, %v1165
        %v1201 = vmul.f32 %v1048, %v1165
        %v1202 = vmul.f32 %v1052, %v1165
        %v1203 = vmul.f32 %v1056, %v1165
        %v1204 = vmul.f32 %v1060, %v1165
        %v1205 = vmul.f32 %v1064, %v1165
        %v1206 = vmul.f32 %v1068, %v1165
        %v1207 = vmul.f32 %v1072, %v1165
        %v1208 = vmul.f32 %v1076, %v1165
        %v1209 = vmul.f32 %v1080, %v1165
        %v1210 = vmul.f32 %v1084, %v1165
        %v1211 = vmul.f32 %v1088, %v1165
        %v1212 = vmul.f32 %v1092, %v1165
        %v1213 = vmul.f32 %v1096, %v1165
        %v1214 = vmul.f32 %v1100, %v1165
        %v1215 = vmul.f32 %v1104, %v1165
        %v1216 = vmul.f32 %v1108, %v1165
        %v1217 = vmul.f32 %v1112, %v1165
        %v1218 = vmul.f32 %v1116, %v1165
        %v1219 = vmul.f32 %v1120, %v1165
        %v1220 = vmul.f32 %v1124, %v1165
        %v1221 = vmul.f32 %v1128, %v1165
        %v1222 = vmul.f32 %v1132, %v1165
        %v1223 = vmul.f32 %v1136, %v1165
        %v1224 = vmul.f32 %v1140, %v1165
        %v1225 = vmul.f32 %v1144, %v1165
        %v1226 = vmul.f32 %v1148, %v1165
        %v1227 = vmul.f32 %v1152, %v1165
        %v1228 = vmul.f32 %v1156, %v1165
        %v1229 = vmul.f32 %v1160, %v1165
        %v1230 = vadd.f32 %v842, %v1166
        %v1231 = vadd.f32 %v843, %v1167
        %v1232 = vadd.f32 %v844, %v1168
        %v1233 = vadd.f32 %v845, %v1169
        %v1234 = vadd.f32 %v846, %v1170
        %v1235 = vadd.f32 %v847, %v1171
        %v1236 = vadd.f32 %v848, %v1172
        %v1237 = vadd.f32 %v849, %v1173
        %v1238 = vadd.f32 %v850, %v1174
        %v1239 = vadd.f32 %v851, %v1175
        %v1240 = vadd.f32 %v852, %v1176
        %v1241 = vadd.f32 %v853, %v1177
        %v1242 = vadd.f32 %v854, %v1178
        %v1243 = vadd.f32 %v855, %v1179
        %v1244 = vadd.f32 %v856, %v1180
        %v1245 = vadd.f32 %v857, %v1181
        %v1246 = vadd.f32 %v858, %v1182
        %v1247 = vadd.f32 %v859, %v1183
        %v1248 = vadd.f32 %v860, %v1184
        %v1249 = vadd.f32 %v861, %v1185
        %v1250 = vadd.f32 %v862, %v1186
        %v1251 = vadd.f32 %v863, %v1187
        %v1252 = vadd.f32 %v864, %v1188
        %v1253 = vadd.f32 %v865, %v1189
        %v1254 = vadd.f32 %v866, %v1190
        %v1255 = vadd.f32 %v867, %v1191
        %v1256 = vadd.f32 %v868, %v1192
        %v1257 = vadd.f32 %v869, %v1193
        %v1258 = vadd.f32 %v870, %v1194
        %v1259 = vadd.f32 %v871, %v1195
        %v1260 = vadd.f32 %v872, %v1196
        %v1261 = vadd.f32 %v873, %v1197
        %v1262 = vadd.f32 %v874, %v1198
        %v1263 = vadd.f32 %v875, %v1199
        %v1264 = vadd.f32 %v876, %v1200
        %v1265 = vadd.f32 %v877, %v1201
        %v1266 = vadd.f32 %v878, %v1202
        %v1267 = vadd.f32 %v879, %v1203
        %v1268 = vadd.f32 %v880, %v1204
        %v1269 = vadd.f32 %v881, %v1205
        %v1270 = vadd.f32 %v882, %v1206
        %v1271 = vadd.f32 %v883, %v1207
        %v1272 = vadd.f32 %v884, %v1208
        %v1273 = vadd.f32 %v885, %v1209
        %v1274 = vadd.f32 %v886, %v1210
        %v1275 = vadd.f32 %v887, %v1211
        %v1276 = vadd.f32 %v888, %v1212
        %v1277 = vadd.f32 %v889, %v1213
        %v1278 = vadd.f32 %v890, %v1214
        %v1279 = vadd.f32 %v891, %v1215
        %v1280 = vadd.f32 %v892, %v1216
        %v1281 = vadd.f32 %v893, %v1217
        %v1282 = vadd.f32 %v894, %v1218
        %v1283 = vadd.f32 %v895, %v1219
        %v1284 = vadd.f32 %v896, %v1220
        %v1285 = vadd.f32 %v897, %v1221
        %v1286 = vadd.f32 %v898, %v1222
        %v1287 = vadd.f32 %v899, %v1223
        %v1288 = vadd.f32 %v900, %v1224
        %v1289 = vadd.f32 %v901, %v1225
        %v1290 = vadd.f32 %v902, %v1226
        %v1291 = vadd.f32 %v903, %v1227
        %v1292 = vadd.f32 %v904, %v1228
        %v1293 = vadd.f32 %v905, %v1229
        %1294 = vset.pattern.permute.xlu0 2
        %1295 = vperm.xlu0 %1294, %v452
        %v1296 = vpop.permute.xlu0 %1295
        %1298 = vset.pattern.permute.xlu0 2
        %1299 = vperm.xlu0 %1298, %v453
        %v1300 = vpop.permute.xlu0 %1299
        %1302 = vset.pattern.permute.xlu0 2
        %1303 = vperm.xlu0 %1302, %v454
        %v1304 = vpop.permute.xlu0 %1303
        %1306 = vset.pattern.permute.xlu0 2
        %1307 = vperm.xlu0 %1306, %v455
        %v1308 = vpop.permute.xlu0 %1307
        %1310 = vset.pattern.permute.xlu0 2
        %1311 = vperm.xlu0 %1310, %v456
        %v1312 = vpop.permute.xlu0 %1311
        %1314 = vset.pattern.permute.xlu0 2
        %1315 = vperm.xlu0 %1314, %v457
        %v1316 = vpop.permute.xlu0 %1315
        %1318 = vset.pattern.permute.xlu0 2
        %1319 = vperm.xlu0 %1318, %v458
        %v1320 = vpop.permute.xlu0 %1319
        %1322 = vset.pattern.permute.xlu0 2
        %1323 = vperm.xlu0 %1322, %v459
        %v1324 = vpop.permute.xlu0 %1323
        %1326 = vset.pattern.permute.xlu0 2
        %1327 = vperm.xlu0 %1326, %v460
        %v1328 = vpop.permute.xlu0 %1327
        %1330 = vset.pattern.permute.xlu0 2
        %1331 = vperm.xlu0 %1330, %v461
        %v1332 = vpop.permute.xlu0 %1331
        %1334 = vset.pattern.permute.xlu0 2
        %1335 = vperm.xlu0 %1334, %v462
        %v1336 = vpop.permute.xlu0 %1335
        %1338 = vset.pattern.permute.xlu0 2
        %1339 = vperm.xlu0 %1338, %v463
        %v1340 = vpop.permute.xlu0 %1339
        %1342 = vset.pattern.permute.xlu0 2
        %1343 = vperm.xlu0 %1342, %v464
        %v1344 = vpop.permute.xlu0 %1343
        %1346 = vset.pattern.permute.xlu0 2
        %1347 = vperm.xlu0 %1346, %v465
        %v1348 = vpop.permute.xlu0 %1347
        %1350 = vset.pattern.permute.xlu0 2
        %1351 = vperm.xlu0 %1350, %v466
        %v1352 = vpop.permute.xlu0 %1351
        %1354 = vset.pattern.permute.xlu0 2
        %1355 = vperm.xlu0 %1354, %v467
        %v1356 = vpop.permute.xlu0 %1355
        %1358 = vset.pattern.permute.xlu0 2
        %1359 = vperm.xlu0 %1358, %v468
        %v1360 = vpop.permute.xlu0 %1359
        %1362 = vset.pattern.permute.xlu0 2
        %1363 = vperm.xlu0 %1362, %v469
        %v1364 = vpop.permute.xlu0 %1363
        %1366 = vset.pattern.permute.xlu0 2
        %1367 = vperm.xlu0 %1366, %v470
        %v1368 = vpop.permute.xlu0 %1367
        %1370 = vset.pattern.permute.xlu0 2
        %1371 = vperm.xlu0 %1370, %v471
        %v1372 = vpop.permute.xlu0 %1371
        %1374 = vset.pattern.permute.xlu0 2
        %1375 = vperm.xlu0 %1374, %v472
        %v1376 = vpop.permute.xlu0 %1375
        %1378 = vset.pattern.permute.xlu0 2
        %1379 = vperm.xlu0 %1378, %v473
        %v1380 = vpop.permute.xlu0 %1379
        %1382 = vset.pattern.permute.xlu0 2
        %1383 = vperm.xlu0 %1382, %v474
        %v1384 = vpop.permute.xlu0 %1383
        %1386 = vset.pattern.permute.xlu0 2
        %1387 = vperm.xlu0 %1386, %v475
        %v1388 = vpop.permute.xlu0 %1387
        %1390 = vset.pattern.permute.xlu0 2
        %1391 = vperm.xlu0 %1390, %v476
        %v1392 = vpop.permute.xlu0 %1391
        %1394 = vset.pattern.permute.xlu0 2
        %1395 = vperm.xlu0 %1394, %v477
        %v1396 = vpop.permute.xlu0 %1395
        %1398 = vset.pattern.permute.xlu0 2
        %1399 = vperm.xlu0 %1398, %v478
        %v1400 = vpop.permute.xlu0 %1399
        %1402 = vset.pattern.permute.xlu0 2
        %1403 = vperm.xlu0 %1402, %v479
        %v1404 = vpop.permute.xlu0 %1403
        %1406 = vset.pattern.permute.xlu0 2
        %1407 = vperm.xlu0 %1406, %v480
        %v1408 = vpop.permute.xlu0 %1407
        %1410 = vset.pattern.permute.xlu0 2
        %1411 = vperm.xlu0 %1410, %v481
        %v1412 = vpop.permute.xlu0 %1411
        %1414 = vset.pattern.permute.xlu0 2
        %1415 = vperm.xlu0 %1414, %v482
        %v1416 = vpop.permute.xlu0 %1415
        %1418 = vset.pattern.permute.xlu0 2
        %1419 = vperm.xlu0 %1418, %v483
        %v1420 = vpop.permute.xlu0 %1419
        %1422 = vset.pattern.permute.xlu0 2
        %1423 = vperm.xlu0 %1422, %v484
        %v1424 = vpop.permute.xlu0 %1423
        %1426 = vset.pattern.permute.xlu0 2
        %1427 = vperm.xlu0 %1426, %v485
        %v1428 = vpop.permute.xlu0 %1427
        %1430 = vset.pattern.permute.xlu0 2
        %1431 = vperm.xlu0 %1430, %v486
        %v1432 = vpop.permute.xlu0 %1431
        %1434 = vset.pattern.permute.xlu0 2
        %1435 = vperm.xlu0 %1434, %v487
        %v1436 = vpop.permute.xlu0 %1435
        %1438 = vset.pattern.permute.xlu0 2
        %1439 = vperm.xlu0 %1438, %v488
        %v1440 = vpop.permute.xlu0 %1439
        %1442 = vset.pattern.permute.xlu0 2
        %1443 = vperm.xlu0 %1442, %v489
        %v1444 = vpop.permute.xlu0 %1443
        %1446 = vset.pattern.permute.xlu0 2
        %1447 = vperm.xlu0 %1446, %v490
        %v1448 = vpop.permute.xlu0 %1447
        %1450 = vset.pattern.permute.xlu0 2
        %1451 = vperm.xlu0 %1450, %v491
        %v1452 = vpop.permute.xlu0 %1451
        %1454 = vset.pattern.permute.xlu0 2
        %1455 = vperm.xlu0 %1454, %v492
        %v1456 = vpop.permute.xlu0 %1455
        %1458 = vset.pattern.permute.xlu0 2
        %1459 = vperm.xlu0 %1458, %v493
        %v1460 = vpop.permute.xlu0 %1459
        %1462 = vset.pattern.permute.xlu0 2
        %1463 = vperm.xlu0 %1462, %v494
        %v1464 = vpop.permute.xlu0 %1463
        %1466 = vset.pattern.permute.xlu0 2
        %1467 = vperm.xlu0 %1466, %v495
        %v1468 = vpop.permute.xlu0 %1467
        %1470 = vset.pattern.permute.xlu0 2
        %1471 = vperm.xlu0 %1470, %v496
        %v1472 = vpop.permute.xlu0 %1471
        %1474 = vset.pattern.permute.xlu0 2
        %1475 = vperm.xlu0 %1474, %v497
        %v1476 = vpop.permute.xlu0 %1475
        %1478 = vset.pattern.permute.xlu0 2
        %1479 = vperm.xlu0 %1478, %v498
        %v1480 = vpop.permute.xlu0 %1479
        %1482 = vset.pattern.permute.xlu0 2
        %1483 = vperm.xlu0 %1482, %v499
        %v1484 = vpop.permute.xlu0 %1483
        %1486 = vset.pattern.permute.xlu0 2
        %1487 = vperm.xlu0 %1486, %v500
        %v1488 = vpop.permute.xlu0 %1487
        %1490 = vset.pattern.permute.xlu0 2
        %1491 = vperm.xlu0 %1490, %v501
        %v1492 = vpop.permute.xlu0 %1491
        %1494 = vset.pattern.permute.xlu0 2
        %1495 = vperm.xlu0 %1494, %v502
        %v1496 = vpop.permute.xlu0 %1495
        %1498 = vset.pattern.permute.xlu0 2
        %1499 = vperm.xlu0 %1498, %v503
        %v1500 = vpop.permute.xlu0 %1499
        %1502 = vset.pattern.permute.xlu0 2
        %1503 = vperm.xlu0 %1502, %v504
        %v1504 = vpop.permute.xlu0 %1503
        %1506 = vset.pattern.permute.xlu0 2
        %1507 = vperm.xlu0 %1506, %v505
        %v1508 = vpop.permute.xlu0 %1507
        %1510 = vset.pattern.permute.xlu0 2
        %1511 = vperm.xlu0 %1510, %v506
        %v1512 = vpop.permute.xlu0 %1511
        %1514 = vset.pattern.permute.xlu0 2
        %1515 = vperm.xlu0 %1514, %v507
        %v1516 = vpop.permute.xlu0 %1515
        %1518 = vset.pattern.permute.xlu0 2
        %1519 = vperm.xlu0 %1518, %v508
        %v1520 = vpop.permute.xlu0 %1519
        %1522 = vset.pattern.permute.xlu0 2
        %1523 = vperm.xlu0 %1522, %v509
        %v1524 = vpop.permute.xlu0 %1523
        %1526 = vset.pattern.permute.xlu0 2
        %1527 = vperm.xlu0 %1526, %v510
        %v1528 = vpop.permute.xlu0 %1527
        %1530 = vset.pattern.permute.xlu0 2
        %1531 = vperm.xlu0 %1530, %v511
        %v1532 = vpop.permute.xlu0 %1531
        %1534 = vset.pattern.permute.xlu0 2
        %1535 = vperm.xlu0 %1534, %v512
        %v1536 = vpop.permute.xlu0 %1535
        %1538 = vset.pattern.permute.xlu0 2
        %1539 = vperm.xlu0 %1538, %v513
        %v1540 = vpop.permute.xlu0 %1539
        %1542 = vset.pattern.permute.xlu0 2
        %1543 = vperm.xlu0 %1542, %v514
        %v1544 = vpop.permute.xlu0 %1543
        %1546 = vset.pattern.permute.xlu0 2
        %1547 = vperm.xlu0 %1546, %v515
        %v1548 = vpop.permute.xlu0 %1547
        %v1550 = vlaneseq
        %v1551 = vshrl.u32 %v1550, 7
        %v1552 = vsub.s32 2, %v1551
        %v1553 = vrot.slane %v517, %v1552
        %v1554 = vmul.f32 %v1296, %v1553
        %v1555 = vmul.f32 %v1300, %v1553
        %v1556 = vmul.f32 %v1304, %v1553
        %v1557 = vmul.f32 %v1308, %v1553
        %v1558 = vmul.f32 %v1312, %v1553
        %v1559 = vmul.f32 %v1316, %v1553
        %v1560 = vmul.f32 %v1320, %v1553
        %v1561 = vmul.f32 %v1324, %v1553
        %v1562 = vmul.f32 %v1328, %v1553
        %v1563 = vmul.f32 %v1332, %v1553
        %v1564 = vmul.f32 %v1336, %v1553
        %v1565 = vmul.f32 %v1340, %v1553
        %v1566 = vmul.f32 %v1344, %v1553
        %v1567 = vmul.f32 %v1348, %v1553
        %v1568 = vmul.f32 %v1352, %v1553
        %v1569 = vmul.f32 %v1356, %v1553
        %v1570 = vmul.f32 %v1360, %v1553
        %v1571 = vmul.f32 %v1364, %v1553
        %v1572 = vmul.f32 %v1368, %v1553
        %v1573 = vmul.f32 %v1372, %v1553
        %v1574 = vmul.f32 %v1376, %v1553
        %v1575 = vmul.f32 %v1380, %v1553
        %v1576 = vmul.f32 %v1384, %v1553
        %v1577 = vmul.f32 %v1388, %v1553
        %v1578 = vmul.f32 %v1392, %v1553
        %v1579 = vmul.f32 %v1396, %v1553
        %v1580 = vmul.f32 %v1400, %v1553
        %v1581 = vmul.f32 %v1404, %v1553
        %v1582 = vmul.f32 %v1408, %v1553
        %v1583 = vmul.f32 %v1412, %v1553
        %v1584 = vmul.f32 %v1416, %v1553
        %v1585 = vmul.f32 %v1420, %v1553
        %v1586 = vmul.f32 %v1424, %v1553
        %v1587 = vmul.f32 %v1428, %v1553
        %v1588 = vmul.f32 %v1432, %v1553
        %v1589 = vmul.f32 %v1436, %v1553
        %v1590 = vmul.f32 %v1440, %v1553
        %v1591 = vmul.f32 %v1444, %v1553
        %v1592 = vmul.f32 %v1448, %v1553
        %v1593 = vmul.f32 %v1452, %v1553
        %v1594 = vmul.f32 %v1456, %v1553
        %v1595 = vmul.f32 %v1460, %v1553
        %v1596 = vmul.f32 %v1464, %v1553
        %v1597 = vmul.f32 %v1468, %v1553
        %v1598 = vmul.f32 %v1472, %v1553
        %v1599 = vmul.f32 %v1476, %v1553
        %v1600 = vmul.f32 %v1480, %v1553
        %v1601 = vmul.f32 %v1484, %v1553
        %v1602 = vmul.f32 %v1488, %v1553
        %v1603 = vmul.f32 %v1492, %v1553
        %v1604 = vmul.f32 %v1496, %v1553
        %v1605 = vmul.f32 %v1500, %v1553
        %v1606 = vmul.f32 %v1504, %v1553
        %v1607 = vmul.f32 %v1508, %v1553
        %v1608 = vmul.f32 %v1512, %v1553
        %v1609 = vmul.f32 %v1516, %v1553
        %v1610 = vmul.f32 %v1520, %v1553
        %v1611 = vmul.f32 %v1524, %v1553
        %v1612 = vmul.f32 %v1528, %v1553
        %v1613 = vmul.f32 %v1532, %v1553
        %v1614 = vmul.f32 %v1536, %v1553
        %v1615 = vmul.f32 %v1540, %v1553
        %v1616 = vmul.f32 %v1544, %v1553
        %v1617 = vmul.f32 %v1548, %v1553
        %v1618 = vadd.f32 %v1230, %v1554
        %v1619 = vadd.f32 %v1231, %v1555
        %v1620 = vadd.f32 %v1232, %v1556
        %v1621 = vadd.f32 %v1233, %v1557
        %v1622 = vadd.f32 %v1234, %v1558
        %v1623 = vadd.f32 %v1235, %v1559
        %v1624 = vadd.f32 %v1236, %v1560
        %v1625 = vadd.f32 %v1237, %v1561
        %v1626 = vadd.f32 %v1238, %v1562
        %v1627 = vadd.f32 %v1239, %v1563
        %v1628 = vadd.f32 %v1240, %v1564
        %v1629 = vadd.f32 %v1241, %v1565
        %v1630 = vadd.f32 %v1242, %v1566
        %v1631 = vadd.f32 %v1243, %v1567
        %v1632 = vadd.f32 %v1244, %v1568
        %v1633 = vadd.f32 %v1245, %v1569
        %v1634 = vadd.f32 %v1246, %v1570
        %v1635 = vadd.f32 %v1247, %v1571
        %v1636 = vadd.f32 %v1248, %v1572
        %v1637 = vadd.f32 %v1249, %v1573
        %v1638 = vadd.f32 %v1250, %v1574
        %v1639 = vadd.f32 %v1251, %v1575
        %v1640 = vadd.f32 %v1252, %v1576
        %v1641 = vadd.f32 %v1253, %v1577
        %v1642 = vadd.f32 %v1254, %v1578
        %v1643 = vadd.f32 %v1255, %v1579
        %v1644 = vadd.f32 %v1256, %v1580
        %v1645 = vadd.f32 %v1257, %v1581
        %v1646 = vadd.f32 %v1258, %v1582
        %v1647 = vadd.f32 %v1259, %v1583
        %v1648 = vadd.f32 %v1260, %v1584
        %v1649 = vadd.f32 %v1261, %v1585
        %v1650 = vadd.f32 %v1262, %v1586
        %v1651 = vadd.f32 %v1263, %v1587
        %v1652 = vadd.f32 %v1264, %v1588
        %v1653 = vadd.f32 %v1265, %v1589
        %v1654 = vadd.f32 %v1266, %v1590
        %v1655 = vadd.f32 %v1267, %v1591
        %v1656 = vadd.f32 %v1268, %v1592
        %v1657 = vadd.f32 %v1269, %v1593
        %v1658 = vadd.f32 %v1270, %v1594
        %v1659 = vadd.f32 %v1271, %v1595
        %v1660 = vadd.f32 %v1272, %v1596
        %v1661 = vadd.f32 %v1273, %v1597
        %v1662 = vadd.f32 %v1274, %v1598
        %v1663 = vadd.f32 %v1275, %v1599
        %v1664 = vadd.f32 %v1276, %v1600
        %v1665 = vadd.f32 %v1277, %v1601
        %v1666 = vadd.f32 %v1278, %v1602
        %v1667 = vadd.f32 %v1279, %v1603
        %v1668 = vadd.f32 %v1280, %v1604
        %v1669 = vadd.f32 %v1281, %v1605
        %v1670 = vadd.f32 %v1282, %v1606
        %v1671 = vadd.f32 %v1283, %v1607
        %v1672 = vadd.f32 %v1284, %v1608
        %v1673 = vadd.f32 %v1285, %v1609
        %v1674 = vadd.f32 %v1286, %v1610
        %v1675 = vadd.f32 %v1287, %v1611
        %v1676 = vadd.f32 %v1288, %v1612
        %v1677 = vadd.f32 %v1289, %v1613
        %v1678 = vadd.f32 %v1290, %v1614
        %v1679 = vadd.f32 %v1291, %v1615
        %v1680 = vadd.f32 %v1292, %v1616
        %v1681 = vadd.f32 %v1293, %v1617
        %v1682 = vld [vmem:[%s2] sm:$0x1]
        %v1684 = vlaneseq
        %v1685 = vshrl.u32 %v1684, 7
        %v1686 = vsub.s32 0, %v1685
        %v1687 = vrot.slane %v1682, %v1686
        %v1689 = vadd.f32 %v1618, %v1687
        %v1690 = vadd.f32 %v1619, %v1687
        %v1691 = vadd.f32 %v1620, %v1687
        %v1692 = vadd.f32 %v1621, %v1687
        %v1693 = vadd.f32 %v1622, %v1687
        %v1694 = vadd.f32 %v1623, %v1687
        %v1695 = vadd.f32 %v1624, %v1687
        %v1696 = vadd.f32 %v1625, %v1687
        %v1697 = vadd.f32 %v1626, %v1687
        %v1698 = vadd.f32 %v1627, %v1687
        %v1699 = vadd.f32 %v1628, %v1687
        %v1700 = vadd.f32 %v1629, %v1687
        %v1701 = vadd.f32 %v1630, %v1687
        %v1702 = vadd.f32 %v1631, %v1687
        %v1703 = vadd.f32 %v1632, %v1687
        %v1704 = vadd.f32 %v1633, %v1687
        %v1705 = vadd.f32 %v1634, %v1687
        %v1706 = vadd.f32 %v1635, %v1687
        %v1707 = vadd.f32 %v1636, %v1687
        %v1708 = vadd.f32 %v1637, %v1687
        %v1709 = vadd.f32 %v1638, %v1687
        %v1710 = vadd.f32 %v1639, %v1687
        %v1711 = vadd.f32 %v1640, %v1687
        %v1712 = vadd.f32 %v1641, %v1687
        %v1713 = vadd.f32 %v1642, %v1687
        %v1714 = vadd.f32 %v1643, %v1687
        %v1715 = vadd.f32 %v1644, %v1687
        %v1716 = vadd.f32 %v1645, %v1687
        %v1717 = vadd.f32 %v1646, %v1687
        %v1718 = vadd.f32 %v1647, %v1687
        %v1719 = vadd.f32 %v1648, %v1687
        %v1720 = vadd.f32 %v1649, %v1687
        %v1721 = vadd.f32 %v1650, %v1687
        %v1722 = vadd.f32 %v1651, %v1687
        %v1723 = vadd.f32 %v1652, %v1687
        %v1724 = vadd.f32 %v1653, %v1687
        %v1725 = vadd.f32 %v1654, %v1687
        %v1726 = vadd.f32 %v1655, %v1687
        %v1727 = vadd.f32 %v1656, %v1687
        %v1728 = vadd.f32 %v1657, %v1687
        %v1729 = vadd.f32 %v1658, %v1687
        %v1730 = vadd.f32 %v1659, %v1687
        %v1731 = vadd.f32 %v1660, %v1687
        %v1732 = vadd.f32 %v1661, %v1687
        %v1733 = vadd.f32 %v1662, %v1687
        %v1734 = vadd.f32 %v1663, %v1687
        %v1735 = vadd.f32 %v1664, %v1687
        %v1736 = vadd.f32 %v1665, %v1687
        %v1737 = vadd.f32 %v1666, %v1687
        %v1738 = vadd.f32 %v1667, %v1687
        %v1739 = vadd.f32 %v1668, %v1687
        %v1740 = vadd.f32 %v1669, %v1687
        %v1741 = vadd.f32 %v1670, %v1687
        %v1742 = vadd.f32 %v1671, %v1687
        %v1743 = vadd.f32 %v1672, %v1687
        %v1744 = vadd.f32 %v1673, %v1687
        %v1745 = vadd.f32 %v1674, %v1687
        %v1746 = vadd.f32 %v1675, %v1687
        %v1747 = vadd.f32 %v1676, %v1687
        %v1748 = vadd.f32 %v1677, %v1687
        %v1749 = vadd.f32 %v1678, %v1687
        %v1750 = vadd.f32 %v1679, %v1687
        %v1751 = vadd.f32 %v1680, %v1687
        %v1752 = vadd.f32 %v1681, %v1687
        %v1753 = vmax.f32 %v1689, 0.0
        %v1754 = vmax.f32 %v1690, 0.0
        %v1755 = vmax.f32 %v1691, 0.0
        %v1756 = vmax.f32 %v1692, 0.0
        %v1757 = vmax.f32 %v1693, 0.0
        %v1758 = vmax.f32 %v1694, 0.0
        %v1759 = vmax.f32 %v1695, 0.0
        %v1760 = vmax.f32 %v1696, 0.0
        %v1761 = vmax.f32 %v1697, 0.0
        %v1762 = vmax.f32 %v1698, 0.0
        %v1763 = vmax.f32 %v1699, 0.0
        %v1764 = vmax.f32 %v1700, 0.0
        %v1765 = vmax.f32 %v1701, 0.0
        %v1766 = vmax.f32 %v1702, 0.0
        %v1767 = vmax.f32 %v1703, 0.0
        %v1768 = vmax.f32 %v1704, 0.0
        %v1769 = vmax.f32 %v1705, 0.0
        %v1770 = vmax.f32 %v1706, 0.0
        %v1771 = vmax.f32 %v1707, 0.0
        %v1772 = vmax.f32 %v1708, 0.0
        %v1773 = vmax.f32 %v1709, 0.0
        %v1774 = vmax.f32 %v1710, 0.0
        %v1775 = vmax.f32 %v1711, 0.0
        %v1776 = vmax.f32 %v1712, 0.0
        %v1777 = vmax.f32 %v1713, 0.0
        %v1778 = vmax.f32 %v1714, 0.0
        %v1779 = vmax.f32 %v1715, 0.0
        %v1780 = vmax.f32 %v1716, 0.0
        %v1781 = vmax.f32 %v1717, 0.0
        %v1782 = vmax.f32 %v1718, 0.0
        %v1783 = vmax.f32 %v1719, 0.0
        %v1784 = vmax.f32 %v1720, 0.0
        %v1785 = vmax.f32 %v1721, 0.0
        %v1786 = vmax.f32 %v1722, 0.0
        %v1787 = vmax.f32 %v1723, 0.0
        %v1788 = vmax.f32 %v1724, 0.0
        %v1789 = vmax.f32 %v1725, 0.0
        %v1790 = vmax.f32 %v1726, 0.0
        %v1791 = vmax.f32 %v1727, 0.0
        %v1792 = vmax.f32 %v1728, 0.0
        %v1793 = vmax.f32 %v1729, 0.0
        %v1794 = vmax.f32 %v1730, 0.0
        %v1795 = vmax.f32 %v1731, 0.0
        %v1796 = vmax.f32 %v1732, 0.0
        %v1797 = vmax.f32 %v1733, 0.0
        %v1798 = vmax.f32 %v1734, 0.0
        %v1799 = vmax.f32 %v1735, 0.0
        %v1800 = vmax.f32 %v1736, 0.0
        %v1801 = vmax.f32 %v1737, 0.0
        %v1802 = vmax.f32 %v1738, 0.0
        %v1803 = vmax.f32 %v1739, 0.0
        %v1804 = vmax.f32 %v1740, 0.0
        %v1805 = vmax.f32 %v1741, 0.0
        %v1806 = vmax.f32 %v1742, 0.0
        %v1807 = vmax.f32 %v1743, 0.0
        %v1808 = vmax.f32 %v1744, 0.0
        %v1809 = vmax.f32 %v1745, 0.0
        %v1810 = vmax.f32 %v1746, 0.0
        %v1811 = vmax.f32 %v1747, 0.0
        %v1812 = vmax.f32 %v1748, 0.0
        %v1813 = vmax.f32 %v1749, 0.0
        %v1814 = vmax.f32 %v1750, 0.0
        %v1815 = vmax.f32 %v1751, 0.0
        %v1816 = vmax.f32 %v1752, 0.0
        %v1817 = vpack.c.bf16 %v1754, %v1753
        %v1818 = vpack.c.bf16 %v1756, %v1755
        %v1819 = vpack.c.bf16 %v1758, %v1757
        %v1820 = vpack.c.bf16 %v1760, %v1759
        %v1821 = vpack.c.bf16 %v1762, %v1761
        %v1822 = vpack.c.bf16 %v1764, %v1763
        %v1823 = vpack.c.bf16 %v1766, %v1765
        %v1824 = vpack.c.bf16 %v1768, %v1767
        %v1825 = vpack.c.bf16 %v1770, %v1769
        %v1826 = vpack.c.bf16 %v1772, %v1771
        %v1827 = vpack.c.bf16 %v1774, %v1773
        %v1828 = vpack.c.bf16 %v1776, %v1775
        %v1829 = vpack.c.bf16 %v1778, %v1777
        %v1830 = vpack.c.bf16 %v1780, %v1779
        %v1831 = vpack.c.bf16 %v1782, %v1781
        %v1832 = vpack.c.bf16 %v1784, %v1783
        %v1833 = vpack.c.bf16 %v1786, %v1785
        %v1834 = vpack.c.bf16 %v1788, %v1787
        %v1835 = vpack.c.bf16 %v1790, %v1789
        %v1836 = vpack.c.bf16 %v1792, %v1791
        %v1837 = vpack.c.bf16 %v1794, %v1793
        %v1838 = vpack.c.bf16 %v1796, %v1795
        %v1839 = vpack.c.bf16 %v1798, %v1797
        %v1840 = vpack.c.bf16 %v1800, %v1799
        %v1841 = vpack.c.bf16 %v1802, %v1801
        %v1842 = vpack.c.bf16 %v1804, %v1803
        %v1843 = vpack.c.bf16 %v1806, %v1805
        %v1844 = vpack.c.bf16 %v1808, %v1807
        %v1845 = vpack.c.bf16 %v1810, %v1809
        %v1846 = vpack.c.bf16 %v1812, %v1811
        %v1847 = vpack.c.bf16 %v1814, %v1813
        %v1848 = vpack.c.bf16 %v1816, %v1815
        %v1849 = vld [vmem:[#allocation2] sm:$0xff]
        %v1850 = vld [vmem:[#allocation2 + $0x8] sm:$0xff]
        %v1851 = vld [vmem:[#allocation2 + $0x10] sm:$0xff]
        %v1852 = vld [vmem:[#allocation2 + $0x18] sm:$0xff]
        %v1853 = vld [vmem:[#allocation2 + $0x20] sm:$0xff]
        %v1854 = vld [vmem:[#allocation2 + $0x28] sm:$0xff]
        %v1855 = vld [vmem:[#allocation2 + $0x30] sm:$0xff]
        %v1856 = vld [vmem:[#allocation2 + $0x38] sm:$0xff]
        %v1857 = vld [vmem:[#allocation2 + $0x40] sm:$0xff]
        %v1858 = vld [vmem:[#allocation2 + $0x48] sm:$0xff]
        %v1859 = vld [vmem:[#allocation2 + $0x50] sm:$0xff]
        %v1860 = vld [vmem:[#allocation2 + $0x58] sm:$0xff]
        %v1861 = vld [vmem:[#allocation2 + $0x60] sm:$0xff]
        %v1862 = vld [vmem:[#allocation2 + $0x68] sm:$0xff]
        %v1863 = vld [vmem:[#allocation2 + $0x70] sm:$0xff]
        %v1864 = vld [vmem:[#allocation2 + $0x78] sm:$0xff]
        %v1865 = vld [vmem:[%s4] sm:$0x3]
        %v1867 = vlaneseq
        %v1868 = vshrl.u32 %v1867, 7
        %v1869 = vsub.s32 0, %v1868
        %v1870 = vrot.slane %v1865, %v1869
        %v1871 = vlaneseq
        %v1872 = vshrl.u32 %v1871, 7
        %v1873 = vsub.s32 1, %v1872
        %v1874 = vrot.slane %v1865, %v1873
        %v1893 = vunpack.c.l.b16 %v1849
        %v1894 = vunpack.c.h.b16 %v1849
        %v1895 = vunpack.c.l.b16 %v1850
        %v1896 = vunpack.c.h.b16 %v1850
        %v1897 = vunpack.c.l.b16 %v1851
        %v1898 = vunpack.c.h.b16 %v1851
        %v1899 = vunpack.c.l.b16 %v1852
        %v1900 = vunpack.c.h.b16 %v1852
        %v1901 = vunpack.c.l.b16 %v1853
        %v1902 = vunpack.c.h.b16 %v1853
        %v1903 = vunpack.c.l.b16 %v1854
        %v1904 = vunpack.c.h.b16 %v1854
        %v1905 = vunpack.c.l.b16 %v1855
        %v1906 = vunpack.c.h.b16 %v1855
        %v1907 = vunpack.c.l.b16 %v1856
        %v1908 = vunpack.c.h.b16 %v1856
        %v1909 = vunpack.c.l.b16 %v1857
        %v1910 = vunpack.c.h.b16 %v1857
        %v1911 = vunpack.c.l.b16 %v1858
        %v1912 = vunpack.c.h.b16 %v1858
        %v1913 = vunpack.c.l.b16 %v1859
        %v1914 = vunpack.c.h.b16 %v1859
        %v1915 = vunpack.c.l.b16 %v1860
        %v1916 = vunpack.c.h.b16 %v1860
        %v1917 = vunpack.c.l.b16 %v1861
        %v1918 = vunpack.c.h.b16 %v1861
        %v1919 = vunpack.c.l.b16 %v1862
        %v1920 = vunpack.c.h.b16 %v1862
        %v1921 = vunpack.c.l.b16 %v1863
        %v1922 = vunpack.c.h.b16 %v1863
        %v1923 = vunpack.c.l.b16 %v1864
        %v1924 = vunpack.c.h.b16 %v1864
        %v1925 = vpack.c.b16 %v1895, %v1893
        %v1926 = vpack.c.b16 %v1896, %v1894
        %v1927 = vpack.c.b16 %v1899, %v1897
        %v1928 = vpack.c.b16 %v1900, %v1898
        %v1929 = vpack.c.b16 %v1903, %v1901
        %v1930 = vpack.c.b16 %v1904, %v1902
        %v1931 = vpack.c.b16 %v1907, %v1905
        %v1932 = vpack.c.b16 %v1908, %v1906
        %v1933 = vpack.c.b16 %v1911, %v1909
        %v1934 = vpack.c.b16 %v1912, %v1910
        %v1935 = vpack.c.b16 %v1915, %v1913
        %v1936 = vpack.c.b16 %v1916, %v1914
        %v1937 = vpack.c.b16 %v1919, %v1917
        %v1938 = vpack.c.b16 %v1920, %v1918
        %v1939 = vpack.c.b16 %v1923, %v1921
        %v1940 = vpack.c.b16 %v1924, %v1922
        %1957 = vmatprep.subr.bf16.mxu0 %v1926
        %1958 = vmatpush1.bf16.msra.mxu0 %v1925
        %1959 = vmatprep.subr.bf16.mxu0 %v1928
        %1960 = vmatpush1.bf16.msra.mxu0 %v1927
        %1961 = vmatprep.subr.bf16.mxu0 %v1930
        %1962 = vmatpush1.bf16.msra.mxu0 %v1929
        %1963 = vmatprep.subr.bf16.mxu0 %v1932
        %1964 = vmatpush1.bf16.msra.mxu0 %v1931
        %1965 = vmatprep.subr.bf16.mxu0 %v1934
        %1966 = vmatpush1.bf16.msra.mxu0 %v1933
        %1967 = vmatprep.subr.bf16.mxu0 %v1936
        %1968 = vmatpush1.bf16.msra.mxu0 %v1935
        %1969 = vmatprep.subr.bf16.mxu0 %v1938
        %1970 = vmatpush1.bf16.msra.mxu0 %v1937
        %1971 = vmatprep.subr.bf16.mxu0 %v1940
        %1972 = vmatpush1.bf16.msra.mxu0 %v1939
        %1973 = vmatprep.subr.bf16.mxu0 0
        %1974 = vmatpush1.bf16.msra.mxu0 0
        %1975 = vmatprep.subr.bf16.mxu0 0
        %1976 = vmatpush1.bf16.msra.mxu0 0
        %1977 = vmatprep.subr.bf16.mxu0 0
        %1978 = vmatpush1.bf16.msra.mxu0 0
        %1979 = vmatprep.subr.bf16.mxu0 0
        %1980 = vmatpush1.bf16.msra.mxu0 0
        %1981 = vmatprep.subr.bf16.mxu0 0
        %1982 = vmatpush1.bf16.msra.mxu0 0
        %1983 = vmatprep.subr.bf16.mxu0 0
        %1984 = vmatpush1.bf16.msra.mxu0 0
        %1985 = vmatprep.subr.bf16.mxu0 0
        %1986 = vmatpush1.bf16.msra.mxu0 0
        %1987 = vmatprep.subr.bf16.mxu0 0
        %1988 = vmatpush1.bf16.msra.mxu0 0
        %1989 = vmatprep.mubr.bf16.mxu0 0
        %1990 = vmatmul.mubr.bf16.gmra.mrb[0].mxu0 %v1817
        %v1991 = vpop.f32.mrb[0].mxu0
        %v1992 = vadd.f32 %v1870, %v1991
        %v1993 = vpop.f32.mrb[0].mxu0
        %v1994 = vadd.f32 %v1874, %v1993
        %v1995 = vpop.f32.mrb[0].mxu0
        %v1996 = vadd.f32 %v1870, %v1995
        %v1997 = vpop.f32.mrb[0].mxu0
        %v1998 = vadd.f32 %v1874, %v1997
        %1999 = vmatprep.mubr.bf16.mxu0 0
        %2000 = vmatmul.mubr.bf16.gmra.mrb[0].mxu0 %v1818
        %v2001 = vpop.f32.mrb[0].mxu0
        %v2002 = vadd.f32 %v1870, %v2001
        %v2003 = vpop.f32.mrb[0].mxu0
        %v2004 = vadd.f32 %v1874, %v2003
        %v2005 = vpop.f32.mrb[0].mxu0
        %v2006 = vadd.f32 %v1870, %v2005
        %v2007 = vpop.f32.mrb[0].mxu0
        %v2008 = vadd.f32 %v1874, %v2007
        %2009 = vmatprep.mubr.bf16.mxu0 0
        %2010 = vmatmul.mubr.bf16.gmra.mrb[0].mxu0 %v1819
        %v2011 = vpop.f32.mrb[0].mxu0
        %v2012 = vadd.f32 %v1870, %v2011
        %v2013 = vpop.f32.mrb[0].mxu0
        %v2014 = vadd.f32 %v1874, %v2013
        %v2015 = vpop.f32.mrb[0].mxu0
        %v2016 = vadd.f32 %v1870, %v2015
        %v2017 = vpop.f32.mrb[0].mxu0
        %v2018 = vadd.f32 %v1874, %v2017
        %2019 = vmatprep.mubr.bf16.mxu0 0
        %2020 = vmatmul.mubr.bf16.gmra.mrb[0].mxu0 %v1820
        %v2021 = vpop.f32.mrb[0].mxu0
        %v2022 = vadd.f32 %v1870, %v2021
        %v2023 = vpop.f32.mrb[0].mxu0
        %v2024 = vadd.f32 %v1874, %v2023
        %v2025 = vpop.f32.mrb[0].mxu0
        %v2026 = vadd.f32 %v1870, %v2025
        %v2027 = vpop.f32.mrb[0].mxu0
        %v2028 = vadd.f32 %v1874, %v2027
        %2029 = vmatprep.mubr.bf16.mxu0 0
        %2030 = vmatmul.mubr.bf16.gmra.mrb[0].mxu0 %v1821
        %v2031 = vpop.f32.mrb[0].mxu0
        %v2032 = vadd.f32 %v1870, %v2031
        %v2033 = vpop.f32.mrb[0].mxu0
        %v2034 = vadd.f32 %v1874, %v2033
        %v2035 = vpop.f32.mrb[0].mxu0
        %v2036 = vadd.f32 %v1870, %v2035
        %v2037 = vpop.f32.mrb[0].mxu0
        %v2038 = vadd.f32 %v1874, %v2037
        %2039 = vmatprep.mubr.bf16.mxu0 0
        %2040 = vmatmul.mubr.bf16.gmra.mrb[0].mxu0 %v1822
        %v2041 = vpop.f32.mrb[0].mxu0
        %v2042 = vadd.f32 %v1870, %v2041
        %v2043 = vpop.f32.mrb[0].mxu0
        %v2044 = vadd.f32 %v1874, %v2043
        %v2045 = vpop.f32.mrb[0].mxu0
        %v2046 = vadd.f32 %v1870, %v2045
        %v2047 = vpop.f32.mrb[0].mxu0
        %v2048 = vadd.f32 %v1874, %v2047
        %2049 = vmatprep.mubr.bf16.mxu0 0
        %2050 = vmatmul.mubr.bf16.gmra.mrb[0].mxu0 %v1823
        %v2051 = vpop.f32.mrb[0].mxu0
        %v2052 = vadd.f32 %v1870, %v2051
        %v2053 = vpop.f32.mrb[0].mxu0
        %v2054 = vadd.f32 %v1874, %v2053
        %v2055 = vpop.f32.mrb[0].mxu0
        %v2056 = vadd.f32 %v1870, %v2055
        %v2057 = vpop.f32.mrb[0].mxu0
        %v2058 = vadd.f32 %v1874, %v2057
        %2059 = vmatprep.mubr.bf16.mxu0 0
        %2060 = vmatmul.mubr.bf16.gmra.mrb[0].mxu0 %v1824
        %v2061 = vpop.f32.mrb[0].mxu0
        %v2062 = vadd.f32 %v1870, %v2061
        %v2063 = vpop.f32.mrb[0].mxu0
        %v2064 = vadd.f32 %v1874, %v2063
        %v2065 = vpop.f32.mrb[0].mxu0
        %v2066 = vadd.f32 %v1870, %v2065
        %v2067 = vpop.f32.mrb[0].mxu0
        %v2068 = vadd.f32 %v1874, %v2067
        %2069 = vmatprep.mubr.bf16.mxu0 0
        %2070 = vmatmul.mubr.bf16.gmra.mrb[0].mxu0 %v1825
        %v2071 = vpop.f32.mrb[0].mxu0
        %v2072 = vadd.f32 %v1870, %v2071
        %v2073 = vpop.f32.mrb[0].mxu0
        %v2074 = vadd.f32 %v1874, %v2073
        %v2075 = vpop.f32.mrb[0].mxu0
        %v2076 = vadd.f32 %v1870, %v2075
        %v2077 = vpop.f32.mrb[0].mxu0
        %v2078 = vadd.f32 %v1874, %v2077
        %2079 = vmatprep.mubr.bf16.mxu0 0
        %2080 = vmatmul.mubr.bf16.gmra.mrb[0].mxu0 %v1826
        %v2081 = vpop.f32.mrb[0].mxu0
        %v2082 = vadd.f32 %v1870, %v2081
        %v2083 = vpop.f32.mrb[0].mxu0
        %v2084 = vadd.f32 %v1874, %v2083
        %v2085 = vpop.f32.mrb[0].mxu0
        %v2086 = vadd.f32 %v1870, %v2085
        %v2087 = vpop.f32.mrb[0].mxu0
        %v2088 = vadd.f32 %v1874, %v2087
        %2089 = vmatprep.mubr.bf16.mxu0 0
        %2090 = vmatmul.mubr.bf16.gmra.mrb[0].mxu0 %v1827
        %v2091 = vpop.f32.mrb[0].mxu0
        %v2092 = vadd.f32 %v1870, %v2091
        %v2093 = vpop.f32.mrb[0].mxu0
        %v2094 = vadd.f32 %v1874, %v2093
        %v2095 = vpop.f32.mrb[0].mxu0
        %v2096 = vadd.f32 %v1870, %v2095
        %v2097 = vpop.f32.mrb[0].mxu0
        %v2098 = vadd.f32 %v1874, %v2097
        %2099 = vmatprep.mubr.bf16.mxu0 0
        %2100 = vmatmul.mubr.bf16.gmra.mrb[0].mxu0 %v1828
        %v2101 = vpop.f32.mrb[0].mxu0
        %v2102 = vadd.f32 %v1870, %v2101
        %v2103 = vpop.f32.mrb[0].mxu0
        %v2104 = vadd.f32 %v1874, %v2103
        %v2105 = vpop.f32.mrb[0].mxu0
        %v2106 = vadd.f32 %v1870, %v2105
        %v2107 = vpop.f32.mrb[0].mxu0
        %v2108 = vadd.f32 %v1874, %v2107
        %2109 = vmatprep.mubr.bf16.mxu0 0
        %2110 = vmatmul.mubr.bf16.gmra.mrb[0].mxu0 %v1829
        %v2111 = vpop.f32.mrb[0].mxu0
        %v2112 = vadd.f32 %v1870, %v2111
        %v2113 = vpop.f32.mrb[0].mxu0
        %v2114 = vadd.f32 %v1874, %v2113
        %v2115 = vpop.f32.mrb[0].mxu0
        %v2116 = vadd.f32 %v1870, %v2115
        %v2117 = vpop.f32.mrb[0].mxu0
        %v2118 = vadd.f32 %v1874, %v2117
        %2119 = vmatprep.mubr.bf16.mxu0 0
        %2120 = vmatmul.mubr.bf16.gmra.mrb[0].mxu0 %v1830
        %v2121 = vpop.f32.mrb[0].mxu0
        %v2122 = vadd.f32 %v1870, %v2121
        %v2123 = vpop.f32.mrb[0].mxu0
        %v2124 = vadd.f32 %v1874, %v2123
        %v2125 = vpop.f32.mrb[0].mxu0
        %v2126 = vadd.f32 %v1870, %v2125
        %v2127 = vpop.f32.mrb[0].mxu0
        %v2128 = vadd.f32 %v1874, %v2127
        %2129 = vmatprep.mubr.bf16.mxu0 0
        %2130 = vmatmul.mubr.bf16.gmra.mrb[0].mxu0 %v1831
        %v2131 = vpop.f32.mrb[0].mxu0
        %v2132 = vadd.f32 %v1870, %v2131
        %v2133 = vpop.f32.mrb[0].mxu0
        %v2134 = vadd.f32 %v1874, %v2133
        %v2135 = vpop.f32.mrb[0].mxu0
        %v2136 = vadd.f32 %v1870, %v2135
        %v2137 = vpop.f32.mrb[0].mxu0
        %v2138 = vadd.f32 %v1874, %v2137
        %2139 = vmatprep.mubr.bf16.mxu0 0
        %2140 = vmatmul.mubr.bf16.gmra.mrb[0].mxu0 %v1832
        %v2141 = vpop.f32.mrb[0].mxu0
        %v2142 = vadd.f32 %v1870, %v2141
        %v2143 = vpop.f32.mrb[0].mxu0
        %v2144 = vadd.f32 %v1874, %v2143
        %v2145 = vpop.f32.mrb[0].mxu0
        %v2146 = vadd.f32 %v1870, %v2145
        %v2147 = vpop.f32.mrb[0].mxu0
        %v2148 = vadd.f32 %v1874, %v2147
        %2149 = vmatprep.mubr.bf16.mxu0 0
        %2150 = vmatmul.mubr.bf16.gmra.mrb[0].mxu0 %v1833
        %v2151 = vpop.f32.mrb[0].mxu0
        %v2152 = vadd.f32 %v1870, %v2151
        %v2153 = vpop.f32.mrb[0].mxu0
        %v2154 = vadd.f32 %v1874, %v2153
        %v2155 = vpop.f32.mrb[0].mxu0
        %v2156 = vadd.f32 %v1870, %v2155
        %v2157 = vpop.f32.mrb[0].mxu0
        %v2158 = vadd.f32 %v1874, %v2157
        %2159 = vmatprep.mubr.bf16.mxu0 0
        %2160 = vmatmul.mubr.bf16.gmra.mrb[0].mxu0 %v1834
        %v2161 = vpop.f32.mrb[0].mxu0
        %v2162 = vadd.f32 %v1870, %v2161
        %v2163 = vpop.f32.mrb[0].mxu0
        %v2164 = vadd.f32 %v1874, %v2163
        %v2165 = vpop.f32.mrb[0].mxu0
        %v2166 = vadd.f32 %v1870, %v2165
        %v2167 = vpop.f32.mrb[0].mxu0
        %v2168 = vadd.f32 %v1874, %v2167
        %2169 = vmatprep.mubr.bf16.mxu0 0
        %2170 = vmatmul.mubr.bf16.gmra.mrb[0].mxu0 %v1835
        %v2171 = vpop.f32.mrb[0].mxu0
        %v2172 = vadd.f32 %v1870, %v2171
        %v2173 = vpop.f32.mrb[0].mxu0
        %v2174 = vadd.f32 %v1874, %v2173
        %v2175 = vpop.f32.mrb[0].mxu0
        %v2176 = vadd.f32 %v1870, %v2175
        %v2177 = vpop.f32.mrb[0].mxu0
        %v2178 = vadd.f32 %v1874, %v2177
        %2179 = vmatprep.mubr.bf16.mxu0 0
        %2180 = vmatmul.mubr.bf16.gmra.mrb[0].mxu0 %v1836
        %v2181 = vpop.f32.mrb[0].mxu0
        %v2182 = vadd.f32 %v1870, %v2181
        %v2183 = vpop.f32.mrb[0].mxu0
        %v2184 = vadd.f32 %v1874, %v2183
        %v2185 = vpop.f32.mrb[0].mxu0
        %v2186 = vadd.f32 %v1870, %v2185
        %v2187 = vpop.f32.mrb[0].mxu0
        %v2188 = vadd.f32 %v1874, %v2187
        %2189 = vmatprep.mubr.bf16.mxu0 0
        %2190 = vmatmul.mubr.bf16.gmra.mrb[0].mxu0 %v1837
        %v2191 = vpop.f32.mrb[0].mxu0
        %v2192 = vadd.f32 %v1870, %v2191
        %v2193 = vpop.f32.mrb[0].mxu0
        %v2194 = vadd.f32 %v1874, %v2193
        %v2195 = vpop.f32.mrb[0].mxu0
        %v2196 = vadd.f32 %v1870, %v2195
        %v2197 = vpop.f32.mrb[0].mxu0
        %v2198 = vadd.f32 %v1874, %v2197
        %2199 = vmatprep.mubr.bf16.mxu0 0
        %2200 = vmatmul.mubr.bf16.gmra.mrb[0].mxu0 %v1838
        %v2201 = vpop.f32.mrb[0].mxu0
        %v2202 = vadd.f32 %v1870, %v2201
        %v2203 = vpop.f32.mrb[0].mxu0
        %v2204 = vadd.f32 %v1874, %v2203
        %v2205 = vpop.f32.mrb[0].mxu0
        %v2206 = vadd.f32 %v1870, %v2205
        %v2207 = vpop.f32.mrb[0].mxu0
        %v2208 = vadd.f32 %v1874, %v2207
        %2209 = vmatprep.mubr.bf16.mxu0 0
        %2210 = vmatmul.mubr.bf16.gmra.mrb[0].mxu0 %v1839
        %v2211 = vpop.f32.mrb[0].mxu0
        %v2212 = vadd.f32 %v1870, %v2211
        %v2213 = vpop.f32.mrb[0].mxu0
        %v2214 = vadd.f32 %v1874, %v2213
        %v2215 = vpop.f32.mrb[0].mxu0
        %v2216 = vadd.f32 %v1870, %v2215
        %v2217 = vpop.f32.mrb[0].mxu0
        %v2218 = vadd.f32 %v1874, %v2217
        %2219 = vmatprep.mubr.bf16.mxu0 0
        %2220 = vmatmul.mubr.bf16.gmra.mrb[0].mxu0 %v1840
        %v2221 = vpop.f32.mrb[0].mxu0
        %v2222 = vadd.f32 %v1870, %v2221
        %v2223 = vpop.f32.mrb[0].mxu0
        %v2224 = vadd.f32 %v1874, %v2223
        %v2225 = vpop.f32.mrb[0].mxu0
        %v2226 = vadd.f32 %v1870, %v2225
        %v2227 = vpop.f32.mrb[0].mxu0
        %v2228 = vadd.f32 %v1874, %v2227
        %2229 = vmatprep.mubr.bf16.mxu0 0
        %2230 = vmatmul.mubr.bf16.gmra.mrb[0].mxu0 %v1841
        %v2231 = vpop.f32.mrb[0].mxu0
        %v2232 = vadd.f32 %v1870, %v2231
        %v2233 = vpop.f32.mrb[0].mxu0
        %v2234 = vadd.f32 %v1874, %v2233
        %v2235 = vpop.f32.mrb[0].mxu0
        %v2236 = vadd.f32 %v1870, %v2235
        %v2237 = vpop.f32.mrb[0].mxu0
        %v2238 = vadd.f32 %v1874, %v2237
        %2239 = vmatprep.mubr.bf16.mxu0 0
        %2240 = vmatmul.mubr.bf16.gmra.mrb[0].mxu0 %v1842
        %v2241 = vpop.f32.mrb[0].mxu0
        %v2242 = vadd.f32 %v1870, %v2241
        %v2243 = vpop.f32.mrb[0].mxu0
        %v2244 = vadd.f32 %v1874, %v2243
        %v2245 = vpop.f32.mrb[0].mxu0
        %v2246 = vadd.f32 %v1870, %v2245
        %v2247 = vpop.f32.mrb[0].mxu0
        %v2248 = vadd.f32 %v1874, %v2247
        %2249 = vmatprep.mubr.bf16.mxu0 0
        %2250 = vmatmul.mubr.bf16.gmra.mrb[0].mxu0 %v1843
        %v2251 = vpop.f32.mrb[0].mxu0
        %v2252 = vadd.f32 %v1870, %v2251
        %v2253 = vpop.f32.mrb[0].mxu0
        %v2254 = vadd.f32 %v1874, %v2253
        %v2255 = vpop.f32.mrb[0].mxu0
        %v2256 = vadd.f32 %v1870, %v2255
        %v2257 = vpop.f32.mrb[0].mxu0
        %v2258 = vadd.f32 %v1874, %v2257
        %2259 = vmatprep.mubr.bf16.mxu0 0
        %2260 = vmatmul.mubr.bf16.gmra.mrb[0].mxu0 %v1844
        %v2261 = vpop.f32.mrb[0].mxu0
        %v2262 = vadd.f32 %v1870, %v2261
        %v2263 = vpop.f32.mrb[0].mxu0
        %v2264 = vadd.f32 %v1874, %v2263
        %v2265 = vpop.f32.mrb[0].mxu0
        %v2266 = vadd.f32 %v1870, %v2265
        %v2267 = vpop.f32.mrb[0].mxu0
        %v2268 = vadd.f32 %v1874, %v2267
        %2269 = vmatprep.mubr.bf16.mxu0 0
        %2270 = vmatmul.mubr.bf16.gmra.mrb[0].mxu0 %v1845
        %v2271 = vpop.f32.mrb[0].mxu0
        %v2272 = vadd.f32 %v1870, %v2271
        %v2273 = vpop.f32.mrb[0].mxu0
        %v2274 = vadd.f32 %v1874, %v2273
        %v2275 = vpop.f32.mrb[0].mxu0
        %v2276 = vadd.f32 %v1870, %v2275
        %v2277 = vpop.f32.mrb[0].mxu0
        %v2278 = vadd.f32 %v1874, %v2277
        %2279 = vmatprep.mubr.bf16.mxu0 0
        %2280 = vmatmul.mubr.bf16.gmra.mrb[0].mxu0 %v1846
        %v2281 = vpop.f32.mrb[0].mxu0
        %v2282 = vadd.f32 %v1870, %v2281
        %v2283 = vpop.f32.mrb[0].mxu0
        %v2284 = vadd.f32 %v1874, %v2283
        %v2285 = vpop.f32.mrb[0].mxu0
        %v2286 = vadd.f32 %v1870, %v2285
        %v2287 = vpop.f32.mrb[0].mxu0
        %v2288 = vadd.f32 %v1874, %v2287
        %2289 = vmatprep.mubr.bf16.mxu0 0
        %2290 = vmatmul.mubr.bf16.gmra.mrb[0].mxu0 %v1847
        %v2291 = vpop.f32.mrb[0].mxu0
        %v2292 = vadd.f32 %v1870, %v2291
        %v2293 = vpop.f32.mrb[0].mxu0
        %v2294 = vadd.f32 %v1874, %v2293
        %v2295 = vpop.f32.mrb[0].mxu0
        %v2296 = vadd.f32 %v1870, %v2295
        %v2297 = vpop.f32.mrb[0].mxu0
        %v2298 = vadd.f32 %v1874, %v2297
        %2299 = vmatprep.mubr.bf16.mxu0 0
        %2300 = vmatmul.mubr.bf16.gmra.mrb[0].mxu0 %v1848
        %v2301 = vpop.f32.mrb[0].mxu0
        %v2302 = vadd.f32 %v1870, %v2301
        %v2303 = vpop.f32.mrb[0].mxu0
        %v2304 = vadd.f32 %v1874, %v2303
        %v2305 = vpop.f32.mrb[0].mxu0
        %v2306 = vadd.f32 %v1870, %v2305
        %v2307 = vpop.f32.mrb[0].mxu0
        %v2308 = vadd.f32 %v1874, %v2307
        %2309 = vdwg.mxu0
        %v2310 = vmax.f32 %v1992, %v2002
        %v2311 = vmax.f32 %v1996, %v2006
        %v2312 = vmax.f32 %v2310, %v2012
        %v2313 = vmax.f32 %v2311, %v2016
        %v2314 = vmax.f32 %v2312, %v2022
        %v2315 = vmax.f32 %v2313, %v2026
        %v2316 = vmax.f32 %v2314, %v2032
        %v2317 = vmax.f32 %v2315, %v2036
        %v2318 = vmax.f32 %v2316, %v2042
        %v2319 = vmax.f32 %v2317, %v2046
        %v2320 = vmax.f32 %v2318, %v2052
        %v2321 = vmax.f32 %v2319, %v2056
        %v2322 = vmax.f32 %v2320, %v2062
        %v2323 = vmax.f32 %v2321, %v2066
        %v2324 = vmax.f32 %v2322, %v2072
        %v2325 = vmax.f32 %v2323, %v2076
        %v2326 = vmax.f32 %v2324, %v2082
        %v2327 = vmax.f32 %v2325, %v2086
        %v2328 = vmax.f32 %v2326, %v2092
        %v2329 = vmax.f32 %v2327, %v2096
        %v2330 = vmax.f32 %v2328, %v2102
        %v2331 = vmax.f32 %v2329, %v2106
        %v2332 = vmax.f32 %v2330, %v2112
        %v2333 = vmax.f32 %v2331, %v2116
        %v2334 = vmax.f32 %v2332, %v2122
        %v2335 = vmax.f32 %v2333, %v2126
        %v2336 = vmax.f32 %v2334, %v2132
        %v2337 = vmax.f32 %v2335, %v2136
        %v2338 = vmax.f32 %v2336, %v2142
        %v2339 = vmax.f32 %v2337, %v2146
        %v2340 = vmax.f32 %v2338, %v2152
        %v2341 = vmax.f32 %v2339, %v2156
        %v2342 = vmax.f32 %v2340, %v2162
        %v2343 = vmax.f32 %v2341, %v2166
        %v2344 = vmax.f32 %v2342, %v2172
        %v2345 = vmax.f32 %v2343, %v2176
        %v2346 = vmax.f32 %v2344, %v2182
        %v2347 = vmax.f32 %v2345, %v2186
        %v2348 = vmax.f32 %v2346, %v2192
        %v2349 = vmax.f32 %v2347, %v2196
        %v2350 = vmax.f32 %v2348, %v2202
        %v2351 = vmax.f32 %v2349, %v2206
        %v2352 = vmax.f32 %v2350, %v2212
        %v2353 = vmax.f32 %v2351, %v2216
        %v2354 = vmax.f32 %v2352, %v2222
        %v2355 = vmax.f32 %v2353, %v2226
        %v2356 = vmax.f32 %v2354, %v2232
        %v2357 = vmax.f32 %v2355, %v2236
        %v2358 = vmax.f32 %v2356, %v2242
        %v2359 = vmax.f32 %v2357, %v2246
        %v2360 = vmax.f32 %v2358, %v2252
        %v2361 = vmax.f32 %v2359, %v2256
        %v2362 = vmax.f32 %v2360, %v2262
        %v2363 = vmax.f32 %v2361, %v2266
        %v2364 = vmax.f32 %v2362, %v2272
        %v2365 = vmax.f32 %v2363, %v2276
        %v2366 = vmax.f32 %v2364, %v2282
        %v2367 = vmax.f32 %v2365, %v2286
        %v2368 = vmax.f32 %v2366, %v2292
        %v2369 = vmax.f32 %v2367, %v2296
        %v2370 = vmax.f32 %v2368, %v2302
        %v2371 = vmax.f32 %v2369, %v2306
        %v2372 = vmax.f32 %v2370, %v2371
        %v2373 = vrot.slane %v2372, 4
        %v2374 = vmax.f32 %v2372, %v2373
        %v2375 = vrot.slane %v2374, 2
        %v2376 = vmax.f32 %v2374, %v2375
        %v2377 = vrot.slane %v2376, 1
        %v2378 = vmax.f32 %v2376, %v2377
        %v2379 = vmax.f32 %v1994, %v2004
        %v2380 = vmax.f32 %v1998, %v2008
        %v2381 = vmax.f32 %v2379, %v2014
        %v2382 = vmax.f32 %v2380, %v2018
        %v2383 = vmax.f32 %v2381, %v2024
        %v2384 = vmax.f32 %v2382, %v2028
        %v2385 = vmax.f32 %v2383, %v2034
        %v2386 = vmax.f32 %v2384, %v2038
        %v2387 = vmax.f32 %v2385, %v2044
        %v2388 = vmax.f32 %v2386, %v2048
        %v2389 = vmax.f32 %v2387, %v2054
        %v2390 = vmax.f32 %v2388, %v2058
        %v2391 = vmax.f32 %v2389, %v2064
        %v2392 = vmax.f32 %v2390, %v2068
        %v2393 = vmax.f32 %v2391, %v2074
        %v2394 = vmax.f32 %v2392, %v2078
        %v2395 = vmax.f32 %v2393, %v2084
        %v2396 = vmax.f32 %v2394, %v2088
        %v2397 = vmax.f32 %v2395, %v2094
        %v2398 = vmax.f32 %v2396, %v2098
        %v2399 = vmax.f32 %v2397, %v2104
        %v2400 = vmax.f32 %v2398, %v2108
        %v2401 = vmax.f32 %v2399, %v2114
        %v2402 = vmax.f32 %v2400, %v2118
        %v2403 = vmax.f32 %v2401, %v2124
        %v2404 = vmax.f32 %v2402, %v2128
        %v2405 = vmax.f32 %v2403, %v2134
        %v2406 = vmax.f32 %v2404, %v2138
        %v2407 = vmax.f32 %v2405, %v2144
        %v2408 = vmax.f32 %v2406, %v2148
        %v2409 = vmax.f32 %v2407, %v2154
        %v2410 = vmax.f32 %v2408, %v2158
        %v2411 = vmax.f32 %v2409, %v2164
        %v2412 = vmax.f32 %v2410, %v2168
        %v2413 = vmax.f32 %v2411, %v2174
        %v2414 = vmax.f32 %v2412, %v2178
        %v2415 = vmax.f32 %v2413, %v2184
        %v2416 = vmax.f32 %v2414, %v2188
        %v2417 = vmax.f32 %v2415, %v2194
        %v2418 = vmax.f32 %v2416, %v2198
        %v2419 = vmax.f32 %v2417, %v2204
        %v2420 = vmax.f32 %v2418, %v2208
        %v2421 = vmax.f32 %v2419, %v2214
        %v2422 = vmax.f32 %v2420, %v2218
        %v2423 = vmax.f32 %v2421, %v2224
        %v2424 = vmax.f32 %v2422, %v2228
        %v2425 = vmax.f32 %v2423, %v2234
        %v2426 = vmax.f32 %v2424, %v2238
        %v2427 = vmax.f32 %v2425, %v2244
        %v2428 = vmax.f32 %v2426, %v2248
        %v2429 = vmax.f32 %v2427, %v2254
        %v2430 = vmax.f32 %v2428, %v2258
        %v2431 = vmax.f32 %v2429, %v2264
        %v2432 = vmax.f32 %v2430, %v2268
        %v2433 = vmax.f32 %v2431, %v2274
        %v2434 = vmax.f32 %v2432, %v2278
        %v2435 = vmax.f32 %v2433, %v2284
        %v2436 = vmax.f32 %v2434, %v2288
        %v2437 = vmax.f32 %v2435, %v2294
        %v2438 = vmax.f32 %v2436, %v2298
        %v2439 = vmax.f32 %v2437, %v2304
        %v2440 = vmax.f32 %v2438, %v2308
        %v2441 = vmax.f32 %v2439, %v2440
        %v2442 = vrot.slane %v2441, 4
        %v2443 = vmax.f32 %v2441, %v2442
        %v2444 = vrot.slane %v2443, 2
        %v2445 = vmax.f32 %v2443, %v2444
        %v2446 = vrot.slane %v2445, 1
        %v2447 = vmax.f32 %v2445, %v2446
        %v2448 = vpack.c.bf16 %v2378, %v2378
        %v2449 = vpack.c.bf16 %v2447, %v2447
        %v2450 = vld [vmem:[%s6] sm:$0xff]
        %v2451 = vld [vmem:[%s6 + $0x8] sm:$0xff]
        %v2452 = vld [vmem:[%s6 + $0x10] sm:$0xff]
        %v2453 = vld [vmem:[%s6 + $0x18] sm:$0xff]
        %v2454 = vld [vmem:[%s6 + $0x20] sm:$0xff]
        %v2455 = vld [vmem:[%s6 + $0x28] sm:$0xff]
        %v2456 = vld [vmem:[%s6 + $0x30] sm:$0xff]
        %v2457 = vld [vmem:[%s6 + $0x38] sm:$0xff]
        %v2458 = vld [vmem:[%s6 + $0x40] sm:$0xff]
        %v2459 = vld [vmem:[%s6 + $0x48] sm:$0xff]
        %v2460 = vld [vmem:[%s6 + $0x50] sm:$0xff]
        %v2461 = vld [vmem:[%s6 + $0x58] sm:$0xff]
        %v2462 = vld [vmem:[%s6 + $0x60] sm:$0xff]
        %v2463 = vld [vmem:[%s6 + $0x68] sm:$0xff]
        %v2464 = vld [vmem:[%s6 + $0x70] sm:$0xff]
        %v2465 = vld [vmem:[%s6 + $0x78] sm:$0xff]
        %v2466 = vld [vmem:[%s6 + $0x80] sm:$0xff]
        %v2467 = vld [vmem:[%s6 + $0x88] sm:$0xff]
        %v2468 = vld [vmem:[%s6 + $0x90] sm:$0xff]
        %v2469 = vld [vmem:[%s6 + $0x98] sm:$0xff]
        %v2470 = vld [vmem:[%s6 + $0xa0] sm:$0xff]
        %v2471 = vld [vmem:[%s6 + $0xa8] sm:$0xff]
        %v2472 = vld [vmem:[%s6 + $0xb0] sm:$0xff]
        %v2473 = vld [vmem:[%s6 + $0xb8] sm:$0xff]
        %v2474 = vld [vmem:[%s6 + $0xc0] sm:$0xff]
        %v2475 = vld [vmem:[%s6 + $0xc8] sm:$0xff]
        %v2476 = vld [vmem:[%s6 + $0xd0] sm:$0xff]
        %v2477 = vld [vmem:[%s6 + $0xd8] sm:$0xff]
        %v2478 = vld [vmem:[%s6 + $0xe0] sm:$0xff]
        %v2479 = vld [vmem:[%s6 + $0xe8] sm:$0xff]
        %v2480 = vld [vmem:[%s6 + $0xf0] sm:$0xff]
        %v2481 = vld [vmem:[%s6 + $0xf8] sm:$0xff]
        %v2482 = vld [vmem:[%s6 + $0x100] sm:$0xff]
        %v2483 = vld [vmem:[%s6 + $0x108] sm:$0xff]
        %v2484 = vld [vmem:[%s6 + $0x110] sm:$0xff]
        %v2485 = vld [vmem:[%s6 + $0x118] sm:$0xff]
        %v2486 = vld [vmem:[%s6 + $0x120] sm:$0xff]
        %v2487 = vld [vmem:[%s6 + $0x128] sm:$0xff]
        %v2488 = vld [vmem:[%s6 + $0x130] sm:$0xff]
        %v2489 = vld [vmem:[%s6 + $0x138] sm:$0xff]
        %v2490 = vld [vmem:[%s6 + $0x140] sm:$0xff]
        %v2491 = vld [vmem:[%s6 + $0x148] sm:$0xff]
        %v2492 = vld [vmem:[%s6 + $0x150] sm:$0xff]
        %v2493 = vld [vmem:[%s6 + $0x158] sm:$0xff]
        %v2494 = vld [vmem:[%s6 + $0x160] sm:$0xff]
        %v2495 = vld [vmem:[%s6 + $0x168] sm:$0xff]
        %v2496 = vld [vmem:[%s6 + $0x170] sm:$0xff]
        %v2497 = vld [vmem:[%s6 + $0x178] sm:$0xff]
        %v2498 = vld [vmem:[%s6 + $0x180] sm:$0xff]
        %v2499 = vld [vmem:[%s6 + $0x188] sm:$0xff]
        %v2500 = vld [vmem:[%s6 + $0x190] sm:$0xff]
        %v2501 = vld [vmem:[%s6 + $0x198] sm:$0xff]
        %v2502 = vld [vmem:[%s6 + $0x1a0] sm:$0xff]
        %v2503 = vld [vmem:[%s6 + $0x1a8] sm:$0xff]
        %v2504 = vld [vmem:[%s6 + $0x1b0] sm:$0xff]
        %v2505 = vld [vmem:[%s6 + $0x1b8] sm:$0xff]
        %v2506 = vld [vmem:[%s6 + $0x1c0] sm:$0xff]
        %v2507 = vld [vmem:[%s6 + $0x1c8] sm:$0xff]
        %v2508 = vld [vmem:[%s6 + $0x1d0] sm:$0xff]
        %v2509 = vld [vmem:[%s6 + $0x1d8] sm:$0xff]
        %v2510 = vld [vmem:[%s6 + $0x1e0] sm:$0xff]
        %v2511 = vld [vmem:[%s6 + $0x1e8] sm:$0xff]
        %v2512 = vld [vmem:[%s6 + $0x1f0] sm:$0xff]
        %v2513 = vld [vmem:[%s6 + $0x1f8] sm:$0xff]
        %v2514 = vld [vmem:[%s7] sm:$0xf]
        %v2579 = vunpack.c.l.b16 %v2450
        %v2580 = vunpack.c.h.b16 %v2450
        %v2581 = vunpack.c.l.b16 %v2451
        %v2582 = vunpack.c.h.b16 %v2451
        %v2583 = vunpack.c.l.b16 %v2452
        %v2584 = vunpack.c.h.b16 %v2452
        %v2585 = vunpack.c.l.b16 %v2453
        %v2586 = vunpack.c.h.b16 %v2453
        %v2587 = vunpack.c.l.b16 %v2454
        %v2588 = vunpack.c.h.b16 %v2454
        %v2589 = vunpack.c.l.b16 %v2455
        %v2590 = vunpack.c.h.b16 %v2455
        %v2591 = vunpack.c.l.b16 %v2456
        %v2592 = vunpack.c.h.b16 %v2456
        %v2593 = vunpack.c.l.b16 %v2457
        %v2594 = vunpack.c.h.b16 %v2457
        %v2595 = vunpack.c.l.b16 %v2458
        %v2596 = vunpack.c.h.b16 %v2458
        %v2597 = vunpack.c.l.b16 %v2459
        %v2598 = vunpack.c.h.b16 %v2459
        %v2599 = vunpack.c.l.b16 %v2460
        %v2600 = vunpack.c.h.b16 %v2460
        %v2601 = vunpack.c.l.b16 %v2461
        %v2602 = vunpack.c.h.b16 %v2461
        %v2603 = vunpack.c.l.b16 %v2462
        %v2604 = vunpack.c.h.b16 %v2462
        %v2605 = vunpack.c.l.b16 %v2463
        %v2606 = vunpack.c.h.b16 %v2463
        %v2607 = vunpack.c.l.b16 %v2464
        %v2608 = vunpack.c.h.b16 %v2464
        %v2609 = vunpack.c.l.b16 %v2465
        %v2610 = vunpack.c.h.b16 %v2465
        %v2611 = vunpack.c.l.b16 %v2466
        %v2612 = vunpack.c.h.b16 %v2466
        %v2613 = vunpack.c.l.b16 %v2467
        %v2614 = vunpack.c.h.b16 %v2467
        %v2615 = vunpack.c.l.b16 %v2468
        %v2616 = vunpack.c.h.b16 %v2468
        %v2617 = vunpack.c.l.b16 %v2469
        %v2618 = vunpack.c.h.b16 %v2469
        %v2619 = vunpack.c.l.b16 %v2470
        %v2620 = vunpack.c.h.b16 %v2470
        %v2621 = vunpack.c.l.b16 %v2471
        %v2622 = vunpack.c.h.b16 %v2471
        %v2623 = vunpack.c.l.b16 %v2472
        %v2624 = vunpack.c.h.b16 %v2472
        %v2625 = vunpack.c.l.b16 %v2473
        %v2626 = vunpack.c.h.b16 %v2473
        %v2627 = vunpack.c.l.b16 %v2474
        %v2628 = vunpack.c.h.b16 %v2474
        %v2629 = vunpack.c.l.b16 %v2475
        %v2630 = vunpack.c.h.b16 %v2475
        %v2631 = vunpack.c.l.b16 %v2476
        %v2632 = vunpack.c.h.b16 %v2476
        %v2633 = vunpack.c.l.b16 %v2477
        %v2634 = vunpack.c.h.b16 %v2477
        %v2635 = vunpack.c.l.b16 %v2478
        %v2636 = vunpack.c.h.b16 %v2478
        %v2637 = vunpack.c.l.b16 %v2479
        %v2638 = vunpack.c.h.b16 %v2479
        %v2639 = vunpack.c.l.b16 %v2480
        %v2640 = vunpack.c.h.b16 %v2480
        %v2641 = vunpack.c.l.b16 %v2481
        %v2642 = vunpack.c.h.b16 %v2481
        %v2643 = vunpack.c.l.b16 %v2482
        %v2644 = vunpack.c.h.b16 %v2482
        %v2645 = vunpack.c.l.b16 %v2483
        %v2646 = vunpack.c.h.b16 %v2483
        %v2647 = vunpack.c.l.b16 %v2484
        %v2648 = vunpack.c.h.b16 %v2484
        %v2649 = vunpack.c.l.b16 %v2485
        %v2650 = vunpack.c.h.b16 %v2485
        %v2651 = vunpack.c.l.b16 %v2486
        %v2652 = vunpack.c.h.b16 %v2486
        %v2653 = vunpack.c.l.b16 %v2487
        %v2654 = vunpack.c.h.b16 %v2487
        %v2655 = vunpack.c.l.b16 %v2488
        %v2656 = vunpack.c.h.b16 %v2488
        %v2657 = vunpack.c.l.b16 %v2489
        %v2658 = vunpack.c.h.b16 %v2489
        %v2659 = vunpack.c.l.b16 %v2490
        %v2660 = vunpack.c.h.b16 %v2490
        %v2661 = vunpack.c.l.b16 %v2491
        %v2662 = vunpack.c.h.b16 %v2491
        %v2663 = vunpack.c.l.b16 %v2492
        %v2664 = vunpack.c.h.b16 %v2492
        %v2665 = vunpack.c.l.b16 %v2493
        %v2666 = vunpack.c.h.b16 %v2493
        %v2667 = vunpack.c.l.b16 %v2494
        %v2668 = vunpack.c.h.b16 %v2494
        %v2669 = vunpack.c.l.b16 %v2495
        %v2670 = vunpack.c.h.b16 %v2495
        %v2671 = vunpack.c.l.b16 %v2496
        %v2672 = vunpack.c.h.b16 %v2496
        %v2673 = vunpack.c.l.b16 %v2497
        %v2674 = vunpack.c.h.b16 %v2497
        %v2675 = vunpack.c.l.b16 %v2498
        %v2676 = vunpack.c.h.b16 %v2498
        %v2677 = vunpack.c.l.b16 %v2499
        %v2678 = vunpack.c.h.b16 %v2499
        %v2679 = vunpack.c.l.b16 %v2500
        %v2680 = vunpack.c.h.b16 %v2500
        %v2681 = vunpack.c.l.b16 %v2501
        %v2682 = vunpack.c.h.b16 %v2501
        %v2683 = vunpack.c.l.b16 %v2502
        %v2684 = vunpack.c.h.b16 %v2502
        %v2685 = vunpack.c.l.b16 %v2503
        %v2686 = vunpack.c.h.b16 %v2503
        %v2687 = vunpack.c.l.b16 %v2504
        %v2688 = vunpack.c.h.b16 %v2504
        %v2689 = vunpack.c.l.b16 %v2505
        %v2690 = vunpack.c.h.b16 %v2505
        %v2691 = vunpack.c.l.b16 %v2506
        %v2692 = vunpack.c.h.b16 %v2506
        %v2693 = vunpack.c.l.b16 %v2507
        %v2694 = vunpack.c.h.b16 %v2507
        %v2695 = vunpack.c.l.b16 %v2508
        %v2696 = vunpack.c.h.b16 %v2508
        %v2697 = vunpack.c.l.b16 %v2509
        %v2698 = vunpack.c.h.b16 %v2509
        %v2699 = vunpack.c.l.b16 %v2510
        %v2700 = vunpack.c.h.b16 %v2510
        %v2701 = vunpack.c.l.b16 %v2511
        %v2702 = vunpack.c.h.b16 %v2511
        %v2703 = vunpack.c.l.b16 %v2512
        %v2704 = vunpack.c.h.b16 %v2512
        %v2705 = vunpack.c.l.b16 %v2513
        %v2706 = vunpack.c.h.b16 %v2513
        %v2707 = vpack.c.b16 %v2583, %v2579
        %v2708 = vpack.c.b16 %v2584, %v2580
        %v2709 = vpack.c.b16 %v2585, %v2581
        %v2710 = vpack.c.b16 %v2586, %v2582
        %v2711 = vpack.c.b16 %v2591, %v2587
        %v2712 = vpack.c.b16 %v2592, %v2588
        %v2713 = vpack.c.b16 %v2593, %v2589
        %v2714 = vpack.c.b16 %v2594, %v2590
        %v2715 = vpack.c.b16 %v2599, %v2595
        %v2716 = vpack.c.b16 %v2600, %v2596
        %v2717 = vpack.c.b16 %v2601, %v2597
        %v2718 = vpack.c.b16 %v2602, %v2598
        %v2719 = vpack.c.b16 %v2607, %v2603
        %v2720 = vpack.c.b16 %v2608, %v2604
        %v2721 = vpack.c.b16 %v2609, %v2605
        %v2722 = vpack.c.b16 %v2610, %v2606
        %v2723 = vpack.c.b16 %v2615, %v2611
        %v2724 = vpack.c.b16 %v2616, %v2612
        %v2725 = vpack.c.b16 %v2617, %v2613
        %v2726 = vpack.c.b16 %v2618, %v2614
        %v2727 = vpack.c.b16 %v2623, %v2619
        %v2728 = vpack.c.b16 %v2624, %v2620
        %v2729 = vpack.c.b16 %v2625, %v2621
        %v2730 = vpack.c.b16 %v2626, %v2622
        %v2731 = vpack.c.b16 %v2631, %v2627
        %v2732 = vpack.c.b16 %v2632, %v2628
        %v2733 = vpack.c.b16 %v2633, %v2629
        %v2734 = vpack.c.b16 %v2634, %v2630
        %v2735 = vpack.c.b16 %v2639, %v2635
        %v2736 = vpack.c.b16 %v2640, %v2636
        %v2737 = vpack.c.b16 %v2641, %v2637
        %v2738 = vpack.c.b16 %v2642, %v2638
        %v2739 = vpack.c.b16 %v2647, %v2643
        %v2740 = vpack.c.b16 %v2648, %v2644
        %v2741 = vpack.c.b16 %v2649, %v2645
        %v2742 = vpack.c.b16 %v2650, %v2646
        %v2743 = vpack.c.b16 %v2655, %v2651
        %v2744 = vpack.c.b16 %v2656, %v2652
        %v2745 = vpack.c.b16 %v2657, %v2653
        %v2746 = vpack.c.b16 %v2658, %v2654
        %v2747 = vpack.c.b16 %v2663, %v2659
        %v2748 = vpack.c.b16 %v2664, %v2660
        %v2749 = vpack.c.b16 %v2665, %v2661
        %v2750 = vpack.c.b16 %v2666, %v2662
        %v2751 = vpack.c.b16 %v2671, %v2667
        %v2752 = vpack.c.b16 %v2672, %v2668
        %v2753 = vpack.c.b16 %v2673, %v2669
        %v2754 = vpack.c.b16 %v2674, %v2670
        %v2755 = vpack.c.b16 %v2679, %v2675
        %v2756 = vpack.c.b16 %v2680, %v2676
        %v2757 = vpack.c.b16 %v2681, %v2677
        %v2758 = vpack.c.b16 %v2682, %v2678
        %v2759 = vpack.c.b16 %v2687, %v2683
        %v2760 = vpack.c.b16 %v2688, %v2684
        %v2761 = vpack.c.b16 %v2689, %v2685
        %v2762 = vpack.c.b16 %v2690, %v2686
        %v2763 = vpack.c.b16 %v2695, %v2691
        %v2764 = vpack.c.b16 %v2696, %v2692
        %v2765 = vpack.c.b16 %v2697, %v2693
        %v2766 = vpack.c.b16 %v2698, %v2694
        %v2767 = vpack.c.b16 %v2703, %v2699
        %v2768 = vpack.c.b16 %v2704, %v2700
        %v2769 = vpack.c.b16 %v2705, %v2701
        %v2770 = vpack.c.b16 %v2706, %v2702
        %v2836 = vlaneseq
        %v2837 = vshrl.u32 %v2836, 7
        %v2838 = vsub.s32 0, %v2837
        %v2839 = vrot.slane %v2514, %v2838
        %v2840 = vlaneseq
        %v2841 = vshrl.u32 %v2840, 7
        %v2842 = vsub.s32 1, %v2841
        %v2843 = vrot.slane %v2514, %v2842
        %v2844 = vlaneseq
        %v2845 = vshrl.u32 %v2844, 7
        %v2846 = vsub.s32 2, %v2845
        %v2847 = vrot.slane %v2514, %v2846
        %v2848 = vlaneseq
        %v2849 = vshrl.u32 %v2848, 7
        %v2850 = vsub.s32 3, %v2849
        %v2851 = vrot.slane %v2514, %v2850
        %2856 = vmatprep.subr.bf16.mxu0 %v2708
        %2857 = vmatpush1.bf16.msra.mxu0 %v2707
        %2858 = vmatprep.subr.bf16.mxu0 %v2712
        %2859 = vmatpush1.bf16.msra.mxu0 %v2711
        %2860 = vmatprep.subr.bf16.mxu0 %v2716
        %2861 = vmatpush1.bf16.msra.mxu0 %v2715
        %2862 = vmatprep.subr.bf16.mxu0 %v2720
        %2863 = vmatpush1.bf16.msra.mxu0 %v2719
        %2864 = vmatprep.subr.bf16.mxu0 %v2724
        %2865 = vmatpush1.bf16.msra.mxu0 %v2723
        %2866 = vmatprep.subr.bf16.mxu0 %v2728
        %2867 = vmatpush1.bf16.msra.mxu0 %v2727
        %2868 = vmatprep.subr.bf16.mxu0 %v2732
        %2869 = vmatpush1.bf16.msra.mxu0 %v2731
        %2870 = vmatprep.subr.bf16.mxu0 %v2736
        %2871 = vmatpush1.bf16.msra.mxu0 %v2735
        %2872 = vmatprep.subr.bf16.mxu0 %v2740
        %2873 = vmatpush1.bf16.msra.mxu0 %v2739
        %2874 = vmatprep.subr.bf16.mxu0 %v2744
        %2875 = vmatpush1.bf16.msra.mxu0 %v2743
        %2876 = vmatprep.subr.bf16.mxu0 %v2748
        %2877 = vmatpush1.bf16.msra.mxu0 %v2747
        %2878 = vmatprep.subr.bf16.mxu0 %v2752
        %2879 = vmatpush1.bf16.msra.mxu0 %v2751
        %2880 = vmatprep.subr.bf16.mxu0 %v2756
        %2881 = vmatpush1.bf16.msra.mxu0 %v2755
        %2882 = vmatprep.subr.bf16.mxu0 %v2760
        %2883 = vmatpush1.bf16.msra.mxu0 %v2759
        %2884 = vmatprep.subr.bf16.mxu0 %v2764
        %2885 = vmatpush1.bf16.msra.mxu0 %v2763
        %2886 = vmatprep.subr.bf16.mxu0 %v2768
        %2887 = vmatpush1.bf16.msra.mxu0 %v2767
        %2888 = vmatprep.mubr.bf16.mxu0 %v2449
        %2889 = vmatmul.mubr.bf16.gmra.mrb[0].mxu0 %v2448
        %v2890 = vpop.f32.mrb[0].mxu0
        %v2891 = vadd.f32 %v2839, %v2890
        %v2892 = vpop.f32.mrb[0].mxu0
        %v2893 = vadd.f32 %v2843, %v2892
        %v2894 = vpop.f32.mrb[0].mxu0
        %v2895 = vpop.f32.mrb[0].mxu0
        %2896 = vdwg.mxu0
        %2897 = vmatprep.subr.bf16.mxu0 %v2710
        %2898 = vmatpush1.bf16.msra.mxu0 %v2709
        %2899 = vmatprep.subr.bf16.mxu0 %v2714
        %2900 = vmatpush1.bf16.msra.mxu0 %v2713
        %2901 = vmatprep.subr.bf16.mxu0 %v2718
        %2902 = vmatpush1.bf16.msra.mxu0 %v2717
        %2903 = vmatprep.subr.bf16.mxu0 %v2722
        %2904 = vmatpush1.bf16.msra.mxu0 %v2721
        %2905 = vmatprep.subr.bf16.mxu0 %v2726
        %2906 = vmatpush1.bf16.msra.mxu0 %v2725
        %2907 = vmatprep.subr.bf16.mxu0 %v2730
        %2908 = vmatpush1.bf16.msra.mxu0 %v2729
        %2909 = vmatprep.subr.bf16.mxu0 %v2734
        %2910 = vmatpush1.bf16.msra.mxu0 %v2733
        %2911 = vmatprep.subr.bf16.mxu0 %v2738
        %2912 = vmatpush1.bf16.msra.mxu0 %v2737
        %2913 = vmatprep.subr.bf16.mxu0 %v2742
        %2914 = vmatpush1.bf16.msra.mxu0 %v2741
        %2915 = vmatprep.subr.bf16.mxu0 %v2746
        %2916 = vmatpush1.bf16.msra.mxu0 %v2745
        %2917 = vmatprep.subr.bf16.mxu0 %v2750
        %2918 = vmatpush1.bf16.msra.mxu0 %v2749
        %2919 = vmatprep.subr.bf16.mxu0 %v2754
        %2920 = vmatpush1.bf16.msra.mxu0 %v2753
        %2921 = vmatprep.subr.bf16.mxu0 %v2758
        %2922 = vmatpush1.bf16.msra.mxu0 %v2757
        %2923 = vmatprep.subr.bf16.mxu0 %v2762
        %2924 = vmatpush1.bf16.msra.mxu0 %v2761
        %2925 = vmatprep.subr.bf16.mxu0 %v2766
        %2926 = vmatpush1.bf16.msra.mxu0 %v2765
        %2927 = vmatprep.subr.bf16.mxu0 %v2770
        %2928 = vmatpush1.bf16.msra.mxu0 %v2769
        %2929 = vmatprep.mubr.bf16.mxu0 %v2449
        %2930 = vmatmul.mubr.bf16.gmra.mrb[0].mxu0 %v2448
        %v2931 = vpop.f32.mrb[0].mxu0
        %v2932 = vadd.f32 %v2847, %v2931
        %v2933 = vpop.f32.mrb[0].mxu0
        %v2934 = vadd.f32 %v2851, %v2933
        %v2935 = vpop.f32.mrb[0].mxu0
        %v2936 = vpop.f32.mrb[0].mxu0
        %2937 = vdwg.mxu0
        %v2938 = vpack.c.bf16 %v1996, %v1992
        %v2939 = vpack.c.bf16 %v1998, %v1994
        %v2940 = vpack.c.bf16 %v2006, %v2002
        %v2941 = vpack.c.bf16 %v2008, %v2004
        %v2942 = vpack.c.bf16 %v2016, %v2012
        %v2943 = vpack.c.bf16 %v2018, %v2014
        %v2944 = vpack.c.bf16 %v2026, %v2022
        %v2945 = vpack.c.bf16 %v2028, %v2024
        %v2946 = vpack.c.bf16 %v2036, %v2032
        %v2947 = vpack.c.bf16 %v2038, %v2034
        %v2948 = vpack.c.bf16 %v2046, %v2042
        %v2949 = vpack.c.bf16 %v2048, %v2044
        %v2950 = vpack.c.bf16 %v2056, %v2052
        %v2951 = vpack.c.bf16 %v2058, %v2054
        %v2952 = vpack.c.bf16 %v2066, %v2062
        %v2953 = vpack.c.bf16 %v2068, %v2064
        %v2954 = vpack.c.bf16 %v2076, %v2072
        %v2955 = vpack.c.bf16 %v2078, %v2074
        %v2956 = vpack.c.bf16 %v2086, %v2082
        %v2957 = vpack.c.bf16 %v2088, %v2084
        %v2958 = vpack.c.bf16 %v2096, %v2092
        %v2959 = vpack.c.bf16 %v2098, %v2094
        %v2960 = vpack.c.bf16 %v2106, %v2102
        %v2961 = vpack.c.bf16 %v2108, %v2104
        %v2962 = vpack.c.bf16 %v2116, %v2112
        %v2963 = vpack.c.bf16 %v2118, %v2114
        %v2964 = vpack.c.bf16 %v2126, %v2122
        %v2965 = vpack.c.bf16 %v2128, %v2124
        %v2966 = vpack.c.bf16 %v2136, %v2132
        %v2967 = vpack.c.bf16 %v2138, %v2134
        %v2968 = vpack.c.bf16 %v2146, %v2142
        %v2969 = vpack.c.bf16 %v2148, %v2144
        %v2970 = vpack.c.bf16 %v2156, %v2152
        %v2971 = vpack.c.bf16 %v2158, %v2154
        %v2972 = vpack.c.bf16 %v2166, %v2162
        %v2973 = vpack.c.bf16 %v2168, %v2164
        %v2974 = vpack.c.bf16 %v2176, %v2172
        %v2975 = vpack.c.bf16 %v2178, %v2174
        %v2976 = vpack.c.bf16 %v2186, %v2182
        %v2977 = vpack.c.bf16 %v2188, %v2184
        %v2978 = vpack.c.bf16 %v2196, %v2192
        %v2979 = vpack.c.bf16 %v2198, %v2194
        %v2980 = vpack.c.bf16 %v2206, %v2202
        %v2981 = vpack.c.bf16 %v2208, %v2204
        %v2982 = vpack.c.bf16 %v2216, %v2212
        %v2983 = vpack.c.bf16 %v2218, %v2214
        %v2984 = vpack.c.bf16 %v2226, %v2222
        %v2985 = vpack.c.bf16 %v2228, %v2224
        %v2986 = vpack.c.bf16 %v2236, %v2232
        %v2987 = vpack.c.bf16 %v2238, %v2234
        %v2988 = vpack.c.bf16 %v2246, %v2242
        %v2989 = vpack.c.bf16 %v2248, %v2244
        %v2990 = vpack.c.bf16 %v2256, %v2252
        %v2991 = vpack.c.bf16 %v2258, %v2254
        %v2992 = vpack.c.bf16 %v2266, %v2262
        %v2993 = vpack.c.bf16 %v2268, %v2264
        %v2994 = vpack.c.bf16 %v2276, %v2272
        %v2995 = vpack.c.bf16 %v2278, %v2274
        %v2996 = vpack.c.bf16 %v2286, %v2282
        %v2997 = vpack.c.bf16 %v2288, %v2284
        %v2998 = vpack.c.bf16 %v2296, %v2292
        %v2999 = vpack.c.bf16 %v2298, %v2294
        %v3000 = vpack.c.bf16 %v2306, %v2302
        %v3001 = vpack.c.bf16 %v2308, %v2304
        %v3002 = vld [vmem:[%s5] sm:$0xff]
        %v3003 = vld [vmem:[%s5 + $0x8] sm:$0xff]
        %v3004 = vld [vmem:[%s5 + $0x10] sm:$0xff]
        %v3005 = vld [vmem:[%s5 + $0x18] sm:$0xff]
        %v3006 = vld [vmem:[%s5 + $0x20] sm:$0xff]
        %v3007 = vld [vmem:[%s5 + $0x28] sm:$0xff]
        %v3008 = vld [vmem:[%s5 + $0x30] sm:$0xff]
        %v3009 = vld [vmem:[%s5 + $0x38] sm:$0xff]
        %v3010 = vld [vmem:[%s5 + $0x40] sm:$0xff]
        %v3011 = vld [vmem:[%s5 + $0x48] sm:$0xff]
        %v3012 = vld [vmem:[%s5 + $0x50] sm:$0xff]
        %v3013 = vld [vmem:[%s5 + $0x58] sm:$0xff]
        %v3014 = vld [vmem:[%s5 + $0x60] sm:$0xff]
        %v3015 = vld [vmem:[%s5 + $0x68] sm:$0xff]
        %v3016 = vld [vmem:[%s5 + $0x70] sm:$0xff]
        %v3017 = vld [vmem:[%s5 + $0x78] sm:$0xff]
        %v3018 = vld [vmem:[%s5 + $0x80] sm:$0xff]
        %v3019 = vld [vmem:[%s5 + $0x88] sm:$0xff]
        %v3020 = vld [vmem:[%s5 + $0x90] sm:$0xff]
        %v3021 = vld [vmem:[%s5 + $0x98] sm:$0xff]
        %v3022 = vld [vmem:[%s5 + $0xa0] sm:$0xff]
        %v3023 = vld [vmem:[%s5 + $0xa8] sm:$0xff]
        %v3024 = vld [vmem:[%s5 + $0xb0] sm:$0xff]
        %v3025 = vld [vmem:[%s5 + $0xb8] sm:$0xff]
        %v3026 = vld [vmem:[%s5 + $0xc0] sm:$0xff]
        %v3027 = vld [vmem:[%s5 + $0xc8] sm:$0xff]
        %v3028 = vld [vmem:[%s5 + $0xd0] sm:$0xff]
        %v3029 = vld [vmem:[%s5 + $0xd8] sm:$0xff]
        %v3030 = vld [vmem:[%s5 + $0xe0] sm:$0xff]
        %v3031 = vld [vmem:[%s5 + $0xe8] sm:$0xff]
        %v3032 = vld [vmem:[%s5 + $0xf0] sm:$0xff]
        %v3033 = vld [vmem:[%s5 + $0xf8] sm:$0xff]
        %v3034 = vld [vmem:[%s5 + $0x100] sm:$0xff]
        %v3035 = vld [vmem:[%s5 + $0x108] sm:$0xff]
        %v3036 = vld [vmem:[%s5 + $0x110] sm:$0xff]
        %v3037 = vld [vmem:[%s5 + $0x118] sm:$0xff]
        %v3038 = vld [vmem:[%s5 + $0x120] sm:$0xff]
        %v3039 = vld [vmem:[%s5 + $0x128] sm:$0xff]
        %v3040 = vld [vmem:[%s5 + $0x130] sm:$0xff]
        %v3041 = vld [vmem:[%s5 + $0x138] sm:$0xff]
        %v3042 = vld [vmem:[%s5 + $0x140] sm:$0xff]
        %v3043 = vld [vmem:[%s5 + $0x148] sm:$0xff]
        %v3044 = vld [vmem:[%s5 + $0x150] sm:$0xff]
        %v3045 = vld [vmem:[%s5 + $0x158] sm:$0xff]
        %v3046 = vld [vmem:[%s5 + $0x160] sm:$0xff]
        %v3047 = vld [vmem:[%s5 + $0x168] sm:$0xff]
        %v3048 = vld [vmem:[%s5 + $0x170] sm:$0xff]
        %v3049 = vld [vmem:[%s5 + $0x178] sm:$0xff]
        %v3050 = vld [vmem:[%s5 + $0x180] sm:$0xff]
        %v3051 = vld [vmem:[%s5 + $0x188] sm:$0xff]
        %v3052 = vld [vmem:[%s5 + $0x190] sm:$0xff]
        %v3053 = vld [vmem:[%s5 + $0x198] sm:$0xff]
        %v3054 = vld [vmem:[%s5 + $0x1a0] sm:$0xff]
        %v3055 = vld [vmem:[%s5 + $0x1a8] sm:$0xff]
        %v3056 = vld [vmem:[%s5 + $0x1b0] sm:$0xff]
        %v3057 = vld [vmem:[%s5 + $0x1b8] sm:$0xff]
        %v3058 = vld [vmem:[%s5 + $0x1c0] sm:$0xff]
        %v3059 = vld [vmem:[%s5 + $0x1c8] sm:$0xff]
        %v3060 = vld [vmem:[%s5 + $0x1d0] sm:$0xff]
        %v3061 = vld [vmem:[%s5 + $0x1d8] sm:$0xff]
        %v3062 = vld [vmem:[%s5 + $0x1e0] sm:$0xff]
        %v3063 = vld [vmem:[%s5 + $0x1e8] sm:$0xff]
        %v3064 = vld [vmem:[%s5 + $0x1f0] sm:$0xff]
        %v3065 = vld [vmem:[%s5 + $0x1f8] sm:$0xff]
        %v3066 = vlaneseq
        %v3067 = vshrl.u32 %v3066, 7
        %v3068 = vsub.s32 0, %v3067
        %v3069 = vrot.slane %v2891, %v3068
        %v3070 = vlaneseq
        %v3071 = vshrl.u32 %v3070, 7
        %v3072 = vsub.s32 0, %v3071
        %v3073 = vrot.slane %v2893, %v3072
        %v3074 = vlaneseq
        %v3075 = vshrl.u32 %v3074, 7
        %v3076 = vsub.s32 0, %v3075
        %v3077 = vrot.slane %v2932, %v3076
        %v3078 = vlaneseq
        %v3079 = vshrl.u32 %v3078, 7
        %v3080 = vsub.s32 0, %v3079
        %v3081 = vrot.slane %v2934, %v3080
        %v3146 = vunpack.c.l.b16 %v3002
        %v3147 = vunpack.c.h.b16 %v3002
        %v3148 = vunpack.c.l.b16 %v3003
        %v3149 = vunpack.c.h.b16 %v3003
        %v3150 = vunpack.c.l.b16 %v3004
        %v3151 = vunpack.c.h.b16 %v3004
        %v3152 = vunpack.c.l.b16 %v3005
        %v3153 = vunpack.c.h.b16 %v3005
        %v3154 = vunpack.c.l.b16 %v3006
        %v3155 = vunpack.c.h.b16 %v3006
        %v3156 = vunpack.c.l.b16 %v3007
        %v3157 = vunpack.c.h.b16 %v3007
        %v3158 = vunpack.c.l.b16 %v3008
        %v3159 = vunpack.c.h.b16 %v3008
        %v3160 = vunpack.c.l.b16 %v3009
        %v3161 = vunpack.c.h.b16 %v3009
        %v3162 = vunpack.c.l.b16 %v3010
        %v3163 = vunpack.c.h.b16 %v3010
        %v3164 = vunpack.c.l.b16 %v3011
        %v3165 = vunpack.c.h.b16 %v3011
        %v3166 = vunpack.c.l.b16 %v3012
        %v3167 = vunpack.c.h.b16 %v3012
        %v3168 = vunpack.c.l.b16 %v3013
        %v3169 = vunpack.c.h.b16 %v3013
        %v3170 = vunpack.c.l.b16 %v3014
        %v3171 = vunpack.c.h.b16 %v3014
        %v3172 = vunpack.c.l.b16 %v3015
        %v3173 = vunpack.c.h.b16 %v3015
        %v3174 = vunpack.c.l.b16 %v3016
        %v3175 = vunpack.c.h.b16 %v3016
        %v3176 = vunpack.c.l.b16 %v3017
        %v3177 = vunpack.c.h.b16 %v3017
        %v3178 = vunpack.c.l.b16 %v3018
        %v3179 = vunpack.c.h.b16 %v3018
        %v3180 = vunpack.c.l.b16 %v3019
        %v3181 = vunpack.c.h.b16 %v3019
        %v3182 = vunpack.c.l.b16 %v3020
        %v3183 = vunpack.c.h.b16 %v3020
        %v3184 = vunpack.c.l.b16 %v3021
        %v3185 = vunpack.c.h.b16 %v3021
        %v3186 = vunpack.c.l.b16 %v3022
        %v3187 = vunpack.c.h.b16 %v3022
        %v3188 = vunpack.c.l.b16 %v3023
        %v3189 = vunpack.c.h.b16 %v3023
        %v3190 = vunpack.c.l.b16 %v3024
        %v3191 = vunpack.c.h.b16 %v3024
        %v3192 = vunpack.c.l.b16 %v3025
        %v3193 = vunpack.c.h.b16 %v3025
        %v3194 = vunpack.c.l.b16 %v3026
        %v3195 = vunpack.c.h.b16 %v3026
        %v3196 = vunpack.c.l.b16 %v3027
        %v3197 = vunpack.c.h.b16 %v3027
        %v3198 = vunpack.c.l.b16 %v3028
        %v3199 = vunpack.c.h.b16 %v3028
        %v3200 = vunpack.c.l.b16 %v3029
        %v3201 = vunpack.c.h.b16 %v3029
        %v3202 = vunpack.c.l.b16 %v3030
        %v3203 = vunpack.c.h.b16 %v3030
        %v3204 = vunpack.c.l.b16 %v3031
        %v3205 = vunpack.c.h.b16 %v3031
        %v3206 = vunpack.c.l.b16 %v3032
        %v3207 = vunpack.c.h.b16 %v3032
        %v3208 = vunpack.c.l.b16 %v3033
        %v3209 = vunpack.c.h.b16 %v3033
        %v3210 = vunpack.c.l.b16 %v3034
        %v3211 = vunpack.c.h.b16 %v3034
        %v3212 = vunpack.c.l.b16 %v3035
        %v3213 = vunpack.c.h.b16 %v3035
        %v3214 = vunpack.c.l.b16 %v3036
        %v3215 = vunpack.c.h.b16 %v3036
        %v3216 = vunpack.c.l.b16 %v3037
        %v3217 = vunpack.c.h.b16 %v3037
        %v3218 = vunpack.c.l.b16 %v3038
        %v3219 = vunpack.c.h.b16 %v3038
        %v3220 = vunpack.c.l.b16 %v3039
        %v3221 = vunpack.c.h.b16 %v3039
        %v3222 = vunpack.c.l.b16 %v3040
        %v3223 = vunpack.c.h.b16 %v3040
        %v3224 = vunpack.c.l.b16 %v3041
        %v3225 = vunpack.c.h.b16 %v3041
        %v3226 = vunpack.c.l.b16 %v3042
        %v3227 = vunpack.c.h.b16 %v3042
        %v3228 = vunpack.c.l.b16 %v3043
        %v3229 = vunpack.c.h.b16 %v3043
        %v3230 = vunpack.c.l.b16 %v3044
        %v3231 = vunpack.c.h.b16 %v3044
        %v3232 = vunpack.c.l.b16 %v3045
        %v3233 = vunpack.c.h.b16 %v3045
        %v3234 = vunpack.c.l.b16 %v3046
        %v3235 = vunpack.c.h.b16 %v3046
        %v3236 = vunpack.c.l.b16 %v3047
        %v3237 = vunpack.c.h.b16 %v3047
        %v3238 = vunpack.c.l.b16 %v3048
        %v3239 = vunpack.c.h.b16 %v3048
        %v3240 = vunpack.c.l.b16 %v3049
        %v3241 = vunpack.c.h.b16 %v3049
        %v3242 = vunpack.c.l.b16 %v3050
        %v3243 = vunpack.c.h.b16 %v3050
        %v3244 = vunpack.c.l.b16 %v3051
        %v3245 = vunpack.c.h.b16 %v3051
        %v3246 = vunpack.c.l.b16 %v3052
        %v3247 = vunpack.c.h.b16 %v3052
        %v3248 = vunpack.c.l.b16 %v3053
        %v3249 = vunpack.c.h.b16 %v3053
        %v3250 = vunpack.c.l.b16 %v3054
        %v3251 = vunpack.c.h.b16 %v3054
        %v3252 = vunpack.c.l.b16 %v3055
        %v3253 = vunpack.c.h.b16 %v3055
        %v3254 = vunpack.c.l.b16 %v3056
        %v3255 = vunpack.c.h.b16 %v3056
        %v3256 = vunpack.c.l.b16 %v3057
        %v3257 = vunpack.c.h.b16 %v3057
        %v3258 = vunpack.c.l.b16 %v3058
        %v3259 = vunpack.c.h.b16 %v3058
        %v3260 = vunpack.c.l.b16 %v3059
        %v3261 = vunpack.c.h.b16 %v3059
        %v3262 = vunpack.c.l.b16 %v3060
        %v3263 = vunpack.c.h.b16 %v3060
        %v3264 = vunpack.c.l.b16 %v3061
        %v3265 = vunpack.c.h.b16 %v3061
        %v3266 = vunpack.c.l.b16 %v3062
        %v3267 = vunpack.c.h.b16 %v3062
        %v3268 = vunpack.c.l.b16 %v3063
        %v3269 = vunpack.c.h.b16 %v3063
        %v3270 = vunpack.c.l.b16 %v3064
        %v3271 = vunpack.c.h.b16 %v3064
        %v3272 = vunpack.c.l.b16 %v3065
        %v3273 = vunpack.c.h.b16 %v3065
        %v3274 = vpack.c.b16 %v3150, %v3146
        %v3275 = vpack.c.b16 %v3151, %v3147
        %v3276 = vpack.c.b16 %v3152, %v3148
        %v3277 = vpack.c.b16 %v3153, %v3149
        %v3278 = vpack.c.b16 %v3158, %v3154
        %v3279 = vpack.c.b16 %v3159, %v3155
        %v3280 = vpack.c.b16 %v3160, %v3156
        %v3281 = vpack.c.b16 %v3161, %v3157
        %v3282 = vpack.c.b16 %v3166, %v3162
        %v3283 = vpack.c.b16 %v3167, %v3163
        %v3284 = vpack.c.b16 %v3168, %v3164
        %v3285 = vpack.c.b16 %v3169, %v3165
        %v3286 = vpack.c.b16 %v3174, %v3170
        %v3287 = vpack.c.b16 %v3175, %v3171
        %v3288 = vpack.c.b16 %v3176, %v3172
        %v3289 = vpack.c.b16 %v3177, %v3173
        %v3290 = vpack.c.b16 %v3182, %v3178
        %v3291 = vpack.c.b16 %v3183, %v3179
        %v3292 = vpack.c.b16 %v3184, %v3180
        %v3293 = vpack.c.b16 %v3185, %v3181
        %v3294 = vpack.c.b16 %v3190, %v3186
        %v3295 = vpack.c.b16 %v3191, %v3187
        %v3296 = vpack.c.b16 %v3192, %v3188
        %v3297 = vpack.c.b16 %v3193, %v3189
        %v3298 = vpack.c.b16 %v3198, %v3194
        %v3299 = vpack.c.b16 %v3199, %v3195
        %v3300 = vpack.c.b16 %v3200, %v3196
        %v3301 = vpack.c.b16 %v3201, %v3197
        %v3302 = vpack.c.b16 %v3206, %v3202
        %v3303 = vpack.c.b16 %v3207, %v3203
        %v3304 = vpack.c.b16 %v3208, %v3204
        %v3305 = vpack.c.b16 %v3209, %v3205
        %v3306 = vpack.c.b16 %v3214, %v3210
        %v3307 = vpack.c.b16 %v3215, %v3211
        %v3308 = vpack.c.b16 %v3216, %v3212
        %v3309 = vpack.c.b16 %v3217, %v3213
        %v3310 = vpack.c.b16 %v3222, %v3218
        %v3311 = vpack.c.b16 %v3223, %v3219
        %v3312 = vpack.c.b16 %v3224, %v3220
        %v3313 = vpack.c.b16 %v3225, %v3221
        %v3314 = vpack.c.b16 %v3230, %v3226
        %v3315 = vpack.c.b16 %v3231, %v3227
        %v3316 = vpack.c.b16 %v3232, %v3228
        %v3317 = vpack.c.b16 %v3233, %v3229
        %v3318 = vpack.c.b16 %v3238, %v3234
        %v3319 = vpack.c.b16 %v3239, %v3235
        %v3320 = vpack.c.b16 %v3240, %v3236
        %v3321 = vpack.c.b16 %v3241, %v3237
        %v3322 = vpack.c.b16 %v3246, %v3242
        %v3323 = vpack.c.b16 %v3247, %v3243
        %v3324 = vpack.c.b16 %v3248, %v3244
        %v3325 = vpack.c.b16 %v3249, %v3245
        %v3326 = vpack.c.b16 %v3254, %v3250
        %v3327 = vpack.c.b16 %v3255, %v3251
        %v3328 = vpack.c.b16 %v3256, %v3252
        %v3329 = vpack.c.b16 %v3257, %v3253
        %v3330 = vpack.c.b16 %v3262, %v3258
        %v3331 = vpack.c.b16 %v3263, %v3259
        %v3332 = vpack.c.b16 %v3264, %v3260
        %v3333 = vpack.c.b16 %v3265, %v3261
        %v3334 = vpack.c.b16 %v3270, %v3266
        %v3335 = vpack.c.b16 %v3271, %v3267
        %v3336 = vpack.c.b16 %v3272, %v3268
        %v3337 = vpack.c.b16 %v3273, %v3269
        %3402 = vmatprep.subr.bf16.mxu0 %v3275
        %3403 = vmatpush1.bf16.msra.mxu0 %v3274
        %3404 = vmatprep.subr.bf16.mxu0 %v3279
        %3405 = vmatpush1.bf16.msra.mxu0 %v3278
        %3406 = vmatprep.subr.bf16.mxu0 %v3283
        %3407 = vmatpush1.bf16.msra.mxu0 %v3282
        %3408 = vmatprep.subr.bf16.mxu0 %v3287
        %3409 = vmatpush1.bf16.msra.mxu0 %v3286
        %3410 = vmatprep.subr.bf16.mxu0 %v3291
        %3411 = vmatpush1.bf16.msra.mxu0 %v3290
        %3412 = vmatprep.subr.bf16.mxu0 %v3295
        %3413 = vmatpush1.bf16.msra.mxu0 %v3294
        %3414 = vmatprep.subr.bf16.mxu0 %v3299
        %3415 = vmatpush1.bf16.msra.mxu0 %v3298
        %3416 = vmatprep.subr.bf16.mxu0 %v3303
        %3417 = vmatpush1.bf16.msra.mxu0 %v3302
        %3418 = vmatprep.subr.bf16.mxu0 %v3307
        %3419 = vmatpush1.bf16.msra.mxu0 %v3306
        %3420 = vmatprep.subr.bf16.mxu0 %v3311
        %3421 = vmatpush1.bf16.msra.mxu0 %v3310
        %3422 = vmatprep.subr.bf16.mxu0 %v3315
        %3423 = vmatpush1.bf16.msra.mxu0 %v3314
        %3424 = vmatprep.subr.bf16.mxu0 %v3319
        %3425 = vmatpush1.bf16.msra.mxu0 %v3318
        %3426 = vmatprep.subr.bf16.mxu0 %v3323
        %3427 = vmatpush1.bf16.msra.mxu0 %v3322
        %3428 = vmatprep.subr.bf16.mxu0 %v3327
        %3429 = vmatpush1.bf16.msra.mxu0 %v3326
        %3430 = vmatprep.subr.bf16.mxu0 %v3331
        %3431 = vmatpush1.bf16.msra.mxu0 %v3330
        %3432 = vmatprep.subr.bf16.mxu0 %v3335
        %3433 = vmatpush1.bf16.msra.mxu0 %v3334
        %3434 = vmatprep.mubr.bf16.mxu0 %v2939
        %3435 = vmatmul.mubr.bf16.gmra.mrb[0].mxu0 %v2938
        %v3436 = vpop.f32.mrb[0].mxu0
        %v3437 = vadd.f32 %v3069, %v3436
        %v3438 = vpop.f32.mrb[0].mxu0
        %v3439 = vadd.f32 %v3073, %v3438
        %v3440 = vpop.f32.mrb[0].mxu0
        %v3441 = vadd.f32 %v3069, %v3440
        %v3442 = vpop.f32.mrb[0].mxu0
        %v3443 = vadd.f32 %v3073, %v3442
        %3444 = vmatprep.mubr.bf16.mxu0 %v2941
        %3445 = vmatmul.mubr.bf16.gmra.mrb[0].mxu0 %v2940
        %v3446 = vpop.f32.mrb[0].mxu0
        %v3447 = vadd.f32 %v3069, %v3446
        %v3448 = vpop.f32.mrb[0].mxu0
        %v3449 = vadd.f32 %v3073, %v3448
        %v3450 = vpop.f32.mrb[0].mxu0
        %v3451 = vadd.f32 %v3069, %v3450
        %v3452 = vpop.f32.mrb[0].mxu0
        %v3453 = vadd.f32 %v3073, %v3452
        %3454 = vmatprep.mubr.bf16.mxu0 %v2943
        %3455 = vmatmul.mubr.bf16.gmra.mrb[0].mxu0 %v2942
        %v3456 = vpop.f32.mrb[0].mxu0
        %v3457 = vadd.f32 %v3069, %v3456
        %v3458 = vpop.f32.mrb[0].mxu0
        %v3459 = vadd.f32 %v3073, %v3458
        %v3460 = vpop.f32.mrb[0].mxu0
        %v3461 = vadd.f32 %v3069, %v3460
        %v3462 = vpop.f32.mrb[0].mxu0
        %v3463 = vadd.f32 %v3073, %v3462
        %3464 = vmatprep.mubr.bf16.mxu0 %v2945
        %3465 = vmatmul.mubr.bf16.gmra.mrb[0].mxu0 %v2944
        %v3466 = vpop.f32.mrb[0].mxu0
        %v3467 = vadd.f32 %v3069, %v3466
        %v3468 = vpop.f32.mrb[0].mxu0
        %v3469 = vadd.f32 %v3073, %v3468
        %v3470 = vpop.f32.mrb[0].mxu0
        %v3471 = vadd.f32 %v3069, %v3470
        %v3472 = vpop.f32.mrb[0].mxu0
        %v3473 = vadd.f32 %v3073, %v3472
        %3474 = vmatprep.mubr.bf16.mxu0 %v2947
        %3475 = vmatmul.mubr.bf16.gmra.mrb[0].mxu0 %v2946
        %v3476 = vpop.f32.mrb[0].mxu0
        %v3477 = vadd.f32 %v3069, %v3476
        %v3478 = vpop.f32.mrb[0].mxu0
        %v3479 = vadd.f32 %v3073, %v3478
        %v3480 = vpop.f32.mrb[0].mxu0
        %v3481 = vadd.f32 %v3069, %v3480
        %v3482 = vpop.f32.mrb[0].mxu0
        %v3483 = vadd.f32 %v3073, %v3482
        %3484 = vmatprep.mubr.bf16.mxu0 %v2949
        %3485 = vmatmul.mubr.bf16.gmra.mrb[0].mxu0 %v2948
        %v3486 = vpop.f32.mrb[0].mxu0
        %v3487 = vadd.f32 %v3069, %v3486
        %v3488 = vpop.f32.mrb[0].mxu0
        %v3489 = vadd.f32 %v3073, %v3488
        %v3490 = vpop.f32.mrb[0].mxu0
        %v3491 = vadd.f32 %v3069, %v3490
        %v3492 = vpop.f32.mrb[0].mxu0
        %v3493 = vadd.f32 %v3073, %v3492
        %3494 = vmatprep.mubr.bf16.mxu0 %v2951
        %3495 = vmatmul.mubr.bf16.gmra.mrb[0].mxu0 %v2950
        %v3496 = vpop.f32.mrb[0].mxu0
        %v3497 = vadd.f32 %v3069, %v3496
        %v3498 = vpop.f32.mrb[0].mxu0
        %v3499 = vadd.f32 %v3073, %v3498
        %v3500 = vpop.f32.mrb[0].mxu0
        %v3501 = vadd.f32 %v3069, %v3500
        %v3502 = vpop.f32.mrb[0].mxu0
        %v3503 = vadd.f32 %v3073, %v3502
        %3504 = vmatprep.mubr.bf16.mxu0 %v2953
        %3505 = vmatmul.mubr.bf16.gmra.mrb[0].mxu0 %v2952
        %v3506 = vpop.f32.mrb[0].mxu0
        %v3507 = vadd.f32 %v3069, %v3506
        %v3508 = vpop.f32.mrb[0].mxu0
        %v3509 = vadd.f32 %v3073, %v3508
        %v3510 = vpop.f32.mrb[0].mxu0
        %v3511 = vadd.f32 %v3069, %v3510
        %v3512 = vpop.f32.mrb[0].mxu0
        %v3513 = vadd.f32 %v3073, %v3512
        %3514 = vmatprep.mubr.bf16.mxu0 %v2955
        %3515 = vmatmul.mubr.bf16.gmra.mrb[0].mxu0 %v2954
        %v3516 = vpop.f32.mrb[0].mxu0
        %v3517 = vadd.f32 %v3069, %v3516
        %v3518 = vpop.f32.mrb[0].mxu0
        %v3519 = vadd.f32 %v3073, %v3518
        %v3520 = vpop.f32.mrb[0].mxu0
        %v3521 = vadd.f32 %v3069, %v3520
        %v3522 = vpop.f32.mrb[0].mxu0
        %v3523 = vadd.f32 %v3073, %v3522
        %3524 = vmatprep.mubr.bf16.mxu0 %v2957
        %3525 = vmatmul.mubr.bf16.gmra.mrb[0].mxu0 %v2956
        %v3526 = vpop.f32.mrb[0].mxu0
        %v3527 = vadd.f32 %v3069, %v3526
        %v3528 = vpop.f32.mrb[0].mxu0
        %v3529 = vadd.f32 %v3073, %v3528
        %v3530 = vpop.f32.mrb[0].mxu0
        %v3531 = vadd.f32 %v3069, %v3530
        %v3532 = vpop.f32.mrb[0].mxu0
        %v3533 = vadd.f32 %v3073, %v3532
        %3534 = vmatprep.mubr.bf16.mxu0 %v2959
        %3535 = vmatmul.mubr.bf16.gmra.mrb[0].mxu0 %v2958
        %v3536 = vpop.f32.mrb[0].mxu0
        %v3537 = vadd.f32 %v3069, %v3536
        %v3538 = vpop.f32.mrb[0].mxu0
        %v3539 = vadd.f32 %v3073, %v3538
        %v3540 = vpop.f32.mrb[0].mxu0
        %v3541 = vadd.f32 %v3069, %v3540
        %v3542 = vpop.f32.mrb[0].mxu0
        %v3543 = vadd.f32 %v3073, %v3542
        %3544 = vmatprep.mubr.bf16.mxu0 %v2961
        %3545 = vmatmul.mubr.bf16.gmra.mrb[0].mxu0 %v2960
        %v3546 = vpop.f32.mrb[0].mxu0
        %v3547 = vadd.f32 %v3069, %v3546
        %v3548 = vpop.f32.mrb[0].mxu0
        %v3549 = vadd.f32 %v3073, %v3548
        %v3550 = vpop.f32.mrb[0].mxu0
        %v3551 = vadd.f32 %v3069, %v3550
        %v3552 = vpop.f32.mrb[0].mxu0
        %v3553 = vadd.f32 %v3073, %v3552
        %3554 = vmatprep.mubr.bf16.mxu0 %v2963
        %3555 = vmatmul.mubr.bf16.gmra.mrb[0].mxu0 %v2962
        %v3556 = vpop.f32.mrb[0].mxu0
        %v3557 = vadd.f32 %v3069, %v3556
        %v3558 = vpop.f32.mrb[0].mxu0
        %v3559 = vadd.f32 %v3073, %v3558
        %v3560 = vpop.f32.mrb[0].mxu0
        %v3561 = vadd.f32 %v3069, %v3560
        %v3562 = vpop.f32.mrb[0].mxu0
        %v3563 = vadd.f32 %v3073, %v3562
        %3564 = vmatprep.mubr.bf16.mxu0 %v2965
        %3565 = vmatmul.mubr.bf16.gmra.mrb[0].mxu0 %v2964
        %v3566 = vpop.f32.mrb[0].mxu0
        %v3567 = vadd.f32 %v3069, %v3566
        %v3568 = vpop.f32.mrb[0].mxu0
        %v3569 = vadd.f32 %v3073, %v3568
        %v3570 = vpop.f32.mrb[0].mxu0
        %v3571 = vadd.f32 %v3069, %v3570
        %v3572 = vpop.f32.mrb[0].mxu0
        %v3573 = vadd.f32 %v3073, %v3572
        %3574 = vmatprep.mubr.bf16.mxu0 %v2967
        %3575 = vmatmul.mubr.bf16.gmra.mrb[0].mxu0 %v2966
        %v3576 = vpop.f32.mrb[0].mxu0
        %v3577 = vadd.f32 %v3069, %v3576
        %v3578 = vpop.f32.mrb[0].mxu0
        %v3579 = vadd.f32 %v3073, %v3578
        %v3580 = vpop.f32.mrb[0].mxu0
        %v3581 = vadd.f32 %v3069, %v3580
        %v3582 = vpop.f32.mrb[0].mxu0
        %v3583 = vadd.f32 %v3073, %v3582
        %3584 = vmatprep.mubr.bf16.mxu0 %v2969
        %3585 = vmatmul.mubr.bf16.gmra.mrb[0].mxu0 %v2968
        %v3586 = vpop.f32.mrb[0].mxu0
        %v3587 = vadd.f32 %v3069, %v3586
        %v3588 = vpop.f32.mrb[0].mxu0
        %v3589 = vadd.f32 %v3073, %v3588
        %v3590 = vpop.f32.mrb[0].mxu0
        %v3591 = vadd.f32 %v3069, %v3590
        %v3592 = vpop.f32.mrb[0].mxu0
        %v3593 = vadd.f32 %v3073, %v3592
        %3594 = vmatprep.mubr.bf16.mxu0 %v2971
        %3595 = vmatmul.mubr.bf16.gmra.mrb[0].mxu0 %v2970
        %v3596 = vpop.f32.mrb[0].mxu0
        %v3597 = vadd.f32 %v3069, %v3596
        %v3598 = vpop.f32.mrb[0].mxu0
        %v3599 = vadd.f32 %v3073, %v3598
        %v3600 = vpop.f32.mrb[0].mxu0
        %v3601 = vadd.f32 %v3069, %v3600
        %v3602 = vpop.f32.mrb[0].mxu0
        %v3603 = vadd.f32 %v3073, %v3602
        %3604 = vmatprep.mubr.bf16.mxu0 %v2973
        %3605 = vmatmul.mubr.bf16.gmra.mrb[0].mxu0 %v2972
        %v3606 = vpop.f32.mrb[0].mxu0
        %v3607 = vadd.f32 %v3069, %v3606
        %v3608 = vpop.f32.mrb[0].mxu0
        %v3609 = vadd.f32 %v3073, %v3608
        %v3610 = vpop.f32.mrb[0].mxu0
        %v3611 = vadd.f32 %v3069, %v3610
        %v3612 = vpop.f32.mrb[0].mxu0
        %v3613 = vadd.f32 %v3073, %v3612
        %3614 = vmatprep.mubr.bf16.mxu0 %v2975
        %3615 = vmatmul.mubr.bf16.gmra.mrb[0].mxu0 %v2974
        %v3616 = vpop.f32.mrb[0].mxu0
        %v3617 = vadd.f32 %v3069, %v3616
        %v3618 = vpop.f32.mrb[0].mxu0
        %v3619 = vadd.f32 %v3073, %v3618
        %v3620 = vpop.f32.mrb[0].mxu0
        %v3621 = vadd.f32 %v3069, %v3620
        %v3622 = vpop.f32.mrb[0].mxu0
        %v3623 = vadd.f32 %v3073, %v3622
        %3624 = vmatprep.mubr.bf16.mxu0 %v2977
        %3625 = vmatmul.mubr.bf16.gmra.mrb[0].mxu0 %v2976
        %v3626 = vpop.f32.mrb[0].mxu0
        %v3627 = vadd.f32 %v3069, %v3626
        %v3628 = vpop.f32.mrb[0].mxu0
        %v3629 = vadd.f32 %v3073, %v3628
        %v3630 = vpop.f32.mrb[0].mxu0
        %v3631 = vadd.f32 %v3069, %v3630
        %v3632 = vpop.f32.mrb[0].mxu0
        %v3633 = vadd.f32 %v3073, %v3632
        %3634 = vmatprep.mubr.bf16.mxu0 %v2979
        %3635 = vmatmul.mubr.bf16.gmra.mrb[0].mxu0 %v2978
        %v3636 = vpop.f32.mrb[0].mxu0
        %v3637 = vadd.f32 %v3069, %v3636
        %v3638 = vpop.f32.mrb[0].mxu0
        %v3639 = vadd.f32 %v3073, %v3638
        %v3640 = vpop.f32.mrb[0].mxu0
        %v3641 = vadd.f32 %v3069, %v3640
        %v3642 = vpop.f32.mrb[0].mxu0
        %v3643 = vadd.f32 %v3073, %v3642
        %3644 = vmatprep.mubr.bf16.mxu0 %v2981
        %3645 = vmatmul.mubr.bf16.gmra.mrb[0].mxu0 %v2980
        %v3646 = vpop.f32.mrb[0].mxu0
        %v3647 = vadd.f32 %v3069, %v3646
        %v3648 = vpop.f32.mrb[0].mxu0
        %v3649 = vadd.f32 %v3073, %v3648
        %v3650 = vpop.f32.mrb[0].mxu0
        %v3651 = vadd.f32 %v3069, %v3650
        %v3652 = vpop.f32.mrb[0].mxu0
        %v3653 = vadd.f32 %v3073, %v3652
        %3654 = vmatprep.mubr.bf16.mxu0 %v2983
        %3655 = vmatmul.mubr.bf16.gmra.mrb[0].mxu0 %v2982
        %v3656 = vpop.f32.mrb[0].mxu0
        %v3657 = vadd.f32 %v3069, %v3656
        %v3658 = vpop.f32.mrb[0].mxu0
        %v3659 = vadd.f32 %v3073, %v3658
        %v3660 = vpop.f32.mrb[0].mxu0
        %v3661 = vadd.f32 %v3069, %v3660
        %v3662 = vpop.f32.mrb[0].mxu0
        %v3663 = vadd.f32 %v3073, %v3662
        %3664 = vmatprep.mubr.bf16.mxu0 %v2985
        %3665 = vmatmul.mubr.bf16.gmra.mrb[0].mxu0 %v2984
        %v3666 = vpop.f32.mrb[0].mxu0
        %v3667 = vadd.f32 %v3069, %v3666
        %v3668 = vpop.f32.mrb[0].mxu0
        %v3669 = vadd.f32 %v3073, %v3668
        %v3670 = vpop.f32.mrb[0].mxu0
        %v3671 = vadd.f32 %v3069, %v3670
        %v3672 = vpop.f32.mrb[0].mxu0
        %v3673 = vadd.f32 %v3073, %v3672
        %3674 = vmatprep.mubr.bf16.mxu0 %v2987
        %3675 = vmatmul.mubr.bf16.gmra.mrb[0].mxu0 %v2986
        %v3676 = vpop.f32.mrb[0].mxu0
        %v3677 = vadd.f32 %v3069, %v3676
        %v3678 = vpop.f32.mrb[0].mxu0
        %v3679 = vadd.f32 %v3073, %v3678
        %v3680 = vpop.f32.mrb[0].mxu0
        %v3681 = vadd.f32 %v3069, %v3680
        %v3682 = vpop.f32.mrb[0].mxu0
        %v3683 = vadd.f32 %v3073, %v3682
        %3684 = vmatprep.mubr.bf16.mxu0 %v2989
        %3685 = vmatmul.mubr.bf16.gmra.mrb[0].mxu0 %v2988
        %v3686 = vpop.f32.mrb[0].mxu0
        %v3687 = vadd.f32 %v3069, %v3686
        %v3688 = vpop.f32.mrb[0].mxu0
        %v3689 = vadd.f32 %v3073, %v3688
        %v3690 = vpop.f32.mrb[0].mxu0
        %v3691 = vadd.f32 %v3069, %v3690
        %v3692 = vpop.f32.mrb[0].mxu0
        %v3693 = vadd.f32 %v3073, %v3692
        %3694 = vmatprep.mubr.bf16.mxu0 %v2991
        %3695 = vmatmul.mubr.bf16.gmra.mrb[0].mxu0 %v2990
        %v3696 = vpop.f32.mrb[0].mxu0
        %v3697 = vadd.f32 %v3069, %v3696
        %v3698 = vpop.f32.mrb[0].mxu0
        %v3699 = vadd.f32 %v3073, %v3698
        %v3700 = vpop.f32.mrb[0].mxu0
        %v3701 = vadd.f32 %v3069, %v3700
        %v3702 = vpop.f32.mrb[0].mxu0
        %v3703 = vadd.f32 %v3073, %v3702
        %3704 = vmatprep.mubr.bf16.mxu0 %v2993
        %3705 = vmatmul.mubr.bf16.gmra.mrb[0].mxu0 %v2992
        %v3706 = vpop.f32.mrb[0].mxu0
        %v3707 = vadd.f32 %v3069, %v3706
        %v3708 = vpop.f32.mrb[0].mxu0
        %v3709 = vadd.f32 %v3073, %v3708
        %v3710 = vpop.f32.mrb[0].mxu0
        %v3711 = vadd.f32 %v3069, %v3710
        %v3712 = vpop.f32.mrb[0].mxu0
        %v3713 = vadd.f32 %v3073, %v3712
        %3714 = vmatprep.mubr.bf16.mxu0 %v2995
        %3715 = vmatmul.mubr.bf16.gmra.mrb[0].mxu0 %v2994
        %v3716 = vpop.f32.mrb[0].mxu0
        %v3717 = vadd.f32 %v3069, %v3716
        %v3718 = vpop.f32.mrb[0].mxu0
        %v3719 = vadd.f32 %v3073, %v3718
        %v3720 = vpop.f32.mrb[0].mxu0
        %v3721 = vadd.f32 %v3069, %v3720
        %v3722 = vpop.f32.mrb[0].mxu0
        %v3723 = vadd.f32 %v3073, %v3722
        %3724 = vmatprep.mubr.bf16.mxu0 %v2997
        %3725 = vmatmul.mubr.bf16.gmra.mrb[0].mxu0 %v2996
        %v3726 = vpop.f32.mrb[0].mxu0
        %v3727 = vadd.f32 %v3069, %v3726
        %v3728 = vpop.f32.mrb[0].mxu0
        %v3729 = vadd.f32 %v3073, %v3728
        %v3730 = vpop.f32.mrb[0].mxu0
        %v3731 = vadd.f32 %v3069, %v3730
        %v3732 = vpop.f32.mrb[0].mxu0
        %v3733 = vadd.f32 %v3073, %v3732
        %3734 = vmatprep.mubr.bf16.mxu0 %v2999
        %3735 = vmatmul.mubr.bf16.gmra.mrb[0].mxu0 %v2998
        %v3736 = vpop.f32.mrb[0].mxu0
        %v3737 = vadd.f32 %v3069, %v3736
        %v3738 = vpop.f32.mrb[0].mxu0
        %v3739 = vadd.f32 %v3073, %v3738
        %v3740 = vpop.f32.mrb[0].mxu0
        %v3741 = vadd.f32 %v3069, %v3740
        %v3742 = vpop.f32.mrb[0].mxu0
        %v3743 = vadd.f32 %v3073, %v3742
        %3744 = vmatprep.mubr.bf16.mxu0 %v3001
        %3745 = vmatmul.mubr.bf16.gmra.mrb[0].mxu0 %v3000
        %v3746 = vpop.f32.mrb[0].mxu0
        %v3747 = vadd.f32 %v3069, %v3746
        %v3748 = vpop.f32.mrb[0].mxu0
        %v3749 = vadd.f32 %v3073, %v3748
        %v3750 = vpop.f32.mrb[0].mxu0
        %v3751 = vadd.f32 %v3069, %v3750
        %v3752 = vpop.f32.mrb[0].mxu0
        %v3753 = vadd.f32 %v3073, %v3752
        %3754 = vdwg.mxu0
        %3755 = vmatprep.subr.bf16.mxu0 %v3277
        %3756 = vmatpush1.bf16.msra.mxu0 %v3276
        %3757 = vmatprep.subr.bf16.mxu0 %v3281
        %3758 = vmatpush1.bf16.msra.mxu0 %v3280
        %3759 = vmatprep.subr.bf16.mxu0 %v3285
        %3760 = vmatpush1.bf16.msra.mxu0 %v3284
        %3761 = vmatprep.subr.bf16.mxu0 %v3289
        %3762 = vmatpush1.bf16.msra.mxu0 %v3288
        %3763 = vmatprep.subr.bf16.mxu0 %v3293
        %3764 = vmatpush1.bf16.msra.mxu0 %v3292
        %3765 = vmatprep.subr.bf16.mxu0 %v3297
        %3766 = vmatpush1.bf16.msra.mxu0 %v3296
        %3767 = vmatprep.subr.bf16.mxu0 %v3301
        %3768 = vmatpush1.bf16.msra.mxu0 %v3300
        %3769 = vmatprep.subr.bf16.mxu0 %v3305
        %3770 = vmatpush1.bf16.msra.mxu0 %v3304
        %3771 = vmatprep.subr.bf16.mxu0 %v3309
        %3772 = vmatpush1.bf16.msra.mxu0 %v3308
        %3773 = vmatprep.subr.bf16.mxu0 %v3313
        %3774 = vmatpush1.bf16.msra.mxu0 %v3312
        %3775 = vmatprep.subr.bf16.mxu0 %v3317
        %3776 = vmatpush1.bf16.msra.mxu0 %v3316
        %3777 = vmatprep.subr.bf16.mxu0 %v3321
        %3778 = vmatpush1.bf16.msra.mxu0 %v3320
        %3779 = vmatprep.subr.bf16.mxu0 %v3325
        %3780 = vmatpush1.bf16.msra.mxu0 %v3324
        %3781 = vmatprep.subr.bf16.mxu0 %v3329
        %3782 = vmatpush1.bf16.msra.mxu0 %v3328
        %3783 = vmatprep.subr.bf16.mxu0 %v3333
        %3784 = vmatpush1.bf16.msra.mxu0 %v3332
        %3785 = vmatprep.subr.bf16.mxu0 %v3337
        %3786 = vmatpush1.bf16.msra.mxu0 %v3336
        %3787 = vmatprep.mubr.bf16.mxu0 %v2939
        %3788 = vmatmul.mubr.bf16.gmra.mrb[0].mxu0 %v2938
        %v3789 = vpop.f32.mrb[0].mxu0
        %v3790 = vadd.f32 %v3077, %v3789
        %v3791 = vpop.f32.mrb[0].mxu0
        %v3792 = vadd.f32 %v3081, %v3791
        %v3793 = vpop.f32.mrb[0].mxu0
        %v3794 = vadd.f32 %v3077, %v3793
        %v3795 = vpop.f32.mrb[0].mxu0
        %v3796 = vadd.f32 %v3081, %v3795
        %3797 = vmatprep.mubr.bf16.mxu0 %v2941
        %3798 = vmatmul.mubr.bf16.gmra.mrb[0].mxu0 %v2940
        %v3799 = vpop.f32.mrb[0].mxu0
        %v3800 = vadd.f32 %v3077, %v3799
        %v3801 = vpop.f32.mrb[0].mxu0
        %v3802 = vadd.f32 %v3081, %v3801
        %v3803 = vpop.f32.mrb[0].mxu0
        %v3804 = vadd.f32 %v3077, %v3803
        %v3805 = vpop.f32.mrb[0].mxu0
        %v3806 = vadd.f32 %v3081, %v3805
        %3807 = vmatprep.mubr.bf16.mxu0 %v2943
        %3808 = vmatmul.mubr.bf16.gmra.mrb[0].mxu0 %v2942
        %v3809 = vpop.f32.mrb[0].mxu0
        %v3810 = vadd.f32 %v3077, %v3809
        %v3811 = vpop.f32.mrb[0].mxu0
        %v3812 = vadd.f32 %v3081, %v3811
        %v3813 = vpop.f32.mrb[0].mxu0
        %v3814 = vadd.f32 %v3077, %v3813
        %v3815 = vpop.f32.mrb[0].mxu0
        %v3816 = vadd.f32 %v3081, %v3815
        %3817 = vmatprep.mubr.bf16.mxu0 %v2945
        %3818 = vmatmul.mubr.bf16.gmra.mrb[0].mxu0 %v2944
        %v3819 = vpop.f32.mrb[0].mxu0
        %v3820 = vadd.f32 %v3077, %v3819
        %v3821 = vpop.f32.mrb[0].mxu0
        %v3822 = vadd.f32 %v3081, %v3821
        %v3823 = vpop.f32.mrb[0].mxu0
        %v3824 = vadd.f32 %v3077, %v3823
        %v3825 = vpop.f32.mrb[0].mxu0
        %v3826 = vadd.f32 %v3081, %v3825
        %3827 = vmatprep.mubr.bf16.mxu0 %v2947
        %3828 = vmatmul.mubr.bf16.gmra.mrb[0].mxu0 %v2946
        %v3829 = vpop.f32.mrb[0].mxu0
        %v3830 = vadd.f32 %v3077, %v3829
        %v3831 = vpop.f32.mrb[0].mxu0
        %v3832 = vadd.f32 %v3081, %v3831
        %v3833 = vpop.f32.mrb[0].mxu0
        %v3834 = vadd.f32 %v3077, %v3833
        %v3835 = vpop.f32.mrb[0].mxu0
        %v3836 = vadd.f32 %v3081, %v3835
        %3837 = vmatprep.mubr.bf16.mxu0 %v2949
        %3838 = vmatmul.mubr.bf16.gmra.mrb[0].mxu0 %v2948
        %v3839 = vpop.f32.mrb[0].mxu0
        %v3840 = vadd.f32 %v3077, %v3839
        %v3841 = vpop.f32.mrb[0].mxu0
        %v3842 = vadd.f32 %v3081, %v3841
        %v3843 = vpop.f32.mrb[0].mxu0
        %v3844 = vadd.f32 %v3077, %v3843
        %v3845 = vpop.f32.mrb[0].mxu0
        %v3846 = vadd.f32 %v3081, %v3845
        %3847 = vmatprep.mubr.bf16.mxu0 %v2951
        %3848 = vmatmul.mubr.bf16.gmra.mrb[0].mxu0 %v2950
        %v3849 = vpop.f32.mrb[0].mxu0
        %v3850 = vadd.f32 %v3077, %v3849
        %v3851 = vpop.f32.mrb[0].mxu0
        %v3852 = vadd.f32 %v3081, %v3851
        %v3853 = vpop.f32.mrb[0].mxu0
        %v3854 = vadd.f32 %v3077, %v3853
        %v3855 = vpop.f32.mrb[0].mxu0
        %v3856 = vadd.f32 %v3081, %v3855
        %3857 = vmatprep.mubr.bf16.mxu0 %v2953
        %3858 = vmatmul.mubr.bf16.gmra.mrb[0].mxu0 %v2952
        %v3859 = vpop.f32.mrb[0].mxu0
        %v3860 = vadd.f32 %v3077, %v3859
        %v3861 = vpop.f32.mrb[0].mxu0
        %v3862 = vadd.f32 %v3081, %v3861
        %v3863 = vpop.f32.mrb[0].mxu0
        %v3864 = vadd.f32 %v3077, %v3863
        %v3865 = vpop.f32.mrb[0].mxu0
        %v3866 = vadd.f32 %v3081, %v3865
        %3867 = vmatprep.mubr.bf16.mxu0 %v2955
        %3868 = vmatmul.mubr.bf16.gmra.mrb[0].mxu0 %v2954
        %v3869 = vpop.f32.mrb[0].mxu0
        %v3870 = vadd.f32 %v3077, %v3869
        %v3871 = vpop.f32.mrb[0].mxu0
        %v3872 = vadd.f32 %v3081, %v3871
        %v3873 = vpop.f32.mrb[0].mxu0
        %v3874 = vadd.f32 %v3077, %v3873
        %v3875 = vpop.f32.mrb[0].mxu0
        %v3876 = vadd.f32 %v3081, %v3875
        %3877 = vmatprep.mubr.bf16.mxu0 %v2957
        %3878 = vmatmul.mubr.bf16.gmra.mrb[0].mxu0 %v2956
        %v3879 = vpop.f32.mrb[0].mxu0
        %v3880 = vadd.f32 %v3077, %v3879
        %v3881 = vpop.f32.mrb[0].mxu0
        %v3882 = vadd.f32 %v3081, %v3881
        %v3883 = vpop.f32.mrb[0].mxu0
        %v3884 = vadd.f32 %v3077, %v3883
        %v3885 = vpop.f32.mrb[0].mxu0
        %v3886 = vadd.f32 %v3081, %v3885
        %3887 = vmatprep.mubr.bf16.mxu0 %v2959
        %3888 = vmatmul.mubr.bf16.gmra.mrb[0].mxu0 %v2958
        %v3889 = vpop.f32.mrb[0].mxu0
        %v3890 = vadd.f32 %v3077, %v3889
        %v3891 = vpop.f32.mrb[0].mxu0
        %v3892 = vadd.f32 %v3081, %v3891
        %v3893 = vpop.f32.mrb[0].mxu0
        %v3894 = vadd.f32 %v3077, %v3893
        %v3895 = vpop.f32.mrb[0].mxu0
        %v3896 = vadd.f32 %v3081, %v3895
        %3897 = vmatprep.mubr.bf16.mxu0 %v2961
        %3898 = vmatmul.mubr.bf16.gmra.mrb[0].mxu0 %v2960
        %v3899 = vpop.f32.mrb[0].mxu0
        %v3900 = vadd.f32 %v3077, %v3899
        %v3901 = vpop.f32.mrb[0].mxu0
        %v3902 = vadd.f32 %v3081, %v3901
        %v3903 = vpop.f32.mrb[0].mxu0
        %v3904 = vadd.f32 %v3077, %v3903
        %v3905 = vpop.f32.mrb[0].mxu0
        %v3906 = vadd.f32 %v3081, %v3905
        %3907 = vmatprep.mubr.bf16.mxu0 %v2963
        %3908 = vmatmul.mubr.bf16.gmra.mrb[0].mxu0 %v2962
        %v3909 = vpop.f32.mrb[0].mxu0
        %v3910 = vadd.f32 %v3077, %v3909
        %v3911 = vpop.f32.mrb[0].mxu0
        %v3912 = vadd.f32 %v3081, %v3911
        %v3913 = vpop.f32.mrb[0].mxu0
        %v3914 = vadd.f32 %v3077, %v3913
        %v3915 = vpop.f32.mrb[0].mxu0
        %v3916 = vadd.f32 %v3081, %v3915
        %3917 = vmatprep.mubr.bf16.mxu0 %v2965
        %3918 = vmatmul.mubr.bf16.gmra.mrb[0].mxu0 %v2964
        %v3919 = vpop.f32.mrb[0].mxu0
        %v3920 = vadd.f32 %v3077, %v3919
        %v3921 = vpop.f32.mrb[0].mxu0
        %v3922 = vadd.f32 %v3081, %v3921
        %v3923 = vpop.f32.mrb[0].mxu0
        %v3924 = vadd.f32 %v3077, %v3923
        %v3925 = vpop.f32.mrb[0].mxu0
        %v3926 = vadd.f32 %v3081, %v3925
        %3927 = vmatprep.mubr.bf16.mxu0 %v2967
        %3928 = vmatmul.mubr.bf16.gmra.mrb[0].mxu0 %v2966
        %v3929 = vpop.f32.mrb[0].mxu0
        %v3930 = vadd.f32 %v3077, %v3929
        %v3931 = vpop.f32.mrb[0].mxu0
        %v3932 = vadd.f32 %v3081, %v3931
        %v3933 = vpop.f32.mrb[0].mxu0
        %v3934 = vadd.f32 %v3077, %v3933
        %v3935 = vpop.f32.mrb[0].mxu0
        %v3936 = vadd.f32 %v3081, %v3935
        %3937 = vmatprep.mubr.bf16.mxu0 %v2969
        %3938 = vmatmul.mubr.bf16.gmra.mrb[0].mxu0 %v2968
        %v3939 = vpop.f32.mrb[0].mxu0
        %v3940 = vadd.f32 %v3077, %v3939
        %v3941 = vpop.f32.mrb[0].mxu0
        %v3942 = vadd.f32 %v3081, %v3941
        %v3943 = vpop.f32.mrb[0].mxu0
        %v3944 = vadd.f32 %v3077, %v3943
        %v3945 = vpop.f32.mrb[0].mxu0
        %v3946 = vadd.f32 %v3081, %v3945
        %3947 = vmatprep.mubr.bf16.mxu0 %v2971
        %3948 = vmatmul.mubr.bf16.gmra.mrb[0].mxu0 %v2970
        %v3949 = vpop.f32.mrb[0].mxu0
        %v3950 = vadd.f32 %v3077, %v3949
        %v3951 = vpop.f32.mrb[0].mxu0
        %v3952 = vadd.f32 %v3081, %v3951
        %v3953 = vpop.f32.mrb[0].mxu0
        %v3954 = vadd.f32 %v3077, %v3953
        %v3955 = vpop.f32.mrb[0].mxu0
        %v3956 = vadd.f32 %v3081, %v3955
        %3957 = vmatprep.mubr.bf16.mxu0 %v2973
        %3958 = vmatmul.mubr.bf16.gmra.mrb[0].mxu0 %v2972
        %v3959 = vpop.f32.mrb[0].mxu0
        %v3960 = vadd.f32 %v3077, %v3959
        %v3961 = vpop.f32.mrb[0].mxu0
        %v3962 = vadd.f32 %v3081, %v3961
        %v3963 = vpop.f32.mrb[0].mxu0
        %v3964 = vadd.f32 %v3077, %v3963
        %v3965 = vpop.f32.mrb[0].mxu0
        %v3966 = vadd.f32 %v3081, %v3965
        %3967 = vmatprep.mubr.bf16.mxu0 %v2975
        %3968 = vmatmul.mubr.bf16.gmra.mrb[0].mxu0 %v2974
        %v3969 = vpop.f32.mrb[0].mxu0
        %v3970 = vadd.f32 %v3077, %v3969
        %v3971 = vpop.f32.mrb[0].mxu0
        %v3972 = vadd.f32 %v3081, %v3971
        %v3973 = vpop.f32.mrb[0].mxu0
        %v3974 = vadd.f32 %v3077, %v3973
        %v3975 = vpop.f32.mrb[0].mxu0
        %v3976 = vadd.f32 %v3081, %v3975
        %3977 = vmatprep.mubr.bf16.mxu0 %v2977
        %3978 = vmatmul.mubr.bf16.gmra.mrb[0].mxu0 %v2976
        %v3979 = vpop.f32.mrb[0].mxu0
        %v3980 = vadd.f32 %v3077, %v3979
        %v3981 = vpop.f32.mrb[0].mxu0
        %v3982 = vadd.f32 %v3081, %v3981
        %v3983 = vpop.f32.mrb[0].mxu0
        %v3984 = vadd.f32 %v3077, %v3983
        %v3985 = vpop.f32.mrb[0].mxu0
        %v3986 = vadd.f32 %v3081, %v3985
        %3987 = vmatprep.mubr.bf16.mxu0 %v2979
        %3988 = vmatmul.mubr.bf16.gmra.mrb[0].mxu0 %v2978
        %v3989 = vpop.f32.mrb[0].mxu0
        %v3990 = vadd.f32 %v3077, %v3989
        %v3991 = vpop.f32.mrb[0].mxu0
        %v3992 = vadd.f32 %v3081, %v3991
        %v3993 = vpop.f32.mrb[0].mxu0
        %v3994 = vadd.f32 %v3077, %v3993
        %v3995 = vpop.f32.mrb[0].mxu0
        %v3996 = vadd.f32 %v3081, %v3995
        %3997 = vmatprep.mubr.bf16.mxu0 %v2981
        %3998 = vmatmul.mubr.bf16.gmra.mrb[0].mxu0 %v2980
        %v3999 = vpop.f32.mrb[0].mxu0
        %v4000 = vadd.f32 %v3077, %v3999
        %v4001 = vpop.f32.mrb[0].mxu0
        %v4002 = vadd.f32 %v3081, %v4001
        %v4003 = vpop.f32.mrb[0].mxu0
        %v4004 = vadd.f32 %v3077, %v4003
        %v4005 = vpop.f32.mrb[0].mxu0
        %v4006 = vadd.f32 %v3081, %v4005
        %4007 = vmatprep.mubr.bf16.mxu0 %v2983
        %4008 = vmatmul.mubr.bf16.gmra.mrb[0].mxu0 %v2982
        %v4009 = vpop.f32.mrb[0].mxu0
        %v4010 = vadd.f32 %v3077, %v4009
        %v4011 = vpop.f32.mrb[0].mxu0
        %v4012 = vadd.f32 %v3081, %v4011
        %v4013 = vpop.f32.mrb[0].mxu0
        %v4014 = vadd.f32 %v3077, %v4013
        %v4015 = vpop.f32.mrb[0].mxu0
        %v4016 = vadd.f32 %v3081, %v4015
        %4017 = vmatprep.mubr.bf16.mxu0 %v2985
        %4018 = vmatmul.mubr.bf16.gmra.mrb[0].mxu0 %v2984
        %v4019 = vpop.f32.mrb[0].mxu0
        %v4020 = vadd.f32 %v3077, %v4019
        %v4021 = vpop.f32.mrb[0].mxu0
        %v4022 = vadd.f32 %v3081, %v4021
        %v4023 = vpop.f32.mrb[0].mxu0
        %v4024 = vadd.f32 %v3077, %v4023
        %v4025 = vpop.f32.mrb[0].mxu0
        %v4026 = vadd.f32 %v3081, %v4025
        %4027 = vmatprep.mubr.bf16.mxu0 %v2987
        %4028 = vmatmul.mubr.bf16.gmra.mrb[0].mxu0 %v2986
        %v4029 = vpop.f32.mrb[0].mxu0
        %v4030 = vadd.f32 %v3077, %v4029
        %v4031 = vpop.f32.mrb[0].mxu0
        %v4032 = vadd.f32 %v3081, %v4031
        %v4033 = vpop.f32.mrb[0].mxu0
        %v4034 = vadd.f32 %v3077, %v4033
        %v4035 = vpop.f32.mrb[0].mxu0
        %v4036 = vadd.f32 %v3081, %v4035
        %4037 = vmatprep.mubr.bf16.mxu0 %v2989
        %4038 = vmatmul.mubr.bf16.gmra.mrb[0].mxu0 %v2988
        %v4039 = vpop.f32.mrb[0].mxu0
        %v4040 = vadd.f32 %v3077, %v4039
        %v4041 = vpop.f32.mrb[0].mxu0
        %v4042 = vadd.f32 %v3081, %v4041
        %v4043 = vpop.f32.mrb[0].mxu0
        %v4044 = vadd.f32 %v3077, %v4043
        %v4045 = vpop.f32.mrb[0].mxu0
        %v4046 = vadd.f32 %v3081, %v4045
        %4047 = vmatprep.mubr.bf16.mxu0 %v2991
        %4048 = vmatmul.mubr.bf16.gmra.mrb[0].mxu0 %v2990
        %v4049 = vpop.f32.mrb[0].mxu0
        %v4050 = vadd.f32 %v3077, %v4049
        %v4051 = vpop.f32.mrb[0].mxu0
        %v4052 = vadd.f32 %v3081, %v4051
        %v4053 = vpop.f32.mrb[0].mxu0
        %v4054 = vadd.f32 %v3077, %v4053
        %v4055 = vpop.f32.mrb[0].mxu0
        %v4056 = vadd.f32 %v3081, %v4055
        %4057 = vmatprep.mubr.bf16.mxu0 %v2993
        %4058 = vmatmul.mubr.bf16.gmra.mrb[0].mxu0 %v2992
        %v4059 = vpop.f32.mrb[0].mxu0
        %v4060 = vadd.f32 %v3077, %v4059
        %v4061 = vpop.f32.mrb[0].mxu0
        %v4062 = vadd.f32 %v3081, %v4061
        %v4063 = vpop.f32.mrb[0].mxu0
        %v4064 = vadd.f32 %v3077, %v4063
        %v4065 = vpop.f32.mrb[0].mxu0
        %v4066 = vadd.f32 %v3081, %v4065
        %4067 = vmatprep.mubr.bf16.mxu0 %v2995
        %4068 = vmatmul.mubr.bf16.gmra.mrb[0].mxu0 %v2994
        %v4069 = vpop.f32.mrb[0].mxu0
        %v4070 = vadd.f32 %v3077, %v4069
        %v4071 = vpop.f32.mrb[0].mxu0
        %v4072 = vadd.f32 %v3081, %v4071
        %v4073 = vpop.f32.mrb[0].mxu0
        %v4074 = vadd.f32 %v3077, %v4073
        %v4075 = vpop.f32.mrb[0].mxu0
        %v4076 = vadd.f32 %v3081, %v4075
        %4077 = vmatprep.mubr.bf16.mxu0 %v2997
        %4078 = vmatmul.mubr.bf16.gmra.mrb[0].mxu0 %v2996
        %v4079 = vpop.f32.mrb[0].mxu0
        %v4080 = vadd.f32 %v3077, %v4079
        %v4081 = vpop.f32.mrb[0].mxu0
        %v4082 = vadd.f32 %v3081, %v4081
        %v4083 = vpop.f32.mrb[0].mxu0
        %v4084 = vadd.f32 %v3077, %v4083
        %v4085 = vpop.f32.mrb[0].mxu0
        %v4086 = vadd.f32 %v3081, %v4085
        %4087 = vmatprep.mubr.bf16.mxu0 %v2999
        %4088 = vmatmul.mubr.bf16.gmra.mrb[0].mxu0 %v2998
        %v4089 = vpop.f32.mrb[0].mxu0
        %v4090 = vadd.f32 %v3077, %v4089
        %v4091 = vpop.f32.mrb[0].mxu0
        %v4092 = vadd.f32 %v3081, %v4091
        %v4093 = vpop.f32.mrb[0].mxu0
        %v4094 = vadd.f32 %v3077, %v4093
        %v4095 = vpop.f32.mrb[0].mxu0
        %v4096 = vadd.f32 %v3081, %v4095
        %4097 = vmatprep.mubr.bf16.mxu0 %v3001
        %4098 = vmatmul.mubr.bf16.gmra.mrb[0].mxu0 %v3000
        %v4099 = vpop.f32.mrb[0].mxu0
        %v4100 = vadd.f32 %v3077, %v4099
        %v4101 = vpop.f32.mrb[0].mxu0
        %v4102 = vadd.f32 %v3081, %v4101
        %v4103 = vpop.f32.mrb[0].mxu0
        %v4104 = vadd.f32 %v3077, %v4103
        %v4105 = vpop.f32.mrb[0].mxu0
        %v4106 = vadd.f32 %v3081, %v4105
        %4107 = vdwg.mxu0
        %v4108 = vmax.f32 %v3437, 0.0
        %v4109 = vmax.f32 %v3439, 0.0
        %v4110 = vmax.f32 %v3790, 0.0
        %v4111 = vmax.f32 %v3792, 0.0
        %v4112 = vmax.f32 %v3441, 0.0
        %v4113 = vmax.f32 %v3443, 0.0
        %v4114 = vmax.f32 %v3794, 0.0
        %v4115 = vmax.f32 %v3796, 0.0
        %v4116 = vmax.f32 %v3447, 0.0
        %v4117 = vmax.f32 %v3449, 0.0
        %v4118 = vmax.f32 %v3800, 0.0
        %v4119 = vmax.f32 %v3802, 0.0
        %v4120 = vmax.f32 %v3451, 0.0
        %v4121 = vmax.f32 %v3453, 0.0
        %v4122 = vmax.f32 %v3804, 0.0
        %v4123 = vmax.f32 %v3806, 0.0
        %v4124 = vmax.f32 %v3457, 0.0
        %v4125 = vmax.f32 %v3459, 0.0
        %v4126 = vmax.f32 %v3810, 0.0
        %v4127 = vmax.f32 %v3812, 0.0
        %v4128 = vmax.f32 %v3461, 0.0
        %v4129 = vmax.f32 %v3463, 0.0
        %v4130 = vmax.f32 %v3814, 0.0
        %v4131 = vmax.f32 %v3816, 0.0
        %v4132 = vmax.f32 %v3467, 0.0
        %v4133 = vmax.f32 %v3469, 0.0
        %v4134 = vmax.f32 %v3820, 0.0
        %v4135 = vmax.f32 %v3822, 0.0
        %v4136 = vmax.f32 %v3471, 0.0
        %v4137 = vmax.f32 %v3473, 0.0
        %v4138 = vmax.f32 %v3824, 0.0
        %v4139 = vmax.f32 %v3826, 0.0
        %v4140 = vmax.f32 %v3477, 0.0
        %v4141 = vmax.f32 %v3479, 0.0
        %v4142 = vmax.f32 %v3830, 0.0
        %v4143 = vmax.f32 %v3832, 0.0
        %v4144 = vmax.f32 %v3481, 0.0
        %v4145 = vmax.f32 %v3483, 0.0
        %v4146 = vmax.f32 %v3834, 0.0
        %v4147 = vmax.f32 %v3836, 0.0
        %v4148 = vmax.f32 %v3487, 0.0
        %v4149 = vmax.f32 %v3489, 0.0
        %v4150 = vmax.f32 %v3840, 0.0
        %v4151 = vmax.f32 %v3842, 0.0
        %v4152 = vmax.f32 %v3491, 0.0
        %v4153 = vmax.f32 %v3493, 0.0
        %v4154 = vmax.f32 %v3844, 0.0
        %v4155 = vmax.f32 %v3846, 0.0
        %v4156 = vmax.f32 %v3497, 0.0
        %v4157 = vmax.f32 %v3499, 0.0
        %v4158 = vmax.f32 %v3850, 0.0
        %v4159 = vmax.f32 %v3852, 0.0
        %v4160 = vmax.f32 %v3501, 0.0
        %v4161 = vmax.f32 %v3503, 0.0
        %v4162 = vmax.f32 %v3854, 0.0
        %v4163 = vmax.f32 %v3856, 0.0
        %v4164 = vmax.f32 %v3507, 0.0
        %v4165 = vmax.f32 %v3509, 0.0
        %v4166 = vmax.f32 %v3860, 0.0
        %v4167 = vmax.f32 %v3862, 0.0
        %v4168 = vmax.f32 %v3511, 0.0
        %v4169 = vmax.f32 %v3513, 0.0
        %v4170 = vmax.f32 %v3864, 0.0
        %v4171 = vmax.f32 %v3866, 0.0
        %v4172 = vmax.f32 %v3517, 0.0
        %v4173 = vmax.f32 %v3519, 0.0
        %v4174 = vmax.f32 %v3870, 0.0
        %v4175 = vmax.f32 %v3872, 0.0
        %v4176 = vmax.f32 %v3521, 0.0
        %v4177 = vmax.f32 %v3523, 0.0
        %v4178 = vmax.f32 %v3874, 0.0
        %v4179 = vmax.f32 %v3876, 0.0
        %v4180 = vmax.f32 %v3527, 0.0
        %v4181 = vmax.f32 %v3529, 0.0
        %v4182 = vmax.f32 %v3880, 0.0
        %v4183 = vmax.f32 %v3882, 0.0
        %v4184 = vmax.f32 %v3531, 0.0
        %v4185 = vmax.f32 %v3533, 0.0
        %v4186 = vmax.f32 %v3884, 0.0
        %v4187 = vmax.f32 %v3886, 0.0
        %v4188 = vmax.f32 %v3537, 0.0
        %v4189 = vmax.f32 %v3539, 0.0
        %v4190 = vmax.f32 %v3890, 0.0
        %v4191 = vmax.f32 %v3892, 0.0
        %v4192 = vmax.f32 %v3541, 0.0
        %v4193 = vmax.f32 %v3543, 0.0
        %v4194 = vmax.f32 %v3894, 0.0
        %v4195 = vmax.f32 %v3896, 0.0
        %v4196 = vmax.f32 %v3547, 0.0
        %v4197 = vmax.f32 %v3549, 0.0
        %v4198 = vmax.f32 %v3900, 0.0
        %v4199 = vmax.f32 %v3902, 0.0
        %v4200 = vmax.f32 %v3551, 0.0
        %v4201 = vmax.f32 %v3553, 0.0
        %v4202 = vmax.f32 %v3904, 0.0
        %v4203 = vmax.f32 %v3906, 0.0
        %v4204 = vmax.f32 %v3557, 0.0
        %v4205 = vmax.f32 %v3559, 0.0
        %v4206 = vmax.f32 %v3910, 0.0
        %v4207 = vmax.f32 %v3912, 0.0
        %v4208 = vmax.f32 %v3561, 0.0
        %v4209 = vmax.f32 %v3563, 0.0
        %v4210 = vmax.f32 %v3914, 0.0
        %v4211 = vmax.f32 %v3916, 0.0
        %v4212 = vmax.f32 %v3567, 0.0
        %v4213 = vmax.f32 %v3569, 0.0
        %v4214 = vmax.f32 %v3920, 0.0
        %v4215 = vmax.f32 %v3922, 0.0
        %v4216 = vmax.f32 %v3571, 0.0
        %v4217 = vmax.f32 %v3573, 0.0
        %v4218 = vmax.f32 %v3924, 0.0
        %v4219 = vmax.f32 %v3926, 0.0
        %v4220 = vmax.f32 %v3577, 0.0
        %v4221 = vmax.f32 %v3579, 0.0
        %v4222 = vmax.f32 %v3930, 0.0
        %v4223 = vmax.f32 %v3932, 0.0
        %v4224 = vmax.f32 %v3581, 0.0
        %v4225 = vmax.f32 %v3583, 0.0
        %v4226 = vmax.f32 %v3934, 0.0
        %v4227 = vmax.f32 %v3936, 0.0
        %v4228 = vmax.f32 %v3587, 0.0
        %v4229 = vmax.f32 %v3589, 0.0
        %v4230 = vmax.f32 %v3940, 0.0
        %v4231 = vmax.f32 %v3942, 0.0
        %v4232 = vmax.f32 %v3591, 0.0
        %v4233 = vmax.f32 %v3593, 0.0
        %v4234 = vmax.f32 %v3944, 0.0
        %v4235 = vmax.f32 %v3946, 0.0
        %v4236 = vmax.f32 %v3597, 0.0
        %v4237 = vmax.f32 %v3599, 0.0
        %v4238 = vmax.f32 %v3950, 0.0
        %v4239 = vmax.f32 %v3952, 0.0
        %v4240 = vmax.f32 %v3601, 0.0
        %v4241 = vmax.f32 %v3603, 0.0
        %v4242 = vmax.f32 %v3954, 0.0
        %v4243 = vmax.f32 %v3956, 0.0
        %v4244 = vmax.f32 %v3607, 0.0
        %v4245 = vmax.f32 %v3609, 0.0
        %v4246 = vmax.f32 %v3960, 0.0
        %v4247 = vmax.f32 %v3962, 0.0
        %v4248 = vmax.f32 %v3611, 0.0
        %v4249 = vmax.f32 %v3613, 0.0
        %v4250 = vmax.f32 %v3964, 0.0
        %v4251 = vmax.f32 %v3966, 0.0
        %v4252 = vmax.f32 %v3617, 0.0
        %v4253 = vmax.f32 %v3619, 0.0
        %v4254 = vmax.f32 %v3970, 0.0
        %v4255 = vmax.f32 %v3972, 0.0
        %v4256 = vmax.f32 %v3621, 0.0
        %v4257 = vmax.f32 %v3623, 0.0
        %v4258 = vmax.f32 %v3974, 0.0
        %v4259 = vmax.f32 %v3976, 0.0
        %v4260 = vmax.f32 %v3627, 0.0
        %v4261 = vmax.f32 %v3629, 0.0
        %v4262 = vmax.f32 %v3980, 0.0
        %v4263 = vmax.f32 %v3982, 0.0
        %v4264 = vmax.f32 %v3631, 0.0
        %v4265 = vmax.f32 %v3633, 0.0
        %v4266 = vmax.f32 %v3984, 0.0
        %v4267 = vmax.f32 %v3986, 0.0
        %v4268 = vmax.f32 %v3637, 0.0
        %v4269 = vmax.f32 %v3639, 0.0
        %v4270 = vmax.f32 %v3990, 0.0
        %v4271 = vmax.f32 %v3992, 0.0
        %v4272 = vmax.f32 %v3641, 0.0
        %v4273 = vmax.f32 %v3643, 0.0
        %v4274 = vmax.f32 %v3994, 0.0
        %v4275 = vmax.f32 %v3996, 0.0
        %v4276 = vmax.f32 %v3647, 0.0
        %v4277 = vmax.f32 %v3649, 0.0
        %v4278 = vmax.f32 %v4000, 0.0
        %v4279 = vmax.f32 %v4002, 0.0
        %v4280 = vmax.f32 %v3651, 0.0
        %v4281 = vmax.f32 %v3653, 0.0
        %v4282 = vmax.f32 %v4004, 0.0
        %v4283 = vmax.f32 %v4006, 0.0
        %v4284 = vmax.f32 %v3657, 0.0
        %v4285 = vmax.f32 %v3659, 0.0
        %v4286 = vmax.f32 %v4010, 0.0
        %v4287 = vmax.f32 %v4012, 0.0
        %v4288 = vmax.f32 %v3661, 0.0
        %v4289 = vmax.f32 %v3663, 0.0
        %v4290 = vmax.f32 %v4014, 0.0
        %v4291 = vmax.f32 %v4016, 0.0
        %v4292 = vmax.f32 %v3667, 0.0
        %v4293 = vmax.f32 %v3669, 0.0
        %v4294 = vmax.f32 %v4020, 0.0
        %v4295 = vmax.f32 %v4022, 0.0
        %v4296 = vmax.f32 %v3671, 0.0
        %v4297 = vmax.f32 %v3673, 0.0
        %v4298 = vmax.f32 %v4024, 0.0
        %v4299 = vmax.f32 %v4026, 0.0
        %v4300 = vmax.f32 %v3677, 0.0
        %v4301 = vmax.f32 %v3679, 0.0
        %v4302 = vmax.f32 %v4030, 0.0
        %v4303 = vmax.f32 %v4032, 0.0
        %v4304 = vmax.f32 %v3681, 0.0
        %v4305 = vmax.f32 %v3683, 0.0
        %v4306 = vmax.f32 %v4034, 0.0
        %v4307 = vmax.f32 %v4036, 0.0
        %v4308 = vmax.f32 %v3687, 0.0
        %v4309 = vmax.f32 %v3689, 0.0
        %v4310 = vmax.f32 %v4040, 0.0
        %v4311 = vmax.f32 %v4042, 0.0
        %v4312 = vmax.f32 %v3691, 0.0
        %v4313 = vmax.f32 %v3693, 0.0
        %v4314 = vmax.f32 %v4044, 0.0
        %v4315 = vmax.f32 %v4046, 0.0
        %v4316 = vmax.f32 %v3697, 0.0
        %v4317 = vmax.f32 %v3699, 0.0
        %v4318 = vmax.f32 %v4050, 0.0
        %v4319 = vmax.f32 %v4052, 0.0
        %v4320 = vmax.f32 %v3701, 0.0
        %v4321 = vmax.f32 %v3703, 0.0
        %v4322 = vmax.f32 %v4054, 0.0
        %v4323 = vmax.f32 %v4056, 0.0
        %v4324 = vmax.f32 %v3707, 0.0
        %v4325 = vmax.f32 %v3709, 0.0
        %v4326 = vmax.f32 %v4060, 0.0
        %v4327 = vmax.f32 %v4062, 0.0
        %v4328 = vmax.f32 %v3711, 0.0
        %v4329 = vmax.f32 %v3713, 0.0
        %v4330 = vmax.f32 %v4064, 0.0
        %v4331 = vmax.f32 %v4066, 0.0
        %v4332 = vmax.f32 %v3717, 0.0
        %v4333 = vmax.f32 %v3719, 0.0
        %v4334 = vmax.f32 %v4070, 0.0
        %v4335 = vmax.f32 %v4072, 0.0
        %v4336 = vmax.f32 %v3721, 0.0
        %v4337 = vmax.f32 %v3723, 0.0
        %v4338 = vmax.f32 %v4074, 0.0
        %v4339 = vmax.f32 %v4076, 0.0
        %v4340 = vmax.f32 %v3727, 0.0
        %v4341 = vmax.f32 %v3729, 0.0
        %v4342 = vmax.f32 %v4080, 0.0
        %v4343 = vmax.f32 %v4082, 0.0
        %v4344 = vmax.f32 %v3731, 0.0
        %v4345 = vmax.f32 %v3733, 0.0
        %v4346 = vmax.f32 %v4084, 0.0
        %v4347 = vmax.f32 %v4086, 0.0
        %v4348 = vmax.f32 %v3737, 0.0
        %v4349 = vmax.f32 %v3739, 0.0
        %v4350 = vmax.f32 %v4090, 0.0
        %v4351 = vmax.f32 %v4092, 0.0
        %v4352 = vmax.f32 %v3741, 0.0
        %v4353 = vmax.f32 %v3743, 0.0
        %v4354 = vmax.f32 %v4094, 0.0
        %v4355 = vmax.f32 %v4096, 0.0
        %v4356 = vmax.f32 %v3747, 0.0
        %v4357 = vmax.f32 %v3749, 0.0
        %v4358 = vmax.f32 %v4100, 0.0
        %v4359 = vmax.f32 %v4102, 0.0
        %v4360 = vmax.f32 %v3751, 0.0
        %v4361 = vmax.f32 %v3753, 0.0
        %v4362 = vmax.f32 %v4104, 0.0
        %v4363 = vmax.f32 %v4106, 0.0
        %v4364 = vpack.c.bf16 %v4112, %v4108
        %v4365 = vpack.c.bf16 %v4113, %v4109
        %v4366 = vpack.c.bf16 %v4114, %v4110
        %v4367 = vpack.c.bf16 %v4115, %v4111
        %v4368 = vpack.c.bf16 %v4120, %v4116
        %v4369 = vpack.c.bf16 %v4121, %v4117
        %v4370 = vpack.c.bf16 %v4122, %v4118
        %v4371 = vpack.c.bf16 %v4123, %v4119
        %v4372 = vpack.c.bf16 %v4128, %v4124
        %v4373 = vpack.c.bf16 %v4129, %v4125
        %v4374 = vpack.c.bf16 %v4130, %v4126
        %v4375 = vpack.c.bf16 %v4131, %v4127
        %v4376 = vpack.c.bf16 %v4136, %v4132
        %v4377 = vpack.c.bf16 %v4137, %v4133
        %v4378 = vpack.c.bf16 %v4138, %v4134
        %v4379 = vpack.c.bf16 %v4139, %v4135
        %v4380 = vpack.c.bf16 %v4144, %v4140
        %v4381 = vpack.c.bf16 %v4145, %v4141
        %v4382 = vpack.c.bf16 %v4146, %v4142
        %v4383 = vpack.c.bf16 %v4147, %v4143
        %v4384 = vpack.c.bf16 %v4152, %v4148
        %v4385 = vpack.c.bf16 %v4153, %v4149
        %v4386 = vpack.c.bf16 %v4154, %v4150
        %v4387 = vpack.c.bf16 %v4155, %v4151
        %v4388 = vpack.c.bf16 %v4160, %v4156
        %v4389 = vpack.c.bf16 %v4161, %v4157
        %v4390 = vpack.c.bf16 %v4162, %v4158
        %v4391 = vpack.c.bf16 %v4163, %v4159
        %v4392 = vpack.c.bf16 %v4168, %v4164
        %v4393 = vpack.c.bf16 %v4169, %v4165
        %v4394 = vpack.c.bf16 %v4170, %v4166
        %v4395 = vpack.c.bf16 %v4171, %v4167
        %v4396 = vpack.c.bf16 %v4176, %v4172
        %v4397 = vpack.c.bf16 %v4177, %v4173
        %v4398 = vpack.c.bf16 %v4178, %v4174
        %v4399 = vpack.c.bf16 %v4179, %v4175
        %v4400 = vpack.c.bf16 %v4184, %v4180
        %v4401 = vpack.c.bf16 %v4185, %v4181
        %v4402 = vpack.c.bf16 %v4186, %v4182
        %v4403 = vpack.c.bf16 %v4187, %v4183
        %v4404 = vpack.c.bf16 %v4192, %v4188
        %v4405 = vpack.c.bf16 %v4193, %v4189
        %v4406 = vpack.c.bf16 %v4194, %v4190
        %v4407 = vpack.c.bf16 %v4195, %v4191
        %v4408 = vpack.c.bf16 %v4200, %v4196
        %v4409 = vpack.c.bf16 %v4201, %v4197
        %v4410 = vpack.c.bf16 %v4202, %v4198
        %v4411 = vpack.c.bf16 %v4203, %v4199
        %v4412 = vpack.c.bf16 %v4208, %v4204
        %v4413 = vpack.c.bf16 %v4209, %v4205
        %v4414 = vpack.c.bf16 %v4210, %v4206
        %v4415 = vpack.c.bf16 %v4211, %v4207
        %v4416 = vpack.c.bf16 %v4216, %v4212
        %v4417 = vpack.c.bf16 %v4217, %v4213
        %v4418 = vpack.c.bf16 %v4218, %v4214
        %v4419 = vpack.c.bf16 %v4219, %v4215
        %v4420 = vpack.c.bf16 %v4224, %v4220
        %v4421 = vpack.c.bf16 %v4225, %v4221
        %v4422 = vpack.c.bf16 %v4226, %v4222
        %v4423 = vpack.c.bf16 %v4227, %v4223
        %v4424 = vpack.c.bf16 %v4232, %v4228
        %v4425 = vpack.c.bf16 %v4233, %v4229
        %v4426 = vpack.c.bf16 %v4234, %v4230
        %v4427 = vpack.c.bf16 %v4235, %v4231
        %v4428 = vpack.c.bf16 %v4240, %v4236
        %v4429 = vpack.c.bf16 %v4241, %v4237
        %v4430 = vpack.c.bf16 %v4242, %v4238
        %v4431 = vpack.c.bf16 %v4243, %v4239
        %v4432 = vpack.c.bf16 %v4248, %v4244
        %v4433 = vpack.c.bf16 %v4249, %v4245
        %v4434 = vpack.c.bf16 %v4250, %v4246
        %v4435 = vpack.c.bf16 %v4251, %v4247
        %v4436 = vpack.c.bf16 %v4256, %v4252
        %v4437 = vpack.c.bf16 %v4257, %v4253
        %v4438 = vpack.c.bf16 %v4258, %v4254
        %v4439 = vpack.c.bf16 %v4259, %v4255
        %v4440 = vpack.c.bf16 %v4264, %v4260
        %v4441 = vpack.c.bf16 %v4265, %v4261
        %v4442 = vpack.c.bf16 %v4266, %v4262
        %v4443 = vpack.c.bf16 %v4267, %v4263
        %v4444 = vpack.c.bf16 %v4272, %v4268
        %v4445 = vpack.c.bf16 %v4273, %v4269
        %v4446 = vpack.c.bf16 %v4274, %v4270
        %v4447 = vpack.c.bf16 %v4275, %v4271
        %v4448 = vpack.c.bf16 %v4280, %v4276
        %v4449 = vpack.c.bf16 %v4281, %v4277
        %v4450 = vpack.c.bf16 %v4282, %v4278
        %v4451 = vpack.c.bf16 %v4283, %v4279
        %v4452 = vpack.c.bf16 %v4288, %v4284
        %v4453 = vpack.c.bf16 %v4289, %v4285
        %v4454 = vpack.c.bf16 %v4290, %v4286
        %v4455 = vpack.c.bf16 %v4291, %v4287
        %v4456 = vpack.c.bf16 %v4296, %v4292
        %v4457 = vpack.c.bf16 %v4297, %v4293
        %v4458 = vpack.c.bf16 %v4298, %v4294
        %v4459 = vpack.c.bf16 %v4299, %v4295
        %v4460 = vpack.c.bf16 %v4304, %v4300
        %v4461 = vpack.c.bf16 %v4305, %v4301
        %v4462 = vpack.c.bf16 %v4306, %v4302
        %v4463 = vpack.c.bf16 %v4307, %v4303
        %v4464 = vpack.c.bf16 %v4312, %v4308
        %v4465 = vpack.c.bf16 %v4313, %v4309
        %v4466 = vpack.c.bf16 %v4314, %v4310
        %v4467 = vpack.c.bf16 %v4315, %v4311
        %v4468 = vpack.c.bf16 %v4320, %v4316
        %v4469 = vpack.c.bf16 %v4321, %v4317
        %v4470 = vpack.c.bf16 %v4322, %v4318
        %v4471 = vpack.c.bf16 %v4323, %v4319
        %v4472 = vpack.c.bf16 %v4328, %v4324
        %v4473 = vpack.c.bf16 %v4329, %v4325
        %v4474 = vpack.c.bf16 %v4330, %v4326
        %v4475 = vpack.c.bf16 %v4331, %v4327
        %v4476 = vpack.c.bf16 %v4336, %v4332
        %v4477 = vpack.c.bf16 %v4337, %v4333
        %v4478 = vpack.c.bf16 %v4338, %v4334
        %v4479 = vpack.c.bf16 %v4339, %v4335
        %v4480 = vpack.c.bf16 %v4344, %v4340
        %v4481 = vpack.c.bf16 %v4345, %v4341
        %v4482 = vpack.c.bf16 %v4346, %v4342
        %v4483 = vpack.c.bf16 %v4347, %v4343
        %v4484 = vpack.c.bf16 %v4352, %v4348
        %v4485 = vpack.c.bf16 %v4353, %v4349
        %v4486 = vpack.c.bf16 %v4354, %v4350
        %v4487 = vpack.c.bf16 %v4355, %v4351
        %v4488 = vpack.c.bf16 %v4360, %v4356
        %v4489 = vpack.c.bf16 %v4361, %v4357
        %v4490 = vpack.c.bf16 %v4362, %v4358
        %v4491 = vpack.c.bf16 %v4363, %v4359
        %v4492 = vld [vmem:[#allocation5] sm:$0xf]
        %v4493 = vld [vmem:[#allocation5 + $0x4] sm:$0xf]
        %v4494 = vld [vmem:[#allocation5 + $0x8] sm:$0xf]
        %v4495 = vld [vmem:[#allocation5 + $0xc] sm:$0xf]
        %v4496 = vld [vmem:[#allocation5 + $0x10] sm:$0xf]
        %v4497 = vld [vmem:[#allocation5 + $0x14] sm:$0xf]
        %v4498 = vld [vmem:[#allocation5 + $0x18] sm:$0xf]
        %v4499 = vld [vmem:[#allocation5 + $0x1c] sm:$0xf]
        %v4500 = vld [vmem:[#allocation5 + $0x20] sm:$0xf]
        %v4501 = vld [vmem:[#allocation5 + $0x24] sm:$0xf]
        %v4502 = vld [vmem:[#allocation5 + $0x28] sm:$0xf]
        %v4503 = vld [vmem:[#allocation5 + $0x2c] sm:$0xf]
        %v4504 = vld [vmem:[#allocation5 + $0x30] sm:$0xf]
        %v4505 = vld [vmem:[#allocation5 + $0x34] sm:$0xf]
        %v4506 = vld [vmem:[#allocation5 + $0x38] sm:$0xf]
        %v4507 = vld [vmem:[#allocation5 + $0x3c] sm:$0xf]
        %v4508 = vld [vmem:[#allocation5 + $0x40] sm:$0xf]
        %v4509 = vld [vmem:[#allocation5 + $0x44] sm:$0xf]
        %v4510 = vld [vmem:[#allocation5 + $0x48] sm:$0xf]
        %v4511 = vld [vmem:[#allocation5 + $0x4c] sm:$0xf]
        %v4512 = vld [vmem:[#allocation5 + $0x50] sm:$0xf]
        %v4513 = vld [vmem:[#allocation5 + $0x54] sm:$0xf]
        %v4514 = vld [vmem:[#allocation5 + $0x58] sm:$0xf]
        %v4515 = vld [vmem:[#allocation5 + $0x5c] sm:$0xf]
        %v4516 = vld [vmem:[#allocation5 + $0x60] sm:$0xf]
        %v4517 = vld [vmem:[#allocation5 + $0x64] sm:$0xf]
        %v4518 = vld [vmem:[#allocation5 + $0x68] sm:$0xf]
        %v4519 = vld [vmem:[#allocation5 + $0x6c] sm:$0xf]
        %v4520 = vld [vmem:[#allocation5 + $0x70] sm:$0xf]
        %v4521 = vld [vmem:[#allocation5 + $0x74] sm:$0xf]
        %v4522 = vld [vmem:[#allocation5 + $0x78] sm:$0xf]
        %v4523 = vld [vmem:[#allocation5 + $0x7c] sm:$0xf]
        %v4524 = vld [vmem:[#allocation5 + $0x80] sm:$0xf]
        %v4525 = vld [vmem:[#allocation5 + $0x84] sm:$0xf]
        %v4526 = vld [vmem:[#allocation5 + $0x88] sm:$0xf]
        %v4527 = vld [vmem:[#allocation5 + $0x8c] sm:$0xf]
        %v4528 = vld [vmem:[#allocation5 + $0x90] sm:$0xf]
        %v4529 = vld [vmem:[#allocation5 + $0x94] sm:$0xf]
        %v4530 = vld [vmem:[#allocation5 + $0x98] sm:$0xf]
        %v4531 = vld [vmem:[#allocation5 + $0x9c] sm:$0xf]
        %v4532 = vld [vmem:[#allocation5 + $0xa0] sm:$0xf]
        %v4533 = vld [vmem:[#allocation5 + $0xa4] sm:$0xf]
        %v4534 = vld [vmem:[#allocation5 + $0xa8] sm:$0xf]
        %v4535 = vld [vmem:[#allocation5 + $0xac] sm:$0xf]
        %v4536 = vld [vmem:[#allocation5 + $0xb0] sm:$0xf]
        %v4537 = vld [vmem:[#allocation5 + $0xb4] sm:$0xf]
        %v4538 = vld [vmem:[#allocation5 + $0xb8] sm:$0xf]
        %v4539 = vld [vmem:[#allocation5 + $0xbc] sm:$0xf]
        %v4540 = vld [vmem:[#allocation5 + $0xc0] sm:$0xf]
        %v4541 = vld [vmem:[#allocation5 + $0xc4] sm:$0xf]
        %v4542 = vld [vmem:[#allocation5 + $0xc8] sm:$0xf]
        %v4543 = vld [vmem:[#allocation5 + $0xcc] sm:$0xf]
        %v4544 = vld [vmem:[#allocation5 + $0xd0] sm:$0xf]
        %v4545 = vld [vmem:[#allocation5 + $0xd4] sm:$0xf]
        %v4546 = vld [vmem:[#allocation5 + $0xd8] sm:$0xf]
        %v4547 = vld [vmem:[#allocation5 + $0xdc] sm:$0xf]
        %v4548 = vld [vmem:[#allocation5 + $0xe0] sm:$0xf]
        %v4549 = vld [vmem:[#allocation5 + $0xe4] sm:$0xf]
        %v4550 = vld [vmem:[#allocation5 + $0xe8] sm:$0xf]
        %v4551 = vld [vmem:[#allocation5 + $0xec] sm:$0xf]
        %v4552 = vld [vmem:[#allocation5 + $0xf0] sm:$0xf]
        %v4553 = vld [vmem:[#allocation5 + $0xf4] sm:$0xf]
        %v4554 = vld [vmem:[#allocation5 + $0xf8] sm:$0xf]
        %v4555 = vld [vmem:[#allocation5 + $0xfc] sm:$0xf]
        %v4556 = vld [vmem:[%s9] sm:$0x1]
        %v4558 = vlaneseq
        %v4559 = vshrl.u32 %v4558, 7
        %v4560 = vsub.s32 0, %v4559
        %v4561 = vrot.slane %v4556, %v4560
        %v4627 = vunpack.c.l.b16 %v4492
        %v4628 = vunpack.c.l.b16 %v4493
        %v4629 = vunpack.c.l.b16 %v4494
        %v4630 = vunpack.c.l.b16 %v4495
        %v4631 = vunpack.c.l.b16 %v4496
        %v4632 = vunpack.c.l.b16 %v4497
        %v4633 = vunpack.c.l.b16 %v4498
        %v4634 = vunpack.c.l.b16 %v4499
        %v4635 = vunpack.c.l.b16 %v4500
        %v4636 = vunpack.c.l.b16 %v4501
        %v4637 = vunpack.c.l.b16 %v4502
        %v4638 = vunpack.c.l.b16 %v4503
        %v4639 = vunpack.c.l.b16 %v4504
        %v4640 = vunpack.c.l.b16 %v4505
        %v4641 = vunpack.c.l.b16 %v4506
        %v4642 = vunpack.c.l.b16 %v4507
        %v4643 = vunpack.c.l.b16 %v4508
        %v4644 = vunpack.c.l.b16 %v4509
        %v4645 = vunpack.c.l.b16 %v4510
        %v4646 = vunpack.c.l.b16 %v4511
        %v4647 = vunpack.c.l.b16 %v4512
        %v4648 = vunpack.c.l.b16 %v4513
        %v4649 = vunpack.c.l.b16 %v4514
        %v4650 = vunpack.c.l.b16 %v4515
        %v4651 = vunpack.c.l.b16 %v4516
        %v4652 = vunpack.c.l.b16 %v4517
        %v4653 = vunpack.c.l.b16 %v4518
        %v4654 = vunpack.c.l.b16 %v4519
        %v4655 = vunpack.c.l.b16 %v4520
        %v4656 = vunpack.c.l.b16 %v4521
        %v4657 = vunpack.c.l.b16 %v4522
        %v4658 = vunpack.c.l.b16 %v4523
        %v4659 = vunpack.c.l.b16 %v4524
        %v4660 = vunpack.c.l.b16 %v4525
        %v4661 = vunpack.c.l.b16 %v4526
        %v4662 = vunpack.c.l.b16 %v4527
        %v4663 = vunpack.c.l.b16 %v4528
        %v4664 = vunpack.c.l.b16 %v4529
        %v4665 = vunpack.c.l.b16 %v4530
        %v4666 = vunpack.c.l.b16 %v4531
        %v4667 = vunpack.c.l.b16 %v4532
        %v4668 = vunpack.c.l.b16 %v4533
        %v4669 = vunpack.c.l.b16 %v4534
        %v4670 = vunpack.c.l.b16 %v4535
        %v4671 = vunpack.c.l.b16 %v4536
        %v4672 = vunpack.c.l.b16 %v4537
        %v4673 = vunpack.c.l.b16 %v4538
        %v4674 = vunpack.c.l.b16 %v4539
        %v4675 = vunpack.c.l.b16 %v4540
        %v4676 = vunpack.c.l.b16 %v4541
        %v4677 = vunpack.c.l.b16 %v4542
        %v4678 = vunpack.c.l.b16 %v4543
        %v4679 = vunpack.c.l.b16 %v4544
        %v4680 = vunpack.c.l.b16 %v4545
        %v4681 = vunpack.c.l.b16 %v4546
        %v4682 = vunpack.c.l.b16 %v4547
        %v4683 = vunpack.c.l.b16 %v4548
        %v4684 = vunpack.c.l.b16 %v4549
        %v4685 = vunpack.c.l.b16 %v4550
        %v4686 = vunpack.c.l.b16 %v4551
        %v4687 = vunpack.c.l.b16 %v4552
        %v4688 = vunpack.c.l.b16 %v4553
        %v4689 = vunpack.c.l.b16 %v4554
        %v4690 = vunpack.c.l.b16 %v4555
        %v4691 = vpack.c.b16 %v4628, %v4627
        %v4692 = vpack.c.b16 %v4630, %v4629
        %v4693 = vpack.c.b16 %v4632, %v4631
        %v4694 = vpack.c.b16 %v4634, %v4633
        %v4695 = vpack.c.b16 %v4636, %v4635
        %v4696 = vpack.c.b16 %v4638, %v4637
        %v4697 = vpack.c.b16 %v4640, %v4639
        %v4698 = vpack.c.b16 %v4642, %v4641
        %v4699 = vpack.c.b16 %v4644, %v4643
        %v4700 = vpack.c.b16 %v4646, %v4645
        %v4701 = vpack.c.b16 %v4648, %v4647
        %v4702 = vpack.c.b16 %v4650, %v4649
        %v4703 = vpack.c.b16 %v4652, %v4651
        %v4704 = vpack.c.b16 %v4654, %v4653
        %v4705 = vpack.c.b16 %v4656, %v4655
        %v4706 = vpack.c.b16 %v4658, %v4657
        %v4707 = vpack.c.b16 %v4660, %v4659
        %v4708 = vpack.c.b16 %v4662, %v4661
        %v4709 = vpack.c.b16 %v4664, %v4663
        %v4710 = vpack.c.b16 %v4666, %v4665
        %v4711 = vpack.c.b16 %v4668, %v4667
        %v4712 = vpack.c.b16 %v4670, %v4669
        %v4713 = vpack.c.b16 %v4672, %v4671
        %v4714 = vpack.c.b16 %v4674, %v4673
        %v4715 = vpack.c.b16 %v4676, %v4675
        %v4716 = vpack.c.b16 %v4678, %v4677
        %v4717 = vpack.c.b16 %v4680, %v4679
        %v4718 = vpack.c.b16 %v4682, %v4681
        %v4719 = vpack.c.b16 %v4684, %v4683
        %v4720 = vpack.c.b16 %v4686, %v4685
        %v4721 = vpack.c.b16 %v4688, %v4687
        %v4722 = vpack.c.b16 %v4690, %v4689
        %4755 = vmatprep.subr.bf16.mxu0 0
        %4756 = vmatpush1.bf16.msra.mxu0 %v4691
        %4757 = vmatprep.subr.bf16.mxu0 0
        %4758 = vmatpush1.bf16.msra.mxu0 %v4692
        %4759 = vmatprep.subr.bf16.mxu0 0
        %4760 = vmatpush1.bf16.msra.mxu0 %v4693
        %4761 = vmatprep.subr.bf16.mxu0 0
        %4762 = vmatpush1.bf16.msra.mxu0 %v4694
        %4763 = vmatprep.subr.bf16.mxu0 0
        %4764 = vmatpush1.bf16.msra.mxu0 %v4695
        %4765 = vmatprep.subr.bf16.mxu0 0
        %4766 = vmatpush1.bf16.msra.mxu0 %v4696
        %4767 = vmatprep.subr.bf16.mxu0 0
        %4768 = vmatpush1.bf16.msra.mxu0 %v4697
        %4769 = vmatprep.subr.bf16.mxu0 0
        %4770 = vmatpush1.bf16.msra.mxu0 %v4698
        %4771 = vmatprep.subr.bf16.mxu0 0
        %4772 = vmatpush1.bf16.msra.mxu0 %v4699
        %4773 = vmatprep.subr.bf16.mxu0 0
        %4774 = vmatpush1.bf16.msra.mxu0 %v4700
        %4775 = vmatprep.subr.bf16.mxu0 0
        %4776 = vmatpush1.bf16.msra.mxu0 %v4701
        %4777 = vmatprep.subr.bf16.mxu0 0
        %4778 = vmatpush1.bf16.msra.mxu0 %v4702
        %4779 = vmatprep.subr.bf16.mxu0 0
        %4780 = vmatpush1.bf16.msra.mxu0 %v4703
        %4781 = vmatprep.subr.bf16.mxu0 0
        %4782 = vmatpush1.bf16.msra.mxu0 %v4704
        %4783 = vmatprep.subr.bf16.mxu0 0
        %4784 = vmatpush1.bf16.msra.mxu0 %v4705
        %4785 = vmatprep.subr.bf16.mxu0 0
        %4786 = vmatpush1.bf16.msra.mxu0 %v4706
        %4787 = vmatprep.mubr.bf16.mxu0 %v4365
        %4788 = vmatmul.mubr.bf16.gmra.mrb[0].mxu0 %v4364
        %v4789 = vpop.f32.mrb[0].mxu0
        %v4790 = vadd.f32 %v4561, %v4789
        %v4791 = vpop.f32.mrb[0].mxu0
        %v4792 = vpop.f32.mrb[0].mxu0
        %v4793 = vadd.f32 %v4561, %v4792
        %v4794 = vpop.f32.mrb[0].mxu0
        %4795 = vmatprep.mubr.bf16.mxu0 %v4369
        %4796 = vmatmul.mubr.bf16.gmra.mrb[0].mxu0 %v4368
        %v4797 = vpop.f32.mrb[0].mxu0
        %v4798 = vadd.f32 %v4561, %v4797
        %v4799 = vpop.f32.mrb[0].mxu0
        %v4800 = vpop.f32.mrb[0].mxu0
        %v4801 = vadd.f32 %v4561, %v4800
        %v4802 = vpop.f32.mrb[0].mxu0
        %4803 = vmatprep.mubr.bf16.mxu0 %v4373
        %4804 = vmatmul.mubr.bf16.gmra.mrb[0].mxu0 %v4372
        %v4805 = vpop.f32.mrb[0].mxu0
        %v4806 = vadd.f32 %v4561, %v4805
        %v4807 = vpop.f32.mrb[0].mxu0
        %v4808 = vpop.f32.mrb[0].mxu0
        %v4809 = vadd.f32 %v4561, %v4808
        %v4810 = vpop.f32.mrb[0].mxu0
        %4811 = vmatprep.mubr.bf16.mxu0 %v4377
        %4812 = vmatmul.mubr.bf16.gmra.mrb[0].mxu0 %v4376
        %v4813 = vpop.f32.mrb[0].mxu0
        %v4814 = vadd.f32 %v4561, %v4813
        %v4815 = vpop.f32.mrb[0].mxu0
        %v4816 = vpop.f32.mrb[0].mxu0
        %v4817 = vadd.f32 %v4561, %v4816
        %v4818 = vpop.f32.mrb[0].mxu0
        %4819 = vmatprep.mubr.bf16.mxu0 %v4381
        %4820 = vmatmul.mubr.bf16.gmra.mrb[0].mxu0 %v4380
        %v4821 = vpop.f32.mrb[0].mxu0
        %v4822 = vadd.f32 %v4561, %v4821
        %v4823 = vpop.f32.mrb[0].mxu0
        %v4824 = vpop.f32.mrb[0].mxu0
        %v4825 = vadd.f32 %v4561, %v4824
        %v4826 = vpop.f32.mrb[0].mxu0
        %4827 = vmatprep.mubr.bf16.mxu0 %v4385
        %4828 = vmatmul.mubr.bf16.gmra.mrb[0].mxu0 %v4384
        %v4829 = vpop.f32.mrb[0].mxu0
        %v4830 = vadd.f32 %v4561, %v4829
        %v4831 = vpop.f32.mrb[0].mxu0
        %v4832 = vpop.f32.mrb[0].mxu0
        %v4833 = vadd.f32 %v4561, %v4832
        %v4834 = vpop.f32.mrb[0].mxu0
        %4835 = vmatprep.mubr.bf16.mxu0 %v4389
        %4836 = vmatmul.mubr.bf16.gmra.mrb[0].mxu0 %v4388
        %v4837 = vpop.f32.mrb[0].mxu0
        %v4838 = vadd.f32 %v4561, %v4837
        %v4839 = vpop.f32.mrb[0].mxu0
        %v4840 = vpop.f32.mrb[0].mxu0
        %v4841 = vadd.f32 %v4561, %v4840
        %v4842 = vpop.f32.mrb[0].mxu0
        %4843 = vmatprep.mubr.bf16.mxu0 %v4393
        %4844 = vmatmul.mubr.bf16.gmra.mrb[0].mxu0 %v4392
        %v4845 = vpop.f32.mrb[0].mxu0
        %v4846 = vadd.f32 %v4561, %v4845
        %v4847 = vpop.f32.mrb[0].mxu0
        %v4848 = vpop.f32.mrb[0].mxu0
        %v4849 = vadd.f32 %v4561, %v4848
        %v4850 = vpop.f32.mrb[0].mxu0
        %4851 = vmatprep.mubr.bf16.mxu0 %v4397
        %4852 = vmatmul.mubr.bf16.gmra.mrb[0].mxu0 %v4396
        %v4853 = vpop.f32.mrb[0].mxu0
        %v4854 = vadd.f32 %v4561, %v4853
        %v4855 = vpop.f32.mrb[0].mxu0
        %v4856 = vpop.f32.mrb[0].mxu0
        %v4857 = vadd.f32 %v4561, %v4856
        %v4858 = vpop.f32.mrb[0].mxu0
        %4859 = vmatprep.mubr.bf16.mxu0 %v4401
        %4860 = vmatmul.mubr.bf16.gmra.mrb[0].mxu0 %v4400
        %v4861 = vpop.f32.mrb[0].mxu0
        %v4862 = vadd.f32 %v4561, %v4861
        %v4863 = vpop.f32.mrb[0].mxu0
        %v4864 = vpop.f32.mrb[0].mxu0
        %v4865 = vadd.f32 %v4561, %v4864
        %v4866 = vpop.f32.mrb[0].mxu0
        %4867 = vmatprep.mubr.bf16.mxu0 %v4405
        %4868 = vmatmul.mubr.bf16.gmra.mrb[0].mxu0 %v4404
        %v4869 = vpop.f32.mrb[0].mxu0
        %v4870 = vadd.f32 %v4561, %v4869
        %v4871 = vpop.f32.mrb[0].mxu0
        %v4872 = vpop.f32.mrb[0].mxu0
        %v4873 = vadd.f32 %v4561, %v4872
        %v4874 = vpop.f32.mrb[0].mxu0
        %4875 = vmatprep.mubr.bf16.mxu0 %v4409
        %4876 = vmatmul.mubr.bf16.gmra.mrb[0].mxu0 %v4408
        %v4877 = vpop.f32.mrb[0].mxu0
        %v4878 = vadd.f32 %v4561, %v4877
        %v4879 = vpop.f32.mrb[0].mxu0
        %v4880 = vpop.f32.mrb[0].mxu0
        %v4881 = vadd.f32 %v4561, %v4880
        %v4882 = vpop.f32.mrb[0].mxu0
        %4883 = vmatprep.mubr.bf16.mxu0 %v4413
        %4884 = vmatmul.mubr.bf16.gmra.mrb[0].mxu0 %v4412
        %v4885 = vpop.f32.mrb[0].mxu0
        %v4886 = vadd.f32 %v4561, %v4885
        %v4887 = vpop.f32.mrb[0].mxu0
        %v4888 = vpop.f32.mrb[0].mxu0
        %v4889 = vadd.f32 %v4561, %v4888
        %v4890 = vpop.f32.mrb[0].mxu0
        %4891 = vmatprep.mubr.bf16.mxu0 %v4417
        %4892 = vmatmul.mubr.bf16.gmra.mrb[0].mxu0 %v4416
        %v4893 = vpop.f32.mrb[0].mxu0
        %v4894 = vadd.f32 %v4561, %v4893
        %v4895 = vpop.f32.mrb[0].mxu0
        %v4896 = vpop.f32.mrb[0].mxu0
        %v4897 = vadd.f32 %v4561, %v4896
        %v4898 = vpop.f32.mrb[0].mxu0
        %4899 = vmatprep.mubr.bf16.mxu0 %v4421
        %4900 = vmatmul.mubr.bf16.gmra.mrb[0].mxu0 %v4420
        %v4901 = vpop.f32.mrb[0].mxu0
        %v4902 = vadd.f32 %v4561, %v4901
        %v4903 = vpop.f32.mrb[0].mxu0
        %v4904 = vpop.f32.mrb[0].mxu0
        %v4905 = vadd.f32 %v4561, %v4904
        %v4906 = vpop.f32.mrb[0].mxu0
        %4907 = vmatprep.mubr.bf16.mxu0 %v4425
        %4908 = vmatmul.mubr.bf16.gmra.mrb[0].mxu0 %v4424
        %v4909 = vpop.f32.mrb[0].mxu0
        %v4910 = vadd.f32 %v4561, %v4909
        %v4911 = vpop.f32.mrb[0].mxu0
        %v4912 = vpop.f32.mrb[0].mxu0
        %v4913 = vadd.f32 %v4561, %v4912
        %v4914 = vpop.f32.mrb[0].mxu0
        %4915 = vmatprep.mubr.bf16.mxu0 %v4429
        %4916 = vmatmul.mubr.bf16.gmra.mrb[0].mxu0 %v4428
        %v4917 = vpop.f32.mrb[0].mxu0
        %v4918 = vadd.f32 %v4561, %v4917
        %v4919 = vpop.f32.mrb[0].mxu0
        %v4920 = vpop.f32.mrb[0].mxu0
        %v4921 = vadd.f32 %v4561, %v4920
        %v4922 = vpop.f32.mrb[0].mxu0
        %4923 = vmatprep.mubr.bf16.mxu0 %v4433
        %4924 = vmatmul.mubr.bf16.gmra.mrb[0].mxu0 %v4432
        %v4925 = vpop.f32.mrb[0].mxu0
        %v4926 = vadd.f32 %v4561, %v4925
        %v4927 = vpop.f32.mrb[0].mxu0
        %v4928 = vpop.f32.mrb[0].mxu0
        %v4929 = vadd.f32 %v4561, %v4928
        %v4930 = vpop.f32.mrb[0].mxu0
        %4931 = vmatprep.mubr.bf16.mxu0 %v4437
        %4932 = vmatmul.mubr.bf16.gmra.mrb[0].mxu0 %v4436
        %v4933 = vpop.f32.mrb[0].mxu0
        %v4934 = vadd.f32 %v4561, %v4933
        %v4935 = vpop.f32.mrb[0].mxu0
        %v4936 = vpop.f32.mrb[0].mxu0
        %v4937 = vadd.f32 %v4561, %v4936
        %v4938 = vpop.f32.mrb[0].mxu0
        %4939 = vmatprep.mubr.bf16.mxu0 %v4441
        %4940 = vmatmul.mubr.bf16.gmra.mrb[0].mxu0 %v4440
        %v4941 = vpop.f32.mrb[0].mxu0
        %v4942 = vadd.f32 %v4561, %v4941
        %v4943 = vpop.f32.mrb[0].mxu0
        %v4944 = vpop.f32.mrb[0].mxu0
        %v4945 = vadd.f32 %v4561, %v4944
        %v4946 = vpop.f32.mrb[0].mxu0
        %4947 = vmatprep.mubr.bf16.mxu0 %v4445
        %4948 = vmatmul.mubr.bf16.gmra.mrb[0].mxu0 %v4444
        %v4949 = vpop.f32.mrb[0].mxu0
        %v4950 = vadd.f32 %v4561, %v4949
        %v4951 = vpop.f32.mrb[0].mxu0
        %v4952 = vpop.f32.mrb[0].mxu0
        %v4953 = vadd.f32 %v4561, %v4952
        %v4954 = vpop.f32.mrb[0].mxu0
        %4955 = vmatprep.mubr.bf16.mxu0 %v4449
        %4956 = vmatmul.mubr.bf16.gmra.mrb[0].mxu0 %v4448
        %v4957 = vpop.f32.mrb[0].mxu0
        %v4958 = vadd.f32 %v4561, %v4957
        %v4959 = vpop.f32.mrb[0].mxu0
        %v4960 = vpop.f32.mrb[0].mxu0
        %v4961 = vadd.f32 %v4561, %v4960
        %v4962 = vpop.f32.mrb[0].mxu0
        %4963 = vmatprep.mubr.bf16.mxu0 %v4453
        %4964 = vmatmul.mubr.bf16.gmra.mrb[0].mxu0 %v4452
        %v4965 = vpop.f32.mrb[0].mxu0
        %v4966 = vadd.f32 %v4561, %v4965
        %v4967 = vpop.f32.mrb[0].mxu0
        %v4968 = vpop.f32.mrb[0].mxu0
        %v4969 = vadd.f32 %v4561, %v4968
        %v4970 = vpop.f32.mrb[0].mxu0
        %4971 = vmatprep.mubr.bf16.mxu0 %v4457
        %4972 = vmatmul.mubr.bf16.gmra.mrb[0].mxu0 %v4456
        %v4973 = vpop.f32.mrb[0].mxu0
        %v4974 = vadd.f32 %v4561, %v4973
        %v4975 = vpop.f32.mrb[0].mxu0
        %v4976 = vpop.f32.mrb[0].mxu0
        %v4977 = vadd.f32 %v4561, %v4976
        %v4978 = vpop.f32.mrb[0].mxu0
        %4979 = vmatprep.mubr.bf16.mxu0 %v4461
        %4980 = vmatmul.mubr.bf16.gmra.mrb[0].mxu0 %v4460
        %v4981 = vpop.f32.mrb[0].mxu0
        %v4982 = vadd.f32 %v4561, %v4981
        %v4983 = vpop.f32.mrb[0].mxu0
        %v4984 = vpop.f32.mrb[0].mxu0
        %v4985 = vadd.f32 %v4561, %v4984
        %v4986 = vpop.f32.mrb[0].mxu0
        %4987 = vmatprep.mubr.bf16.mxu0 %v4465
        %4988 = vmatmul.mubr.bf16.gmra.mrb[0].mxu0 %v4464
        %v4989 = vpop.f32.mrb[0].mxu0
        %v4990 = vadd.f32 %v4561, %v4989
        %v4991 = vpop.f32.mrb[0].mxu0
        %v4992 = vpop.f32.mrb[0].mxu0
        %v4993 = vadd.f32 %v4561, %v4992
        %v4994 = vpop.f32.mrb[0].mxu0
        %4995 = vmatprep.mubr.bf16.mxu0 %v4469
        %4996 = vmatmul.mubr.bf16.gmra.mrb[0].mxu0 %v4468
        %v4997 = vpop.f32.mrb[0].mxu0
        %v4998 = vadd.f32 %v4561, %v4997
        %v4999 = vpop.f32.mrb[0].mxu0
        %v5000 = vpop.f32.mrb[0].mxu0
        %v5001 = vadd.f32 %v4561, %v5000
        %v5002 = vpop.f32.mrb[0].mxu0
        %5003 = vmatprep.mubr.bf16.mxu0 %v4473
        %5004 = vmatmul.mubr.bf16.gmra.mrb[0].mxu0 %v4472
        %v5005 = vpop.f32.mrb[0].mxu0
        %v5006 = vadd.f32 %v4561, %v5005
        %v5007 = vpop.f32.mrb[0].mxu0
        %v5008 = vpop.f32.mrb[0].mxu0
        %v5009 = vadd.f32 %v4561, %v5008
        %v5010 = vpop.f32.mrb[0].mxu0
        %5011 = vmatprep.mubr.bf16.mxu0 %v4477
        %5012 = vmatmul.mubr.bf16.gmra.mrb[0].mxu0 %v4476
        %v5013 = vpop.f32.mrb[0].mxu0
        %v5014 = vadd.f32 %v4561, %v5013
        %v5015 = vpop.f32.mrb[0].mxu0
        %v5016 = vpop.f32.mrb[0].mxu0
        %v5017 = vadd.f32 %v4561, %v5016
        %v5018 = vpop.f32.mrb[0].mxu0
        %5019 = vmatprep.mubr.bf16.mxu0 %v4481
        %5020 = vmatmul.mubr.bf16.gmra.mrb[0].mxu0 %v4480
        %v5021 = vpop.f32.mrb[0].mxu0
        %v5022 = vadd.f32 %v4561, %v5021
        %v5023 = vpop.f32.mrb[0].mxu0
        %v5024 = vpop.f32.mrb[0].mxu0
        %v5025 = vadd.f32 %v4561, %v5024
        %v5026 = vpop.f32.mrb[0].mxu0
        %5027 = vmatprep.mubr.bf16.mxu0 %v4485
        %5028 = vmatmul.mubr.bf16.gmra.mrb[0].mxu0 %v4484
        %v5029 = vpop.f32.mrb[0].mxu0
        %v5030 = vadd.f32 %v4561, %v5029
        %v5031 = vpop.f32.mrb[0].mxu0
        %v5032 = vpop.f32.mrb[0].mxu0
        %v5033 = vadd.f32 %v4561, %v5032
        %v5034 = vpop.f32.mrb[0].mxu0
        %5035 = vmatprep.mubr.bf16.mxu0 %v4489
        %5036 = vmatmul.mubr.bf16.gmra.mrb[0].mxu0 %v4488
        %v5037 = vpop.f32.mrb[0].mxu0
        %v5038 = vadd.f32 %v4561, %v5037
        %v5039 = vpop.f32.mrb[0].mxu0
        %v5040 = vpop.f32.mrb[0].mxu0
        %v5041 = vadd.f32 %v4561, %v5040
        %v5042 = vpop.f32.mrb[0].mxu0
        %5043 = vdwg.mxu0
        %5044 = vmatprep.subr.bf16.mxu0 0
        %5045 = vmatpush1.bf16.msra.mxu0 %v4707
        %5046 = vmatprep.subr.bf16.mxu0 0
        %5047 = vmatpush1.bf16.msra.mxu0 %v4708
        %5048 = vmatprep.subr.bf16.mxu0 0
        %5049 = vmatpush1.bf16.msra.mxu0 %v4709
        %5050 = vmatprep.subr.bf16.mxu0 0
        %5051 = vmatpush1.bf16.msra.mxu0 %v4710
        %5052 = vmatprep.subr.bf16.mxu0 0
        %5053 = vmatpush1.bf16.msra.mxu0 %v4711
        %5054 = vmatprep.subr.bf16.mxu0 0
        %5055 = vmatpush1.bf16.msra.mxu0 %v4712
        %5056 = vmatprep.subr.bf16.mxu0 0
        %5057 = vmatpush1.bf16.msra.mxu0 %v4713
        %5058 = vmatprep.subr.bf16.mxu0 0
        %5059 = vmatpush1.bf16.msra.mxu0 %v4714
        %5060 = vmatprep.subr.bf16.mxu0 0
        %5061 = vmatpush1.bf16.msra.mxu0 %v4715
        %5062 = vmatprep.subr.bf16.mxu0 0
        %5063 = vmatpush1.bf16.msra.mxu0 %v4716
        %5064 = vmatprep.subr.bf16.mxu0 0
        %5065 = vmatpush1.bf16.msra.mxu0 %v4717
        %5066 = vmatprep.subr.bf16.mxu0 0
        %5067 = vmatpush1.bf16.msra.mxu0 %v4718
        %5068 = vmatprep.subr.bf16.mxu0 0
        %5069 = vmatpush1.bf16.msra.mxu0 %v4719
        %5070 = vmatprep.subr.bf16.mxu0 0
        %5071 = vmatpush1.bf16.msra.mxu0 %v4720
        %5072 = vmatprep.subr.bf16.mxu0 0
        %5073 = vmatpush1.bf16.msra.mxu0 %v4721
        %5074 = vmatprep.subr.bf16.mxu0 0
        %5075 = vmatpush1.bf16.msra.mxu0 %v4722
        %5076 = vmatprep.mubr.bf16.mxu0 %v4367
        %5077 = vmatmul.mubr.bf16.gmra.mrb[0].mxu0 %v4366
        %v5078 = vpop.f32.mrb[0].mxu0
        %v5079 = vadd.f32 %v4790, %v5078
        %v5080 = vpop.f32.mrb[0].mxu0
        %v5081 = vpop.f32.mrb[0].mxu0
        %v5082 = vadd.f32 %v4793, %v5081
        %v5083 = vpop.f32.mrb[0].mxu0
        %5084 = vmatprep.mubr.bf16.mxu0 %v4371
        %5085 = vmatmul.mubr.bf16.gmra.mrb[0].mxu0 %v4370
        %v5086 = vpop.f32.mrb[0].mxu0
        %v5087 = vadd.f32 %v4798, %v5086
        %v5088 = vpop.f32.mrb[0].mxu0
        %v5089 = vpop.f32.mrb[0].mxu0
        %v5090 = vadd.f32 %v4801, %v5089
        %v5091 = vpop.f32.mrb[0].mxu0
        %5092 = vmatprep.mubr.bf16.mxu0 %v4375
        %5093 = vmatmul.mubr.bf16.gmra.mrb[0].mxu0 %v4374
        %v5094 = vpop.f32.mrb[0].mxu0
        %v5095 = vadd.f32 %v4806, %v5094
        %v5096 = vpop.f32.mrb[0].mxu0
        %v5097 = vpop.f32.mrb[0].mxu0
        %v5098 = vadd.f32 %v4809, %v5097
        %v5099 = vpop.f32.mrb[0].mxu0
        %5100 = vmatprep.mubr.bf16.mxu0 %v4379
        %5101 = vmatmul.mubr.bf16.gmra.mrb[0].mxu0 %v4378
        %v5102 = vpop.f32.mrb[0].mxu0
        %v5103 = vadd.f32 %v4814, %v5102
        %v5104 = vpop.f32.mrb[0].mxu0
        %v5105 = vpop.f32.mrb[0].mxu0
        %v5106 = vadd.f32 %v4817, %v5105
        %v5107 = vpop.f32.mrb[0].mxu0
        %5108 = vmatprep.mubr.bf16.mxu0 %v4383
        %5109 = vmatmul.mubr.bf16.gmra.mrb[0].mxu0 %v4382
        %v5110 = vpop.f32.mrb[0].mxu0
        %v5111 = vadd.f32 %v4822, %v5110
        %v5112 = vpop.f32.mrb[0].mxu0
        %v5113 = vpop.f32.mrb[0].mxu0
        %v5114 = vadd.f32 %v4825, %v5113
        %v5115 = vpop.f32.mrb[0].mxu0
        %5116 = vmatprep.mubr.bf16.mxu0 %v4387
        %5117 = vmatmul.mubr.bf16.gmra.mrb[0].mxu0 %v4386
        %v5118 = vpop.f32.mrb[0].mxu0
        %v5119 = vadd.f32 %v4830, %v5118
        %v5120 = vpop.f32.mrb[0].mxu0
        %v5121 = vpop.f32.mrb[0].mxu0
        %v5122 = vadd.f32 %v4833, %v5121
        %v5123 = vpop.f32.mrb[0].mxu0
        %5124 = vmatprep.mubr.bf16.mxu0 %v4391
        %5125 = vmatmul.mubr.bf16.gmra.mrb[0].mxu0 %v4390
        %v5126 = vpop.f32.mrb[0].mxu0
        %v5127 = vadd.f32 %v4838, %v5126
        %v5128 = vpop.f32.mrb[0].mxu0
        %v5129 = vpop.f32.mrb[0].mxu0
        %v5130 = vadd.f32 %v4841, %v5129
        %v5131 = vpop.f32.mrb[0].mxu0
        %5132 = vmatprep.mubr.bf16.mxu0 %v4395
        %5133 = vmatmul.mubr.bf16.gmra.mrb[0].mxu0 %v4394
        %v5134 = vpop.f32.mrb[0].mxu0
        %v5135 = vadd.f32 %v4846, %v5134
        %v5136 = vpop.f32.mrb[0].mxu0
        %v5137 = vpop.f32.mrb[0].mxu0
        %v5138 = vadd.f32 %v4849, %v5137
        %v5139 = vpop.f32.mrb[0].mxu0
        %5140 = vmatprep.mubr.bf16.mxu0 %v4399
        %5141 = vmatmul.mubr.bf16.gmra.mrb[0].mxu0 %v4398
        %v5142 = vpop.f32.mrb[0].mxu0
        %v5143 = vadd.f32 %v4854, %v5142
        %v5144 = vpop.f32.mrb[0].mxu0
        %v5145 = vpop.f32.mrb[0].mxu0
        %v5146 = vadd.f32 %v4857, %v5145
        %v5147 = vpop.f32.mrb[0].mxu0
        %5148 = vmatprep.mubr.bf16.mxu0 %v4403
        %5149 = vmatmul.mubr.bf16.gmra.mrb[0].mxu0 %v4402
        %v5150 = vpop.f32.mrb[0].mxu0
        %v5151 = vadd.f32 %v4862, %v5150
        %v5152 = vpop.f32.mrb[0].mxu0
        %v5153 = vpop.f32.mrb[0].mxu0
        %v5154 = vadd.f32 %v4865, %v5153
        %v5155 = vpop.f32.mrb[0].mxu0
        %5156 = vmatprep.mubr.bf16.mxu0 %v4407
        %5157 = vmatmul.mubr.bf16.gmra.mrb[0].mxu0 %v4406
        %v5158 = vpop.f32.mrb[0].mxu0
        %v5159 = vadd.f32 %v4870, %v5158
        %v5160 = vpop.f32.mrb[0].mxu0
        %v5161 = vpop.f32.mrb[0].mxu0
        %v5162 = vadd.f32 %v4873, %v5161
        %v5163 = vpop.f32.mrb[0].mxu0
        %5164 = vmatprep.mubr.bf16.mxu0 %v4411
        %5165 = vmatmul.mubr.bf16.gmra.mrb[0].mxu0 %v4410
        %v5166 = vpop.f32.mrb[0].mxu0
        %v5167 = vadd.f32 %v4878, %v5166
        %v5168 = vpop.f32.mrb[0].mxu0
        %v5169 = vpop.f32.mrb[0].mxu0
        %v5170 = vadd.f32 %v4881, %v5169
        %v5171 = vpop.f32.mrb[0].mxu0
        %5172 = vmatprep.mubr.bf16.mxu0 %v4415
        %5173 = vmatmul.mubr.bf16.gmra.mrb[0].mxu0 %v4414
        %v5174 = vpop.f32.mrb[0].mxu0
        %v5175 = vadd.f32 %v4886, %v5174
        %v5176 = vpop.f32.mrb[0].mxu0
        %v5177 = vpop.f32.mrb[0].mxu0
        %v5178 = vadd.f32 %v4889, %v5177
        %v5179 = vpop.f32.mrb[0].mxu0
        %5180 = vmatprep.mubr.bf16.mxu0 %v4419
        %5181 = vmatmul.mubr.bf16.gmra.mrb[0].mxu0 %v4418
        %v5182 = vpop.f32.mrb[0].mxu0
        %v5183 = vadd.f32 %v4894, %v5182
        %v5184 = vpop.f32.mrb[0].mxu0
        %v5185 = vpop.f32.mrb[0].mxu0
        %v5186 = vadd.f32 %v4897, %v5185
        %v5187 = vpop.f32.mrb[0].mxu0
        %5188 = vmatprep.mubr.bf16.mxu0 %v4423
        %5189 = vmatmul.mubr.bf16.gmra.mrb[0].mxu0 %v4422
        %v5190 = vpop.f32.mrb[0].mxu0
        %v5191 = vadd.f32 %v4902, %v5190
        %v5192 = vpop.f32.mrb[0].mxu0
        %v5193 = vpop.f32.mrb[0].mxu0
        %v5194 = vadd.f32 %v4905, %v5193
        %v5195 = vpop.f32.mrb[0].mxu0
        %5196 = vmatprep.mubr.bf16.mxu0 %v4427
        %5197 = vmatmul.mubr.bf16.gmra.mrb[0].mxu0 %v4426
        %v5198 = vpop.f32.mrb[0].mxu0
        %v5199 = vadd.f32 %v4910, %v5198
        %v5200 = vpop.f32.mrb[0].mxu0
        %v5201 = vpop.f32.mrb[0].mxu0
        %v5202 = vadd.f32 %v4913, %v5201
        %v5203 = vpop.f32.mrb[0].mxu0
        %5204 = vmatprep.mubr.bf16.mxu0 %v4431
        %5205 = vmatmul.mubr.bf16.gmra.mrb[0].mxu0 %v4430
        %v5206 = vpop.f32.mrb[0].mxu0
        %v5207 = vadd.f32 %v4918, %v5206
        %v5208 = vpop.f32.mrb[0].mxu0
        %v5209 = vpop.f32.mrb[0].mxu0
        %v5210 = vadd.f32 %v4921, %v5209
        %v5211 = vpop.f32.mrb[0].mxu0
        %5212 = vmatprep.mubr.bf16.mxu0 %v4435
        %5213 = vmatmul.mubr.bf16.gmra.mrb[0].mxu0 %v4434
        %v5214 = vpop.f32.mrb[0].mxu0
        %v5215 = vadd.f32 %v4926, %v5214
        %v5216 = vpop.f32.mrb[0].mxu0
        %v5217 = vpop.f32.mrb[0].mxu0
        %v5218 = vadd.f32 %v4929, %v5217
        %v5219 = vpop.f32.mrb[0].mxu0
        %5220 = vmatprep.mubr.bf16.mxu0 %v4439
        %5221 = vmatmul.mubr.bf16.gmra.mrb[0].mxu0 %v4438
        %v5222 = vpop.f32.mrb[0].mxu0
        %v5223 = vadd.f32 %v4934, %v5222
        %v5224 = vpop.f32.mrb[0].mxu0
        %v5225 = vpop.f32.mrb[0].mxu0
        %v5226 = vadd.f32 %v4937, %v5225
        %v5227 = vpop.f32.mrb[0].mxu0
        %5228 = vmatprep.mubr.bf16.mxu0 %v4443
        %5229 = vmatmul.mubr.bf16.gmra.mrb[0].mxu0 %v4442
        %v5230 = vpop.f32.mrb[0].mxu0
        %v5231 = vadd.f32 %v4942, %v5230
        %v5232 = vpop.f32.mrb[0].mxu0
        %v5233 = vpop.f32.mrb[0].mxu0
        %v5234 = vadd.f32 %v4945, %v5233
        %v5235 = vpop.f32.mrb[0].mxu0
        %5236 = vmatprep.mubr.bf16.mxu0 %v4447
        %5237 = vmatmul.mubr.bf16.gmra.mrb[0].mxu0 %v4446
        %v5238 = vpop.f32.mrb[0].mxu0
        %v5239 = vadd.f32 %v4950, %v5238
        %v5240 = vpop.f32.mrb[0].mxu0
        %v5241 = vpop.f32.mrb[0].mxu0
        %v5242 = vadd.f32 %v4953, %v5241
        %v5243 = vpop.f32.mrb[0].mxu0
        %5244 = vmatprep.mubr.bf16.mxu0 %v4451
        %5245 = vmatmul.mubr.bf16.gmra.mrb[0].mxu0 %v4450
        %v5246 = vpop.f32.mrb[0].mxu0
        %v5247 = vadd.f32 %v4958, %v5246
        %v5248 = vpop.f32.mrb[0].mxu0
        %v5249 = vpop.f32.mrb[0].mxu0
        %v5250 = vadd.f32 %v4961, %v5249
        %v5251 = vpop.f32.mrb[0].mxu0
        %5252 = vmatprep.mubr.bf16.mxu0 %v4455
        %5253 = vmatmul.mubr.bf16.gmra.mrb[0].mxu0 %v4454
        %v5254 = vpop.f32.mrb[0].mxu0
        %v5255 = vadd.f32 %v4966, %v5254
        %v5256 = vpop.f32.mrb[0].mxu0
        %v5257 = vpop.f32.mrb[0].mxu0
        %v5258 = vadd.f32 %v4969, %v5257
        %v5259 = vpop.f32.mrb[0].mxu0
        %5260 = vmatprep.mubr.bf16.mxu0 %v4459
        %5261 = vmatmul.mubr.bf16.gmra.mrb[0].mxu0 %v4458
        %v5262 = vpop.f32.mrb[0].mxu0
        %v5263 = vadd.f32 %v4974, %v5262
        %v5264 = vpop.f32.mrb[0].mxu0
        %v5265 = vpop.f32.mrb[0].mxu0
        %v5266 = vadd.f32 %v4977, %v5265
        %v5267 = vpop.f32.mrb[0].mxu0
        %5268 = vmatprep.mubr.bf16.mxu0 %v4463
        %5269 = vmatmul.mubr.bf16.gmra.mrb[0].mxu0 %v4462
        %v5270 = vpop.f32.mrb[0].mxu0
        %v5271 = vadd.f32 %v4982, %v5270
        %v5272 = vpop.f32.mrb[0].mxu0
        %v5273 = vpop.f32.mrb[0].mxu0
        %v5274 = vadd.f32 %v4985, %v5273
        %v5275 = vpop.f32.mrb[0].mxu0
        %5276 = vmatprep.mubr.bf16.mxu0 %v4467
        %5277 = vmatmul.mubr.bf16.gmra.mrb[0].mxu0 %v4466
        %v5278 = vpop.f32.mrb[0].mxu0
        %v5279 = vadd.f32 %v4990, %v5278
        %v5280 = vpop.f32.mrb[0].mxu0
        %v5281 = vpop.f32.mrb[0].mxu0
        %v5282 = vadd.f32 %v4993, %v5281
        %v5283 = vpop.f32.mrb[0].mxu0
        %5284 = vmatprep.mubr.bf16.mxu0 %v4471
        %5285 = vmatmul.mubr.bf16.gmra.mrb[0].mxu0 %v4470
        %v5286 = vpop.f32.mrb[0].mxu0
        %v5287 = vadd.f32 %v4998, %v5286
        %v5288 = vpop.f32.mrb[0].mxu0
        %v5289 = vpop.f32.mrb[0].mxu0
        %v5290 = vadd.f32 %v5001, %v5289
        %v5291 = vpop.f32.mrb[0].mxu0
        %5292 = vmatprep.mubr.bf16.mxu0 %v4475
        %5293 = vmatmul.mubr.bf16.gmra.mrb[0].mxu0 %v4474
        %v5294 = vpop.f32.mrb[0].mxu0
        %v5295 = vadd.f32 %v5006, %v5294
        %v5296 = vpop.f32.mrb[0].mxu0
        %v5297 = vpop.f32.mrb[0].mxu0
        %v5298 = vadd.f32 %v5009, %v5297
        %v5299 = vpop.f32.mrb[0].mxu0
        %5300 = vmatprep.mubr.bf16.mxu0 %v4479
        %5301 = vmatmul.mubr.bf16.gmra.mrb[0].mxu0 %v4478
        %v5302 = vpop.f32.mrb[0].mxu0
        %v5303 = vadd.f32 %v5014, %v5302
        %v5304 = vpop.f32.mrb[0].mxu0
        %v5305 = vpop.f32.mrb[0].mxu0
        %v5306 = vadd.f32 %v5017, %v5305
        %v5307 = vpop.f32.mrb[0].mxu0
        %5308 = vmatprep.mubr.bf16.mxu0 %v4483
        %5309 = vmatmul.mubr.bf16.gmra.mrb[0].mxu0 %v4482
        %v5310 = vpop.f32.mrb[0].mxu0
        %v5311 = vadd.f32 %v5022, %v5310
        %v5312 = vpop.f32.mrb[0].mxu0
        %v5313 = vpop.f32.mrb[0].mxu0
        %v5314 = vadd.f32 %v5025, %v5313
        %v5315 = vpop.f32.mrb[0].mxu0
        %5316 = vmatprep.mubr.bf16.mxu0 %v4487
        %5317 = vmatmul.mubr.bf16.gmra.mrb[0].mxu0 %v4486
        %v5318 = vpop.f32.mrb[0].mxu0
        %v5319 = vadd.f32 %v5030, %v5318
        %v5320 = vpop.f32.mrb[0].mxu0
        %v5321 = vpop.f32.mrb[0].mxu0
        %v5322 = vadd.f32 %v5033, %v5321
        %v5323 = vpop.f32.mrb[0].mxu0
        %5324 = vmatprep.mubr.bf16.mxu0 %v4491
        %5325 = vmatmul.mubr.bf16.gmra.mrb[0].mxu0 %v4490
        %v5326 = vpop.f32.mrb[0].mxu0
        %v5327 = vadd.f32 %v5038, %v5326
        %v5328 = vpop.f32.mrb[0].mxu0
        %v5329 = vpop.f32.mrb[0].mxu0
        %v5330 = vadd.f32 %v5041, %v5329
        %v5331 = vpop.f32.mrb[0].mxu0
        %5332 = vdwg.mxu0
        %v5333 = vmax.f32 %v5079, %v5095
        %v5334 = vmax.f32 %v5082, %v5098
        %v5335 = vmax.f32 %v5087, %v5103
        %v5336 = vmax.f32 %v5090, %v5106
        %v5337 = vmax.f32 %v5333, %v5111
        %v5338 = vmax.f32 %v5334, %v5114
        %v5339 = vmax.f32 %v5335, %v5119
        %v5340 = vmax.f32 %v5336, %v5122
        %v5341 = vmax.f32 %v5337, %v5127
        %v5342 = vmax.f32 %v5338, %v5130
        %v5343 = vmax.f32 %v5339, %v5135
        %v5344 = vmax.f32 %v5340, %v5138
        %v5345 = vmax.f32 %v5341, %v5143
        %v5346 = vmax.f32 %v5342, %v5146
        %v5347 = vmax.f32 %v5343, %v5151
        %v5348 = vmax.f32 %v5344, %v5154
        %v5349 = vmax.f32 %v5345, %v5159
        %v5350 = vmax.f32 %v5346, %v5162
        %v5351 = vmax.f32 %v5347, %v5167
        %v5352 = vmax.f32 %v5348, %v5170
        %v5353 = vmax.f32 %v5349, %v5175
        %v5354 = vmax.f32 %v5350, %v5178
        %v5355 = vmax.f32 %v5351, %v5183
        %v5356 = vmax.f32 %v5352, %v5186
        %v5357 = vmax.f32 %v5353, %v5191
        %v5358 = vmax.f32 %v5354, %v5194
        %v5359 = vmax.f32 %v5355, %v5199
        %v5360 = vmax.f32 %v5356, %v5202
        %v5361 = vmax.f32 %v5357, %v5207
        %v5362 = vmax.f32 %v5358, %v5210
        %v5363 = vmax.f32 %v5359, %v5215
        %v5364 = vmax.f32 %v5360, %v5218
        %v5365 = vmax.f32 %v5361, %v5223
        %v5366 = vmax.f32 %v5362, %v5226
        %v5367 = vmax.f32 %v5363, %v5231
        %v5368 = vmax.f32 %v5364, %v5234
        %v5369 = vmax.f32 %v5365, %v5239
        %v5370 = vmax.f32 %v5366, %v5242
        %v5371 = vmax.f32 %v5367, %v5247
        %v5372 = vmax.f32 %v5368, %v5250
        %v5373 = vmax.f32 %v5369, %v5255
        %v5374 = vmax.f32 %v5370, %v5258
        %v5375 = vmax.f32 %v5371, %v5263
        %v5376 = vmax.f32 %v5372, %v5266
        %v5377 = vmax.f32 %v5373, %v5271
        %v5378 = vmax.f32 %v5374, %v5274
        %v5379 = vmax.f32 %v5375, %v5279
        %v5380 = vmax.f32 %v5376, %v5282
        %v5381 = vmax.f32 %v5377, %v5287
        %v5382 = vmax.f32 %v5378, %v5290
        %v5383 = vmax.f32 %v5379, %v5295
        %v5384 = vmax.f32 %v5380, %v5298
        %v5385 = vmax.f32 %v5381, %v5303
        %v5386 = vmax.f32 %v5382, %v5306
        %v5387 = vmax.f32 %v5383, %v5311
        %v5388 = vmax.f32 %v5384, %v5314
        %v5389 = vmax.f32 %v5385, %v5319
        %v5390 = vmax.f32 %v5386, %v5322
        %v5391 = vmax.f32 %v5387, %v5327
        %v5392 = vmax.f32 %v5388, %v5330
        %v5393 = vmax.f32 %v5389, %v5390
        %v5394 = vmax.f32 %v5391, %v5392
        %v5395 = vmax.f32 %v5393, %v5394
        %v5396 = vrot.slane %v5395, 4
        %v5397 = vmax.f32 %v5395, %v5396
        %v5398 = vrot.slane %v5397, 2
        %v5399 = vmax.f32 %v5397, %v5398
        %v5400 = vrot.slane %v5399, 1
        %v5401 = vmax.f32 %v5399, %v5400
        %5402 = vst [vmem:[%s381] sm:$0x1] %v5401
        %s5403 = sand.u32 %s249, 1
        %s5404 = scalar_lea.sflag [#allocation4], %s5403
        %s5405 = sand.u32 %s249, 1
        %s5406 = scalar_lea.vmem [#allocation7], %s5405
        // Predicated region
        $region69: #{tpu_custom_call.1} parent=59 // pred_check
          %p5407 = pneg %p259
        $region70: #{tpu_custom_call.1} parent=59 // pred_check_branch
          %5409 = sbr.rel (%p5407) target = $region72
        $region71: #{tpu_custom_call.1} parent=59 // pred_region
          %s5411 = ssub.s32 16, 16
          %5412 = vsyncadd %s5404, %s5411
          %s5413 = smul.addr %s26, 16
          %s5414 = scalar_lea.hbm %s10, %s5413
          %s5416 = sshll.u32 %s5406, 4
          %s5417 = int_to_ptr.vmem [resolvable:$true] %s5416
          %5419 = dma.vmem_to_hbm [thread:$0]  %s5417, 16, %s5414, %s5404
        $region72: #{tpu_custom_call.1} parent=59 // pred_fallthru
          _
      $region60: #{tpu_custom_call.1} parent=5 // pred_fallthru
        _
      %p5420 = scmp.le.s32.totalorder 2, %s21
      // Predicated region
      $region73: #{tpu_custom_call.1} parent=5 // pred_check
        %p5421 = pneg %p5420
      $region74: #{tpu_custom_call.1} parent=5 // pred_check_branch
        %5423 = sbr.rel (%p5421) target = $region76
      $region75: #{tpu_custom_call.1} parent=5 // pred_region
        %s5424 = ssub.s32 %s21, 2
        // Predicated region
        $region77: #{tpu_custom_call.1} parent=75 // pred_check
          %p5425 = pneg %p265
        $region78: #{tpu_custom_call.1} parent=75 // pred_check_branch
          %5427 = sbr.rel (%p5425) target = $region80
        $region79: #{tpu_custom_call.1} parent=75 // pred_region
          %s5428 = sand.u32 %s250, 1
          %s5429 = scalar_lea.sflag [#allocation4], %s5428
          %s5430 = sand.u32 %s250, 1
          %s5431 = scalar_lea.vmem [#allocation7], %s5430
          %5432 = dma.done %s5429, 16
        $region80: #{tpu_custom_call.1} parent=75 // pred_fallthru
          _
      $region76: #{tpu_custom_call.1} parent=5 // pred_fallthru
        _
    $region6: #{tpu_custom_call.1} parent=1 // loop_footer
      %s25 = sadd.s32 1, %s21
    $region7: #{tpu_custom_call.1} parent=1 // loop_footer_branch
      %20 = sbr.rel target = $region3
    $region8: #{tpu_custom_call.1} parent=1 // loop_exit
      _
    %5433 = vsyncpa [#allocation3], 1
    %s5434 = scalar_lea.sflag [#allocation3], 1
    %5435 = vsyncpa %s5434, 1
    %5436 = vsyncpa [#allocation6], 1
    %5437 = vsyncpa [#allocation4], 1
    %s5438 = scalar_lea.sflag [#allocation4], 1
    %5439 = vsyncpa %s5438, 1

</llo_original>
